<compile_context>
chip_gen: v7x
topology: tpu7x:2x2x1
jax: 0.10.0
libtpu: 0.0.40
codegen_flags: <defaults>
</compile_context>

<pallas_src>
import math
from functools import partial

import jax
import jax.numpy as jnp
from jax.experimental import pallas as pl
from jax.experimental.pallas import tpu as pltpu

EPS = 1e-5  # nn.LayerNorm default eps


def _erf(x):
    # Abramowitz & Stegun 7.1.26 rational approximation (|err| < 1.5e-7), built only
    # from ops guaranteed to lower in Mosaic; matches torch's exact-erf GELU well
    # below the test tolerance.
    a1, a2, a3, a4, a5 = 0.254829592, -0.284496736, 1.421413741, -1.453152027, 1.061405429
    p = 0.3275911
    sign = jnp.where(x >= 0.0, 1.0, -1.0)
    ax = jnp.abs(x)
    t = 1.0 / (1.0 + p * ax)
    poly = ((((a5 * t + a4) * t + a3) * t + a2) * t + a1) * t
    return sign * (1.0 - poly * jnp.exp(-ax * ax))


def _gelu(x):
    # exact (erf-based) GELU, matching torch.nn.GELU() default
    return 0.5 * x * (1.0 + _erf(x * (1.0 / math.sqrt(2.0))))


def _layer_norm(x, w, b):
    mean = jnp.mean(x, axis=-1, keepdims=True)
    var = jnp.mean((x - mean) ** 2, axis=-1, keepdims=True)  # biased, like torch LN
    return (x - mean) * jax.lax.rsqrt(var + EPS) * w + b


# ---------------------------------------------------------------------------
# Fused kernel.  Constant helper matrices (tiny, built once in the wrapper):
#   pool_m   (E, H): pool_m[e, h] = scale * [e//Dh == h]   -> per-head score pooling
#   spread_m (H, E): spread_m[h, e] = [e//Dh == h]         -> broadcast attn weight over head lanes
#   gath     (H, rph, L): gath[b, a, l] = [l == a*H + b]   -> row gather (stride-H tokens)
# ---------------------------------------------------------------------------
def block_kernel(x_ref, ln1w_ref, ln1b_ref, wqkv_ref, pool_ref, spread_ref, gath_ref,
                 wproj_ref, bproj_ref, ln2w_ref, ln2b_ref, w1_ref, b1_ref, w2_ref, b2_ref,
                 o_ref, xs_scr, *, num_heads, head_dim, rows_per_head):
    H, Dh, rph = num_heads, head_dim, rows_per_head
    E = H * Dh
    f32 = jnp.float32
    bf16 = jnp.bfloat16

    x = x_ref[0]                                                      # (L, E) f32

    # --- LN1 + fused qkv projection (bf16 operands, f32 accumulation on MXU) ---
    xn = _layer_norm(x, ln1w_ref[...], ln1b_ref[...])
    qkv = jnp.dot(xn.astype(bf16), wqkv_ref[...], preferred_element_type=f32)  # (L, 3E)
    q = qkv[:, 0:E]
    k = qkv[:, E:2 * E]
    v = qkv[:, 2 * E:3 * E]

    pool_m = pool_ref[...]        # (E, H)  pre-scaled by head_dim**-0.5
    spread_m = spread_ref[...]    # (H, E)

    # --- per-token head-softmax attention, lane-dense over all heads ---
    # Offset o pairs every query head h with key head (h +/- o) mod H via one lane
    # roll of k and v.  Scores are pooled to (L, H), so exp/max/sum only touch L*H
    # elements.  The (score, value) pairing is consistent per offset, so the result
    # is independent of the roll direction convention.
    s_list, v_list = [], []
    for o in range(H):
        if o == 0:
            k_o, v_o = k, v
        else:
            k_o = pltpu.roll(k, shift=o * Dh, axis=1)
            v_o = pltpu.roll(v, shift=o * Dh, axis=1)
        s_list.append(jnp.dot(q * k_o, pool_m, preferred_element_type=f32))  # (L, H)
        v_list.append(v_o)

    m = s_list[0]
    for o in range(1, H):
        m = jnp.maximum(m, s_list[o])                   # running max over key heads
    p_list = [jnp.exp(s - m) for s in s_list]           # EUP, (L, H) each
    denom = p_list[0]
    for o in range(1, H):
        denom = denom + p_list[o]
    inv = 1.0 / denom                                   # exact reciprocal (tiny array)

    # y[l, h*Dh + d] = sum_g softmax(l, h, g) * v[l, g*Dh + d]
    y = jnp.dot(p_list[0] * inv, spread_m, preferred_element_type=f32) * v_list[0]
    for o in range(1, H):
        y = y + jnp.dot(p_list[o] * inv, spread_m, preferred_element_type=f32) * v_list[o]

    # --- torch (attn @ v).transpose(1,2).reshape(B,L,E) shuffle ---
    # Xs[h*rph + a, b*Dh + d] = y[a*H + b, h*Dh + d]
    # H full-width row-gather matmuls + block stores into scratch, then ONE
    # lane-dense projection matmul.
    for b in range(H):
        yb = jnp.dot(gath_ref[b], y, preferred_element_type=f32)     # (rph, E): rows b, b+H, ...
        for h in range(H):
            xs_scr[h * rph:(h + 1) * rph, b * Dh:(b + 1) * Dh] = yb[:, h * Dh:(h + 1) * Dh]

    x_att = jnp.dot(xs_scr[...].astype(bf16), wproj_ref[...], preferred_element_type=f32)
    x1 = x + x_att + bproj_ref[...]                                   # residual 1

    # --- LN2 + MLP (fc1 -> GELU -> fc2 -> GELU) + residual ---
    h2 = _layer_norm(x1, ln2w_ref[...], ln2b_ref[...])
    a1 = _gelu(jnp.dot(h2.astype(bf16), w1_ref[...], preferred_element_type=f32) + b1_ref[...])
    a2 = _gelu(jnp.dot(a1.astype(bf16), w2_ref[...], preferred_element_type=f32) + b2_ref[...])

    # single lane-dense full-width store per grid step
    o_ref[0] = (a2 + x1).astype(o_ref.dtype)


def _vmem_limit_bytes():
    # Right-size to the actual generation: ~3/4 of physical VMEM, capped at 100 MiB
    # (=> ~96 MiB on v5e/v6e, ~48 MiB on v7x).
    cap = None
    try:
        cap = pltpu.get_tpu_info().vmem_capacity_bytes
    except Exception:
        cap = None
    if not cap:
        cap = 64 * 1024 * 1024
    return int(min(cap * 3 // 4, 100 * 1024 * 1024))


def block_forward(x, params, *, num_heads):
    B, L, E = x.shape
    H = num_heads
    assert E % H == 0
    Dh = E // H
    # TODO(synk): the fused in-kernel head shuffle assumes L % num_heads == 0; other
    # sequence lengths need a row-straddling gather (not required by this spec).
    assert L % H == 0, "fused shuffle requires seq_len divisible by num_heads"
    rph = L // H
    Hid = params["w1"].shape[1]
    scale = Dh ** -0.5
    f32 = jnp.float32
    bf16 = jnp.bfloat16

    # ---- tiny constant helper matrices (built once in plain JAX) ----
    lane = jnp.arange(E)
    head = jnp.arange(H)
    pool_m = ((lane[:, None] // Dh) == head[None, :]).astype(f32) * scale    # (E, H)
    spread_m = (head[:, None] == (lane[None, :] // Dh)).astype(f32)          # (H, E)
    gath = (jnp.arange(L)[None, None, :] ==
            (jnp.arange(rph)[None, :, None] * H + head[:, None, None])).astype(f32)  # (H, rph, L)

    # large GEMM weights as bf16 (f32 accumulation in-kernel); everything else f32
    wqkv = params["wqkv"].astype(bf16)
    wproj = params["wproj"].astype(bf16)
    w1 = params["w1"].astype(bf16)
    w2 = params["w2"].astype(bf16)

    def const_spec(shape):
        # grid-invariant input: constant index_map + single buffering
        nd = len(shape)
        return pl.BlockSpec(shape, lambda b, _nd=nd: (0,) * _nd,
                            pipeline_mode=pl.Buffered(1))

    kernel = partial(block_kernel, num_heads=H, head_dim=Dh, rows_per_head=rph)

    out = pl.pallas_call(
        kernel,
        out_shape=jax.ShapeDtypeStruct((B, L, E), f32),
        grid=(B,),  # TODO(synk): at production dims add an L/Hid grid axis for more pipeline steps
        in_specs=[
            pl.BlockSpec((1, L, E), lambda b: (b, 0, 0)),   # x
            const_spec((1, E)),                             # ln1_w
            const_spec((1, E)),                             # ln1_b
            const_spec((E, 3 * E)),                         # wqkv (bf16)
            const_spec((E, H)),                             # pool_m (pre-scaled)
            const_spec((H, E)),                             # spread_m
            const_spec((H, rph, L)),                        # row-gather selectors
            const_spec((E, E)),                             # wproj (bf16)
            const_spec((1, E)),                             # bproj
            const_spec((1, E)),                             # ln2_w
            const_spec((1, E)),                             # ln2_b
            const_spec((E, Hid)),                           # w1 (bf16)
            const_spec((1, Hid)),                           # b1
            const_spec((Hid, E)),                           # w2 (bf16)
            const_spec((1, E)),                             # b2
        ],
        out_specs=pl.BlockSpec((1, L, E), lambda b: (b, 0, 0)),
        scratch_shapes=[pltpu.VMEM((L, E), f32)],           # shuffled attn output
        compiler_params=pltpu.CompilerParams(
            dimension_semantics=("parallel",),
            vmem_limit_bytes=_vmem_limit_bytes(),
        ),
    )(x, params["ln1_w"], params["ln1_b"], wqkv, pool_m, spread_m, gath,
      wproj, params["bproj"], params["ln2_w"], params["ln2_b"],
      w1, params["b1"], w2, params["b2"])
    return out


# Pure-JAX reference, mirrors the PyTorch module op-for-op (sanity check).
def block_ref(x, p, num_heads):
    B, L, E = x.shape
    Dh = E // num_heads

    def ln(v, w, b):
        m = v.mean(-1, keepdims=True)
        var = ((v - m) ** 2).mean(-1, keepdims=True)
        return (v - m) / jnp.sqrt(var + EPS) * w[0] + b[0]

    def gelu(v):
        return 0.5 * v * (1.0 + jax.scipy.special.erf(v / jnp.sqrt(2.0)))

    res = x
    h = ln(x, p["ln1_w"], p["ln1_b"])
    qkv = h @ p["wqkv"]
    qkv = qkv.reshape(B, L, 3, E).transpose(2, 0, 1, 3).reshape(3, B, L, num_heads, Dh)
    q, k, v = qkv[0], qkv[1], qkv[2]
    attn = jnp.einsum("blhd,blgd->blhg", q, k) * (Dh ** -0.5)
    attn = jax.nn.softmax(attn, axis=-1)
    y = jnp.einsum("blhg,blgd->blhd", attn, v)
    y = y.transpose(0, 2, 1, 3).reshape(B, L, E)
    y = y @ p["wproj"] + p["bproj"][0]
    x1 = y + res
    h2 = ln(x1, p["ln2_w"], p["ln2_b"])
    m = gelu(gelu(h2 @ p["w1"] + p["b1"][0]) @ p["w2"] + p["b2"][0])
    return m + x1


if __name__ == "__main__":
    # Small but lane-dense test dims (E multiple of 128 -> aligned head slices and
    # unmasked output stores), per the perf review.
    B, L, E, H, HID = 2, 32, 128, 4, 256

    key = jax.random.PRNGKey(0)
    ks = jax.random.split(key, 8)
    params = dict(
        ln1_w=jnp.ones((1, E), jnp.float32),
        ln1_b=jnp.zeros((1, E), jnp.float32),
        wqkv=jax.random.normal(ks[0], (E, 3 * E), jnp.float32) * 0.05,   # qkv_bias=False
        wproj=jax.random.normal(ks[1], (E, E), jnp.float32) * 0.05,
        bproj=jax.random.normal(ks[2], (1, E), jnp.float32) * 0.01,
        ln2_w=jnp.ones((1, E), jnp.float32),
        ln2_b=jnp.zeros((1, E), jnp.float32),
        w1=jax.random.normal(ks[3], (E, HID), jnp.float32) * 0.05,
        b1=jax.random.normal(ks[4], (1, HID), jnp.float32) * 0.01,
        w2=jax.random.normal(ks[5], (HID, E), jnp.float32) * 0.05,
        b2=jax.random.normal(ks[6], (1, E), jnp.float32) * 0.01,
    )
    x = jax.random.normal(ks[7], (B, L, E), jnp.float32)

    out = block_forward(x, params, num_heads=H)
    jax.block_until_ready(out)

    ref = block_ref(x, params, H)
    assert out.shape == (B, L, E)
    # bf16 GEMM operands (f32 accumulation) vs the f32 reference -> slightly loose tol
    assert jnp.allclose(out, ref, rtol=2e-2, atol=2e-2), "mismatch vs pure-JAX reference"

    # TODO(synk): dropout layers (attn_drop/proj_drop/mlp_drop) are identity at p=0.0 / eval; not implemented.
    print("KERNEL_OK")
</pallas_src>

<mosaic_0001>
module attributes {stable_mosaic.version = 11 : i64} {
  func.func @block_kernel(%arg0: i32, %arg1: memref<1x32x128xf32, #tpu.memory_space<vmem>>, %arg2: memref<1x128xf32, #tpu.memory_space<vmem>>, %arg3: memref<1x128xf32, #tpu.memory_space<vmem>>, %arg4: memref<128x384xbf16, #tpu.memory_space<vmem>>, %arg5: memref<128x4xf32, #tpu.memory_space<vmem>>, %arg6: memref<4x128xf32, #tpu.memory_space<vmem>>, %arg7: memref<4x8x32xf32, #tpu.memory_space<vmem>>, %arg8: memref<128x128xbf16, #tpu.memory_space<vmem>>, %arg9: memref<1x128xf32, #tpu.memory_space<vmem>>, %arg10: memref<1x128xf32, #tpu.memory_space<vmem>>, %arg11: memref<1x128xf32, #tpu.memory_space<vmem>>, %arg12: memref<128x256xbf16, #tpu.memory_space<vmem>>, %arg13: memref<1x256xf32, #tpu.memory_space<vmem>>, %arg14: memref<256x128xbf16, #tpu.memory_space<vmem>>, %arg15: memref<1x128xf32, #tpu.memory_space<vmem>>, %arg16: memref<1x32x128xf32, #tpu.memory_space<vmem>>, %arg17: memref<32x128xf32, #tpu.memory_space<vmem>>) attributes {dimension_semantics = [#tpu.dimension_semantics<parallel>], iteration_bounds = array<i64: 2>, scalar_prefetch = 0 : i64, scratch_operands = 1 : i64, tpu.core_type = #tpu.core_type<tc>, window_params = [{transform_indices = @transform_0, window_bounds = array<i64: 1, 32, 128>}, {pipeline_mode = #tpu.pipeline_mode<synchronous>, transform_indices = @transform_1, window_bounds = array<i64: 1, 128>}, {pipeline_mode = #tpu.pipeline_mode<synchronous>, transform_indices = @transform_2, window_bounds = array<i64: 1, 128>}, {pipeline_mode = #tpu.pipeline_mode<synchronous>, transform_indices = @transform_3, window_bounds = array<i64: 128, 384>}, {pipeline_mode = #tpu.pipeline_mode<synchronous>, transform_indices = @transform_4, window_bounds = array<i64: 128, 4>}, {pipeline_mode = #tpu.pipeline_mode<synchronous>, transform_indices = @transform_5, window_bounds = array<i64: 4, 128>}, {pipeline_mode = #tpu.pipeline_mode<synchronous>, transform_indices = @transform_6, window_bounds = array<i64: 4, 8, 32>}, {pipeline_mode = #tpu.pipeline_mode<synchronous>, transform_indices = @transform_7, window_bounds = array<i64: 128, 128>}, {pipeline_mode = #tpu.pipeline_mode<synchronous>, transform_indices = @transform_8, window_bounds = array<i64: 1, 128>}, {pipeline_mode = #tpu.pipeline_mode<synchronous>, transform_indices = @transform_9, window_bounds = array<i64: 1, 128>}, {pipeline_mode = #tpu.pipeline_mode<synchronous>, transform_indices = @transform_10, window_bounds = array<i64: 1, 128>}, {pipeline_mode = #tpu.pipeline_mode<synchronous>, transform_indices = @transform_11, window_bounds = array<i64: 128, 256>}, {pipeline_mode = #tpu.pipeline_mode<synchronous>, transform_indices = @transform_12, window_bounds = array<i64: 1, 256>}, {pipeline_mode = #tpu.pipeline_mode<synchronous>, transform_indices = @transform_13, window_bounds = array<i64: 256, 128>}, {pipeline_mode = #tpu.pipeline_mode<synchronous>, transform_indices = @transform_14, window_bounds = array<i64: 1, 128>}, {transform_indices = @transform_15, window_bounds = array<i64: 1, 32, 128>}]} {
    %c0 = arith.constant 0 : index
    %c0_0 = arith.constant 0 : index
    %c0_1 = arith.constant 0 : index
    %0 = vector.load %arg1[%c0, %c0_0, %c0_1] : memref<1x32x128xf32, #tpu.memory_space<vmem>>, vector<1x32x128xf32>
    %1 = vector.shape_cast %0 : vector<1x32x128xf32> to vector<32x128xf32>
    %c0_2 = arith.constant 0 : index
    %c0_3 = arith.constant 0 : index
    %2 = vector.load %arg2[%c0_2, %c0_3] : memref<1x128xf32, #tpu.memory_space<vmem>>, vector<1x128xf32>
    %c0_4 = arith.constant 0 : index
    %c0_5 = arith.constant 0 : index
    %3 = vector.load %arg3[%c0_4, %c0_5] : memref<1x128xf32, #tpu.memory_space<vmem>>, vector<1x128xf32>
    %cst = arith.constant dense<0.000000e+00> : vector<32xf32>
    %4 = vector.multi_reduction <add>, %1, %cst [1] : vector<32x128xf32> to vector<32xf32>
    %5 = vector.shape_cast %4 : vector<32xf32> to vector<32x1xf32>
    %cst_6 = arith.constant 1.280000e+02 : f32
    %6 = vector.broadcast %cst_6 : f32 to vector<32x1xf32>
    %7 = arith.divf %5, %6 : vector<32x1xf32>
    %8 = vector.broadcast %7 : vector<32x1xf32> to vector<32x128xf32>
    %9 = arith.subf %1, %8 : vector<32x128xf32>
    %10 = arith.mulf %9, %9 : vector<32x128xf32>
    %cst_7 = arith.constant dense<0.000000e+00> : vector<32xf32>
    %11 = vector.multi_reduction <add>, %10, %cst_7 [1] : vector<32x128xf32> to vector<32xf32>
    %12 = vector.shape_cast %11 : vector<32xf32> to vector<32x1xf32>
    %cst_8 = arith.constant 1.280000e+02 : f32
    %13 = vector.broadcast %cst_8 : f32 to vector<32x1xf32>
    %14 = arith.divf %12, %13 : vector<32x1xf32>
    %15 = vector.broadcast %7 : vector<32x1xf32> to vector<32x128xf32>
    %16 = arith.subf %1, %15 : vector<32x128xf32>
    %cst_9 = arith.constant 9.99999974E-6 : f32
    %17 = vector.broadcast %cst_9 : f32 to vector<32x1xf32>
    %18 = arith.addf %14, %17 : vector<32x1xf32>
    %19 = math.rsqrt %18 : vector<32x1xf32>
    %20 = vector.broadcast %19 : vector<32x1xf32> to vector<32x128xf32>
    %21 = arith.mulf %16, %20 : vector<32x128xf32>
    %22 = vector.broadcast %2 : vector<1x128xf32> to vector<32x128xf32>
    %23 = arith.mulf %21, %22 : vector<32x128xf32>
    %24 = vector.broadcast %3 : vector<1x128xf32> to vector<32x128xf32>
    %25 = arith.addf %23, %24 : vector<32x128xf32>
    %26 = arith.truncf %25 : vector<32x128xf32> to vector<32x128xbf16>
    %c0_10 = arith.constant 0 : index
    %c0_11 = arith.constant 0 : index
    %27 = vector.load %arg4[%c0_10, %c0_11] : memref<128x384xbf16, #tpu.memory_space<vmem>>, vector<128x384xbf16>
    %cst_12 = arith.constant dense<0.000000e+00> : vector<32x384xf32>
    %28 = tpu.matmul %26, %27, %cst_12 {dimension_numbers = #tpu.dot_dimension_numbers<[1], [0], [0], [1], [0, 0, 1, 1], [], []>} : vector<32x128xbf16>, vector<128x384xbf16>, vector<32x384xf32> -> vector<32x384xf32>
    %29 = vector.extract_strided_slice %28 {offsets = [0, 0], sizes = [32, 128], strides = [1, 1]} : vector<32x384xf32> to vector<32x128xf32>
    %30 = vector.extract_strided_slice %28 {offsets = [0, 128], sizes = [32, 128], strides = [1, 1]} : vector<32x384xf32> to vector<32x128xf32>
    %31 = vector.extract_strided_slice %28 {offsets = [0, 256], sizes = [32, 128], strides = [1, 1]} : vector<32x384xf32> to vector<32x128xf32>
    %c0_13 = arith.constant 0 : index
    %c0_14 = arith.constant 0 : index
    %32 = vector.load %arg5[%c0_13, %c0_14] : memref<128x4xf32, #tpu.memory_space<vmem>>, vector<128x4xf32>
    %c0_15 = arith.constant 0 : index
    %c0_16 = arith.constant 0 : index
    %33 = vector.load %arg6[%c0_15, %c0_16] : memref<4x128xf32, #tpu.memory_space<vmem>>, vector<4x128xf32>
    %34 = arith.mulf %29, %30 : vector<32x128xf32>
    %cst_17 = arith.constant dense<0.000000e+00> : vector<32x4xf32>
    %35 = tpu.matmul %34, %32, %cst_17 {dimension_numbers = #tpu.dot_dimension_numbers<[1], [0], [0], [1], [0, 0, 1, 1], [], []>} : vector<32x128xf32>, vector<128x4xf32>, vector<32x4xf32> -> vector<32x4xf32>
    %c32_i32 = arith.constant 32 : i32
    %36 = tpu.dynamic_rotate %30 by %c32_i32 dim 1 : vector<32x128xf32>, i32 -> vector<32x128xf32>
    %c32_i32_18 = arith.constant 32 : i32
    %37 = tpu.dynamic_rotate %31 by %c32_i32_18 dim 1 : vector<32x128xf32>, i32 -> vector<32x128xf32>
    %38 = arith.mulf %29, %36 : vector<32x128xf32>
    %cst_19 = arith.constant dense<0.000000e+00> : vector<32x4xf32>
    %39 = tpu.matmul %38, %32, %cst_19 {dimension_numbers = #tpu.dot_dimension_numbers<[1], [0], [0], [1], [0, 0, 1, 1], [], []>} : vector<32x128xf32>, vector<128x4xf32>, vector<32x4xf32> -> vector<32x4xf32>
    %c64_i32 = arith.constant 64 : i32
    %40 = tpu.dynamic_rotate %30 by %c64_i32 dim 1 : vector<32x128xf32>, i32 -> vector<32x128xf32>
    %c64_i32_20 = arith.constant 64 : i32
    %41 = tpu.dynamic_rotate %31 by %c64_i32_20 dim 1 : vector<32x128xf32>, i32 -> vector<32x128xf32>
    %42 = arith.mulf %29, %40 : vector<32x128xf32>
    %cst_21 = arith.constant dense<0.000000e+00> : vector<32x4xf32>
    %43 = tpu.matmul %42, %32, %cst_21 {dimension_numbers = #tpu.dot_dimension_numbers<[1], [0], [0], [1], [0, 0, 1, 1], [], []>} : vector<32x128xf32>, vector<128x4xf32>, vector<32x4xf32> -> vector<32x4xf32>
    %c96_i32 = arith.constant 96 : i32
    %44 = tpu.dynamic_rotate %30 by %c96_i32 dim 1 : vector<32x128xf32>, i32 -> vector<32x128xf32>
    %c96_i32_22 = arith.constant 96 : i32
    %45 = tpu.dynamic_rotate %31 by %c96_i32_22 dim 1 : vector<32x128xf32>, i32 -> vector<32x128xf32>
    %46 = arith.mulf %29, %44 : vector<32x128xf32>
    %cst_23 = arith.constant dense<0.000000e+00> : vector<32x4xf32>
    %47 = tpu.matmul %46, %32, %cst_23 {dimension_numbers = #tpu.dot_dimension_numbers<[1], [0], [0], [1], [0, 0, 1, 1], [], []>} : vector<32x128xf32>, vector<128x4xf32>, vector<32x4xf32> -> vector<32x4xf32>
    %48 = arith.maximumf %35, %39 : vector<32x4xf32>
    %49 = arith.maximumf %48, %43 : vector<32x4xf32>
    %50 = arith.maximumf %49, %47 : vector<32x4xf32>
    %51 = arith.subf %35, %50 : vector<32x4xf32>
    %52 = math.exp %51 : vector<32x4xf32>
    %53 = arith.subf %39, %50 : vector<32x4xf32>
    %54 = math.exp %53 : vector<32x4xf32>
    %55 = arith.subf %43, %50 : vector<32x4xf32>
    %56 = math.exp %55 : vector<32x4xf32>
    %57 = arith.subf %47, %50 : vector<32x4xf32>
    %58 = math.exp %57 : vector<32x4xf32>
    %59 = arith.addf %52, %54 : vector<32x4xf32>
    %60 = arith.addf %59, %56 : vector<32x4xf32>
    %61 = arith.addf %60, %58 : vector<32x4xf32>
    %cst_24 = arith.constant 1.000000e+00 : f32
    %62 = vector.broadcast %cst_24 : f32 to vector<32x4xf32>
    %63 = arith.divf %62, %61 : vector<32x4xf32>
    %64 = arith.mulf %52, %63 : vector<32x4xf32>
    %cst_25 = arith.constant dense<0.000000e+00> : vector<32x128xf32>
    %65 = tpu.matmul %64, %33, %cst_25 {dimension_numbers = #tpu.dot_dimension_numbers<[1], [0], [0], [1], [0, 0, 1, 1], [], []>} : vector<32x4xf32>, vector<4x128xf32>, vector<32x128xf32> -> vector<32x128xf32>
    %66 = arith.mulf %65, %31 : vector<32x128xf32>
    %67 = arith.mulf %54, %63 : vector<32x4xf32>
    %cst_26 = arith.constant dense<0.000000e+00> : vector<32x128xf32>
    %68 = tpu.matmul %67, %33, %cst_26 {dimension_numbers = #tpu.dot_dimension_numbers<[1], [0], [0], [1], [0, 0, 1, 1], [], []>} : vector<32x4xf32>, vector<4x128xf32>, vector<32x128xf32> -> vector<32x128xf32>
    %69 = arith.mulf %68, %37 : vector<32x128xf32>
    %70 = arith.addf %66, %69 : vector<32x128xf32>
    %71 = arith.mulf %56, %63 : vector<32x4xf32>
    %cst_27 = arith.constant dense<0.000000e+00> : vector<32x128xf32>
    %72 = tpu.matmul %71, %33, %cst_27 {dimension_numbers = #tpu.dot_dimension_numbers<[1], [0], [0], [1], [0, 0, 1, 1], [], []>} : vector<32x4xf32>, vector<4x128xf32>, vector<32x128xf32> -> vector<32x128xf32>
    %73 = arith.mulf %72, %41 : vector<32x128xf32>
    %74 = arith.addf %70, %73 : vector<32x128xf32>
    %75 = arith.mulf %58, %63 : vector<32x4xf32>
    %cst_28 = arith.constant dense<0.000000e+00> : vector<32x128xf32>
    %76 = tpu.matmul %75, %33, %cst_28 {dimension_numbers = #tpu.dot_dimension_numbers<[1], [0], [0], [1], [0, 0, 1, 1], [], []>} : vector<32x4xf32>, vector<4x128xf32>, vector<32x128xf32> -> vector<32x128xf32>
    %77 = arith.mulf %76, %45 : vector<32x128xf32>
    %78 = arith.addf %74, %77 : vector<32x128xf32>
    %c0_29 = arith.constant 0 : index
    %c0_30 = arith.constant 0 : index
    %c0_31 = arith.constant 0 : index
    %79 = vector.load %arg7[%c0_29, %c0_30, %c0_31] : memref<4x8x32xf32, #tpu.memory_space<vmem>>, vector<1x8x32xf32>
    %80 = vector.shape_cast %79 : vector<1x8x32xf32> to vector<8x32xf32>
    %cst_32 = arith.constant dense<0.000000e+00> : vector<8x128xf32>
    %81 = tpu.matmul %80, %78, %cst_32 {dimension_numbers = #tpu.dot_dimension_numbers<[1], [0], [0], [1], [0, 0, 1, 1], [], []>} : vector<8x32xf32>, vector<32x128xf32>, vector<8x128xf32> -> vector<8x128xf32>
    %82 = vector.extract_strided_slice %81 {offsets = [0, 0], sizes = [8, 32], strides = [1, 1]} : vector<8x128xf32> to vector<8x32xf32>
    %c0_33 = arith.constant 0 : index
    %c0_34 = arith.constant 0 : index
    %83 = vector.load %arg17[%c0_33, %c0_34] : memref<32x128xf32, #tpu.memory_space<vmem>>, vector<8x32xf32>
    tpu.vector_store %arg17[%c0_33, %c0_34], %82 {strides = array<i32>} : memref<32x128xf32, #tpu.memory_space<vmem>>, vector<8x32xf32>,
    %84 = vector.extract_strided_slice %81 {offsets = [0, 32], sizes = [8, 32], strides = [1, 1]} : vector<8x128xf32> to vector<8x32xf32>
    %c8 = arith.constant 8 : index
    %c0_35 = arith.constant 0 : index
    %85 = vector.load %arg17[%c8, %c0_35] : memref<32x128xf32, #tpu.memory_space<vmem>>, vector<8x32xf32>
    tpu.vector_store %arg17[%c8, %c0_35], %84 {strides = array<i32>} : memref<32x128xf32, #tpu.memory_space<vmem>>, vector<8x32xf32>,
    %86 = vector.extract_strided_slice %81 {offsets = [0, 64], sizes = [8, 32], strides = [1, 1]} : vector<8x128xf32> to vector<8x32xf32>
    %c16 = arith.constant 16 : index
    %c0_36 = arith.constant 0 : index
    %87 = vector.load %arg17[%c16, %c0_36] : memref<32x128xf32, #tpu.memory_space<vmem>>, vector<8x32xf32>
    tpu.vector_store %arg17[%c16, %c0_36], %86 {strides = array<i32>} : memref<32x128xf32, #tpu.memory_space<vmem>>, vector<8x32xf32>,
    %88 = vector.extract_strided_slice %81 {offsets = [0, 96], sizes = [8, 32], strides = [1, 1]} : vector<8x128xf32> to vector<8x32xf32>
    %c24 = arith.constant 24 : index
    %c0_37 = arith.constant 0 : index
    %89 = vector.load %arg17[%c24, %c0_37] : memref<32x128xf32, #tpu.memory_space<vmem>>, vector<8x32xf32>
    tpu.vector_store %arg17[%c24, %c0_37], %88 {strides = array<i32>} : memref<32x128xf32, #tpu.memory_space<vmem>>, vector<8x32xf32>,
    %c1 = arith.constant 1 : index
    %c0_38 = arith.constant 0 : index
    %c0_39 = arith.constant 0 : index
    %90 = vector.load %arg7[%c1, %c0_38, %c0_39] : memref<4x8x32xf32, #tpu.memory_space<vmem>>, vector<1x8x32xf32>
    %91 = vector.shape_cast %90 : vector<1x8x32xf32> to vector<8x32xf32>
    %cst_40 = arith.constant dense<0.000000e+00> : vector<8x128xf32>
    %92 = tpu.matmul %91, %78, %cst_40 {dimension_numbers = #tpu.dot_dimension_numbers<[1], [0], [0], [1], [0, 0, 1, 1], [], []>} : vector<8x32xf32>, vector<32x128xf32>, vector<8x128xf32> -> vector<8x128xf32>
    %93 = vector.extract_strided_slice %92 {offsets = [0, 0], sizes = [8, 32], strides = [1, 1]} : vector<8x128xf32> to vector<8x32xf32>
    %c0_41 = arith.constant 0 : index
    %c32 = arith.constant 32 : index
    %94 = vector.load %arg17[%c0_41, %c32] : memref<32x128xf32, #tpu.memory_space<vmem>>, vector<8x32xf32>
    tpu.vector_store %arg17[%c0_41, %c32], %93 {strides = array<i32>} : memref<32x128xf32, #tpu.memory_space<vmem>>, vector<8x32xf32>,
    %95 = vector.extract_strided_slice %92 {offsets = [0, 32], sizes = [8, 32], strides = [1, 1]} : vector<8x128xf32> to vector<8x32xf32>
    %c8_42 = arith.constant 8 : index
    %c32_43 = arith.constant 32 : index
    %96 = vector.load %arg17[%c8_42, %c32_43] : memref<32x128xf32, #tpu.memory_space<vmem>>, vector<8x32xf32>
    tpu.vector_store %arg17[%c8_42, %c32_43], %95 {strides = array<i32>} : memref<32x128xf32, #tpu.memory_space<vmem>>, vector<8x32xf32>,
    %97 = vector.extract_strided_slice %92 {offsets = [0, 64], sizes = [8, 32], strides = [1, 1]} : vector<8x128xf32> to vector<8x32xf32>
    %c16_44 = arith.constant 16 : index
    %c32_45 = arith.constant 32 : index
    %98 = vector.load %arg17[%c16_44, %c32_45] : memref<32x128xf32, #tpu.memory_space<vmem>>, vector<8x32xf32>
    tpu.vector_store %arg17[%c16_44, %c32_45], %97 {strides = array<i32>} : memref<32x128xf32, #tpu.memory_space<vmem>>, vector<8x32xf32>,
    %99 = vector.extract_strided_slice %92 {offsets = [0, 96], sizes = [8, 32], strides = [1, 1]} : vector<8x128xf32> to vector<8x32xf32>
    %c24_46 = arith.constant 24 : index
    %c32_47 = arith.constant 32 : index
    %100 = vector.load %arg17[%c24_46, %c32_47] : memref<32x128xf32, #tpu.memory_space<vmem>>, vector<8x32xf32>
    tpu.vector_store %arg17[%c24_46, %c32_47], %99 {strides = array<i32>} : memref<32x128xf32, #tpu.memory_space<vmem>>, vector<8x32xf32>,
    %c2 = arith.constant 2 : index
    %c0_48 = arith.constant 0 : index
    %c0_49 = arith.constant 0 : index
    %101 = vector.load %arg7[%c2, %c0_48, %c0_49] : memref<4x8x32xf32, #tpu.memory_space<vmem>>, vector<1x8x32xf32>
    %102 = vector.shape_cast %101 : vector<1x8x32xf32> to vector<8x32xf32>
    %cst_50 = arith.constant dense<0.000000e+00> : vector<8x128xf32>
    %103 = tpu.matmul %102, %78, %cst_50 {dimension_numbers = #tpu.dot_dimension_numbers<[1], [0], [0], [1], [0, 0, 1, 1], [], []>} : vector<8x32xf32>, vector<32x128xf32>, vector<8x128xf32> -> vector<8x128xf32>
    %104 = vector.extract_strided_slice %103 {offsets = [0, 0], sizes = [8, 32], strides = [1, 1]} : vector<8x128xf32> to vector<8x32xf32>
    %c0_51 = arith.constant 0 : index
    %c64 = arith.constant 64 : index
    %105 = vector.load %arg17[%c0_51, %c64] : memref<32x128xf32, #tpu.memory_space<vmem>>, vector<8x32xf32>
    tpu.vector_store %arg17[%c0_51, %c64], %104 {strides = array<i32>} : memref<32x128xf32, #tpu.memory_space<vmem>>, vector<8x32xf32>,
    %106 = vector.extract_strided_slice %103 {offsets = [0, 32], sizes = [8, 32], strides = [1, 1]} : vector<8x128xf32> to vector<8x32xf32>
    %c8_52 = arith.constant 8 : index
    %c64_53 = arith.constant 64 : index
    %107 = vector.load %arg17[%c8_52, %c64_53] : memref<32x128xf32, #tpu.memory_space<vmem>>, vector<8x32xf32>
    tpu.vector_store %arg17[%c8_52, %c64_53], %106 {strides = array<i32>} : memref<32x128xf32, #tpu.memory_space<vmem>>, vector<8x32xf32>,
    %108 = vector.extract_strided_slice %103 {offsets = [0, 64], sizes = [8, 32], strides = [1, 1]} : vector<8x128xf32> to vector<8x32xf32>
    %c16_54 = arith.constant 16 : index
    %c64_55 = arith.constant 64 : index
    %109 = vector.load %arg17[%c16_54, %c64_55] : memref<32x128xf32, #tpu.memory_space<vmem>>, vector<8x32xf32>
    tpu.vector_store %arg17[%c16_54, %c64_55], %108 {strides = array<i32>} : memref<32x128xf32, #tpu.memory_space<vmem>>, vector<8x32xf32>,
    %110 = vector.extract_strided_slice %103 {offsets = [0, 96], sizes = [8, 32], strides = [1, 1]} : vector<8x128xf32> to vector<8x32xf32>
    %c24_56 = arith.constant 24 : index
    %c64_57 = arith.constant 64 : index
    %111 = vector.load %arg17[%c24_56, %c64_57] : memref<32x128xf32, #tpu.memory_space<vmem>>, vector<8x32xf32>
    tpu.vector_store %arg17[%c24_56, %c64_57], %110 {strides = array<i32>} : memref<32x128xf32, #tpu.memory_space<vmem>>, vector<8x32xf32>,
    %c3 = arith.constant 3 : index
    %c0_58 = arith.constant 0 : index
    %c0_59 = arith.constant 0 : index
    %112 = vector.load %arg7[%c3, %c0_58, %c0_59] : memref<4x8x32xf32, #tpu.memory_space<vmem>>, vector<1x8x32xf32>
    %113 = vector.shape_cast %112 : vector<1x8x32xf32> to vector<8x32xf32>
    %cst_60 = arith.constant dense<0.000000e+00> : vector<8x128xf32>
    %114 = tpu.matmul %113, %78, %cst_60 {dimension_numbers = #tpu.dot_dimension_numbers<[1], [0], [0], [1], [0, 0, 1, 1], [], []>} : vector<8x32xf32>, vector<32x128xf32>, vector<8x128xf32> -> vector<8x128xf32>
    %115 = vector.extract_strided_slice %114 {offsets = [0, 0], sizes = [8, 32], strides = [1, 1]} : vector<8x128xf32> to vector<8x32xf32>
    %c0_61 = arith.constant 0 : index
    %c96 = arith.constant 96 : index
    %116 = vector.load %arg17[%c0_61, %c96] : memref<32x128xf32, #tpu.memory_space<vmem>>, vector<8x32xf32>
    tpu.vector_store %arg17[%c0_61, %c96], %115 {strides = array<i32>} : memref<32x128xf32, #tpu.memory_space<vmem>>, vector<8x32xf32>,
    %117 = vector.extract_strided_slice %114 {offsets = [0, 32], sizes = [8, 32], strides = [1, 1]} : vector<8x128xf32> to vector<8x32xf32>
    %c8_62 = arith.constant 8 : index
    %c96_63 = arith.constant 96 : index
    %118 = vector.load %arg17[%c8_62, %c96_63] : memref<32x128xf32, #tpu.memory_space<vmem>>, vector<8x32xf32>
    tpu.vector_store %arg17[%c8_62, %c96_63], %117 {strides = array<i32>} : memref<32x128xf32, #tpu.memory_space<vmem>>, vector<8x32xf32>,
    %119 = vector.extract_strided_slice %114 {offsets = [0, 64], sizes = [8, 32], strides = [1, 1]} : vector<8x128xf32> to vector<8x32xf32>
    %c16_64 = arith.constant 16 : index
    %c96_65 = arith.constant 96 : index
    %120 = vector.load %arg17[%c16_64, %c96_65] : memref<32x128xf32, #tpu.memory_space<vmem>>, vector<8x32xf32>
    tpu.vector_store %arg17[%c16_64, %c96_65], %119 {strides = array<i32>} : memref<32x128xf32, #tpu.memory_space<vmem>>, vector<8x32xf32>,
    %121 = vector.extract_strided_slice %114 {offsets = [0, 96], sizes = [8, 32], strides = [1, 1]} : vector<8x128xf32> to vector<8x32xf32>
    %c24_66 = arith.constant 24 : index
    %c96_67 = arith.constant 96 : index
    %122 = vector.load %arg17[%c24_66, %c96_67] : memref<32x128xf32, #tpu.memory_space<vmem>>, vector<8x32xf32>
    tpu.vector_store %arg17[%c24_66, %c96_67], %121 {strides = array<i32>} : memref<32x128xf32, #tpu.memory_space<vmem>>, vector<8x32xf32>,
    %c0_68 = arith.constant 0 : index
    %c0_69 = arith.constant 0 : index
    %123 = vector.load %arg17[%c0_68, %c0_69] : memref<32x128xf32, #tpu.memory_space<vmem>>, vector<32x128xf32>
    %124 = arith.truncf %123 : vector<32x128xf32> to vector<32x128xbf16>
    %c0_70 = arith.constant 0 : index
    %c0_71 = arith.constant 0 : index
    %125 = vector.load %arg8[%c0_70, %c0_71] : memref<128x128xbf16, #tpu.memory_space<vmem>>, vector<128x128xbf16>
    %cst_72 = arith.constant dense<0.000000e+00> : vector<32x128xf32>
    %126 = tpu.matmul %124, %125, %cst_72 {dimension_numbers = #tpu.dot_dimension_numbers<[1], [0], [0], [1], [0, 0, 1, 1], [], []>} : vector<32x128xbf16>, vector<128x128xbf16>, vector<32x128xf32> -> vector<32x128xf32>
    %127 = arith.addf %1, %126 : vector<32x128xf32>
    %c0_73 = arith.constant 0 : index
    %c0_74 = arith.constant 0 : index
    %128 = vector.load %arg9[%c0_73, %c0_74] : memref<1x128xf32, #tpu.memory_space<vmem>>, vector<1x128xf32>
    %129 = vector.broadcast %128 : vector<1x128xf32> to vector<32x128xf32>
    %130 = arith.addf %127, %129 : vector<32x128xf32>
    %c0_75 = arith.constant 0 : index
    %c0_76 = arith.constant 0 : index
    %131 = vector.load %arg10[%c0_75, %c0_76] : memref<1x128xf32, #tpu.memory_space<vmem>>, vector<1x128xf32>
    %c0_77 = arith.constant 0 : index
    %c0_78 = arith.constant 0 : index
    %132 = vector.load %arg11[%c0_77, %c0_78] : memref<1x128xf32, #tpu.memory_space<vmem>>, vector<1x128xf32>
    %cst_79 = arith.constant dense<0.000000e+00> : vector<32xf32>
    %133 = vector.multi_reduction <add>, %130, %cst_79 [1] : vector<32x128xf32> to vector<32xf32>
    %134 = vector.shape_cast %133 : vector<32xf32> to vector<32x1xf32>
    %cst_80 = arith.constant 1.280000e+02 : f32
    %135 = vector.broadcast %cst_80 : f32 to vector<32x1xf32>
    %136 = arith.divf %134, %135 : vector<32x1xf32>
    %137 = vector.broadcast %136 : vector<32x1xf32> to vector<32x128xf32>
    %138 = arith.subf %130, %137 : vector<32x128xf32>
    %139 = arith.mulf %138, %138 : vector<32x128xf32>
    %cst_81 = arith.constant dense<0.000000e+00> : vector<32xf32>
    %140 = vector.multi_reduction <add>, %139, %cst_81 [1] : vector<32x128xf32> to vector<32xf32>
    %141 = vector.shape_cast %140 : vector<32xf32> to vector<32x1xf32>
    %cst_82 = arith.constant 1.280000e+02 : f32
    %142 = vector.broadcast %cst_82 : f32 to vector<32x1xf32>
    %143 = arith.divf %141, %142 : vector<32x1xf32>
    %144 = vector.broadcast %136 : vector<32x1xf32> to vector<32x128xf32>
    %145 = arith.subf %130, %144 : vector<32x128xf32>
    %cst_83 = arith.constant 9.99999974E-6 : f32
    %146 = vector.broadcast %cst_83 : f32 to vector<32x1xf32>
    %147 = arith.addf %143, %146 : vector<32x1xf32>
    %148 = math.rsqrt %147 : vector<32x1xf32>
    %149 = vector.broadcast %148 : vector<32x1xf32> to vector<32x128xf32>
    %150 = arith.mulf %145, %149 : vector<32x128xf32>
    %151 = vector.broadcast %131 : vector<1x128xf32> to vector<32x128xf32>
    %152 = arith.mulf %150, %151 : vector<32x128xf32>
    %153 = vector.broadcast %132 : vector<1x128xf32> to vector<32x128xf32>
    %154 = arith.addf %152, %153 : vector<32x128xf32>
    %155 = arith.truncf %154 : vector<32x128xf32> to vector<32x128xbf16>
    %c0_84 = arith.constant 0 : index
    %c0_85 = arith.constant 0 : index
    %156 = vector.load %arg12[%c0_84, %c0_85] : memref<128x256xbf16, #tpu.memory_space<vmem>>, vector<128x256xbf16>
    %cst_86 = arith.constant dense<0.000000e+00> : vector<32x256xf32>
    %157 = tpu.matmul %155, %156, %cst_86 {dimension_numbers = #tpu.dot_dimension_numbers<[1], [0], [0], [1], [0, 0, 1, 1], [], []>} : vector<32x128xbf16>, vector<128x256xbf16>, vector<32x256xf32> -> vector<32x256xf32>
    %c0_87 = arith.constant 0 : index
    %c0_88 = arith.constant 0 : index
    %158 = vector.load %arg13[%c0_87, %c0_88] : memref<1x256xf32, #tpu.memory_space<vmem>>, vector<1x256xf32>
    %159 = vector.broadcast %158 : vector<1x256xf32> to vector<32x256xf32>
    %160 = arith.addf %157, %159 : vector<32x256xf32>
    %cst_89 = arith.constant 5.000000e-01 : f32
    %161 = vector.broadcast %cst_89 : f32 to vector<32x256xf32>
    %162 = arith.mulf %161, %160 : vector<32x256xf32>
    %cst_90 = arith.constant 0.707106769 : f32
    %163 = vector.broadcast %cst_90 : f32 to vector<32x256xf32>
    %164 = arith.mulf %160, %163 : vector<32x256xf32>
    %cst_91 = arith.constant 0.000000e+00 : f32
    %165 = vector.broadcast %cst_91 : f32 to vector<32x256xf32>
    %166 = arith.cmpf oge, %164, %165 : vector<32x256xf32>
    %cst_92 = arith.constant 1.000000e+00 : f32
    %cst_93 = arith.constant -1.000000e+00 : f32
    %167 = vector.broadcast %cst_92 : f32 to vector<32x256xf32>
    %168 = vector.broadcast %cst_93 : f32 to vector<32x256xf32>
    %169 = arith.select %166, %167, %168 : vector<32x256xi1>, vector<32x256xf32>
    %170 = math.absf %164 : vector<32x256xf32>
    %cst_94 = arith.constant 0.327591091 : f32
    %171 = vector.broadcast %cst_94 : f32 to vector<32x256xf32>
    %172 = arith.mulf %171, %170 : vector<32x256xf32>
    %cst_95 = arith.constant 1.000000e+00 : f32
    %173 = vector.broadcast %cst_95 : f32 to vector<32x256xf32>
    %174 = arith.addf %173, %172 : vector<32x256xf32>
    %cst_96 = arith.constant 1.000000e+00 : f32
    %175 = vector.broadcast %cst_96 : f32 to vector<32x256xf32>
    %176 = arith.divf %175, %174 : vector<32x256xf32>
    %cst_97 = arith.constant 1.06140542 : f32
    %177 = vector.broadcast %cst_97 : f32 to vector<32x256xf32>
    %178 = arith.mulf %177, %176 : vector<32x256xf32>
    %cst_98 = arith.constant -1.45315206 : f32
    %179 = vector.broadcast %cst_98 : f32 to vector<32x256xf32>
    %180 = arith.addf %178, %179 : vector<32x256xf32>
    %181 = arith.mulf %180, %176 : vector<32x256xf32>
    %cst_99 = arith.constant 1.42141378 : f32
    %182 = vector.broadcast %cst_99 : f32 to vector<32x256xf32>
    %183 = arith.addf %181, %182 : vector<32x256xf32>
    %184 = arith.mulf %183, %176 : vector<32x256xf32>
    %cst_100 = arith.constant -0.284496725 : f32
    %185 = vector.broadcast %cst_100 : f32 to vector<32x256xf32>
    %186 = arith.addf %184, %185 : vector<32x256xf32>
    %187 = arith.mulf %186, %176 : vector<32x256xf32>
    %cst_101 = arith.constant 0.254829586 : f32
    %188 = vector.broadcast %cst_101 : f32 to vector<32x256xf32>
    %189 = arith.addf %187, %188 : vector<32x256xf32>
    %190 = arith.mulf %189, %176 : vector<32x256xf32>
    %cst_102 = arith.constant 0.000000e+00 : f32
    %191 = vector.broadcast %cst_102 : f32 to vector<32x256xf32>
    %192 = arith.subf %191, %170 : vector<32x256xf32>
    %193 = arith.mulf %192, %170 : vector<32x256xf32>
    %194 = math.exp %193 : vector<32x256xf32>
    %195 = arith.mulf %190, %194 : vector<32x256xf32>
    %cst_103 = arith.constant 1.000000e+00 : f32
    %196 = vector.broadcast %cst_103 : f32 to vector<32x256xf32>
    %197 = arith.subf %196, %195 : vector<32x256xf32>
    %198 = arith.mulf %169, %197 : vector<32x256xf32>
    %cst_104 = arith.constant 1.000000e+00 : f32
    %199 = vector.broadcast %cst_104 : f32 to vector<32x256xf32>
    %200 = arith.addf %199, %198 : vector<32x256xf32>
    %201 = arith.mulf %162, %200 : vector<32x256xf32>
    %202 = arith.truncf %201 : vector<32x256xf32> to vector<32x256xbf16>
    %c0_105 = arith.constant 0 : index
    %c0_106 = arith.constant 0 : index
    %203 = vector.load %arg14[%c0_105, %c0_106] : memref<256x128xbf16, #tpu.memory_space<vmem>>, vector<256x128xbf16>
    %cst_107 = arith.constant dense<0.000000e+00> : vector<32x128xf32>
    %204 = tpu.matmul %202, %203, %cst_107 {dimension_numbers = #tpu.dot_dimension_numbers<[1], [0], [0], [1], [0, 0, 1, 1], [], []>} : vector<32x256xbf16>, vector<256x128xbf16>, vector<32x128xf32> -> vector<32x128xf32>
    %c0_108 = arith.constant 0 : index
    %c0_109 = arith.constant 0 : index
    %205 = vector.load %arg15[%c0_108, %c0_109] : memref<1x128xf32, #tpu.memory_space<vmem>>, vector<1x128xf32>
    %206 = vector.broadcast %205 : vector<1x128xf32> to vector<32x128xf32>
    %207 = arith.addf %204, %206 : vector<32x128xf32>
    %cst_110 = arith.constant 5.000000e-01 : f32
    %208 = vector.broadcast %cst_110 : f32 to vector<32x128xf32>
    %209 = arith.mulf %208, %207 : vector<32x128xf32>
    %cst_111 = arith.constant 0.707106769 : f32
    %210 = vector.broadcast %cst_111 : f32 to vector<32x128xf32>
    %211 = arith.mulf %207, %210 : vector<32x128xf32>
    %cst_112 = arith.constant 0.000000e+00 : f32
    %212 = vector.broadcast %cst_112 : f32 to vector<32x128xf32>
    %213 = arith.cmpf oge, %211, %212 : vector<32x128xf32>
    %cst_113 = arith.constant 1.000000e+00 : f32
    %cst_114 = arith.constant -1.000000e+00 : f32
    %214 = vector.broadcast %cst_113 : f32 to vector<32x128xf32>
    %215 = vector.broadcast %cst_114 : f32 to vector<32x128xf32>
    %216 = arith.select %213, %214, %215 : vector<32x128xi1>, vector<32x128xf32>
    %217 = math.absf %211 : vector<32x128xf32>
    %cst_115 = arith.constant 0.327591091 : f32
    %218 = vector.broadcast %cst_115 : f32 to vector<32x128xf32>
    %219 = arith.mulf %218, %217 : vector<32x128xf32>
    %cst_116 = arith.constant 1.000000e+00 : f32
    %220 = vector.broadcast %cst_116 : f32 to vector<32x128xf32>
    %221 = arith.addf %220, %219 : vector<32x128xf32>
    %cst_117 = arith.constant 1.000000e+00 : f32
    %222 = vector.broadcast %cst_117 : f32 to vector<32x128xf32>
    %223 = arith.divf %222, %221 : vector<32x128xf32>
    %cst_118 = arith.constant 1.06140542 : f32
    %224 = vector.broadcast %cst_118 : f32 to vector<32x128xf32>
    %225 = arith.mulf %224, %223 : vector<32x128xf32>
    %cst_119 = arith.constant -1.45315206 : f32
    %226 = vector.broadcast %cst_119 : f32 to vector<32x128xf32>
    %227 = arith.addf %225, %226 : vector<32x128xf32>
    %228 = arith.mulf %227, %223 : vector<32x128xf32>
    %cst_120 = arith.constant 1.42141378 : f32
    %229 = vector.broadcast %cst_120 : f32 to vector<32x128xf32>
    %230 = arith.addf %228, %229 : vector<32x128xf32>
    %231 = arith.mulf %230, %223 : vector<32x128xf32>
    %cst_121 = arith.constant -0.284496725 : f32
    %232 = vector.broadcast %cst_121 : f32 to vector<32x128xf32>
    %233 = arith.addf %231, %232 : vector<32x128xf32>
    %234 = arith.mulf %233, %223 : vector<32x128xf32>
    %cst_122 = arith.constant 0.254829586 : f32
    %235 = vector.broadcast %cst_122 : f32 to vector<32x128xf32>
    %236 = arith.addf %234, %235 : vector<32x128xf32>
    %237 = arith.mulf %236, %223 : vector<32x128xf32>
    %cst_123 = arith.constant 0.000000e+00 : f32
    %238 = vector.broadcast %cst_123 : f32 to vector<32x128xf32>
    %239 = arith.subf %238, %217 : vector<32x128xf32>
    %240 = arith.mulf %239, %217 : vector<32x128xf32>
    %241 = math.exp %240 : vector<32x128xf32>
    %242 = arith.mulf %237, %241 : vector<32x128xf32>
    %cst_124 = arith.constant 1.000000e+00 : f32
    %243 = vector.broadcast %cst_124 : f32 to vector<32x128xf32>
    %244 = arith.subf %243, %242 : vector<32x128xf32>
    %245 = arith.mulf %216, %244 : vector<32x128xf32>
    %cst_125 = arith.constant 1.000000e+00 : f32
    %246 = vector.broadcast %cst_125 : f32 to vector<32x128xf32>
    %247 = arith.addf %246, %245 : vector<32x128xf32>
    %248 = arith.mulf %209, %247 : vector<32x128xf32>
    %249 = arith.addf %248, %130 : vector<32x128xf32>
    %c0_126 = arith.constant 0 : index
    %c0_127 = arith.constant 0 : index
    %c0_128 = arith.constant 0 : index
    %250 = vector.load %arg16[%c0_126, %c0_127, %c0_128] : memref<1x32x128xf32, #tpu.memory_space<vmem>>, vector<1x32x128xf32>
    %251 = vector.shape_cast %250 : vector<1x32x128xf32> to vector<32x128xf32>
    %252 = vector.shape_cast %249 : vector<32x128xf32> to vector<1x32x128xf32>
    tpu.vector_store %arg16[%c0_126, %c0_127, %c0_128], %252 {strides = array<i32>} : memref<1x32x128xf32, #tpu.memory_space<vmem>>, vector<1x32x128xf32>,
    return
  }
  func.func @transform_0(%arg0: i32) -> (i32, i32, i32) {
    %c0_i32 = arith.constant 0 : i32
    %c0_i32_0 = arith.constant 0 : i32
    %c0_i32_1 = arith.constant 0 : i32
    return %arg0, %c0_i32, %c0_i32_0 : i32, i32, i32
  }
  func.func @transform_1(%arg0: i32) -> (i32, i32) {
    %c0_i32 = arith.constant 0 : i32
    %c0_i32_0 = arith.constant 0 : i32
    %c0_i32_1 = arith.constant 0 : i32
    return %c0_i32, %c0_i32_0 : i32, i32
  }
  func.func @transform_2(%arg0: i32) -> (i32, i32) {
    %c0_i32 = arith.constant 0 : i32
    %c0_i32_0 = arith.constant 0 : i32
    %c0_i32_1 = arith.constant 0 : i32
    return %c0_i32, %c0_i32_0 : i32, i32
  }
  func.func @transform_3(%arg0: i32) -> (i32, i32) {
    %c0_i32 = arith.constant 0 : i32
    %c0_i32_0 = arith.constant 0 : i32
    %c0_i32_1 = arith.constant 0 : i32
    return %c0_i32, %c0_i32_0 : i32, i32
  }
  func.func @transform_4(%arg0: i32) -> (i32, i32) {
    %c0_i32 = arith.constant 0 : i32
    %c0_i32_0 = arith.constant 0 : i32
    %c0_i32_1 = arith.constant 0 : i32
    return %c0_i32, %c0_i32_0 : i32, i32
  }
  func.func @transform_5(%arg0: i32) -> (i32, i32) {
    %c0_i32 = arith.constant 0 : i32
    %c0_i32_0 = arith.constant 0 : i32
    %c0_i32_1 = arith.constant 0 : i32
    return %c0_i32, %c0_i32_0 : i32, i32
  }
  func.func @transform_6(%arg0: i32) -> (i32, i32, i32) {
    %c0_i32 = arith.constant 0 : i32
    %c0_i32_0 = arith.constant 0 : i32
    %c0_i32_1 = arith.constant 0 : i32
    %c0_i32_2 = arith.constant 0 : i32
    return %c0_i32, %c0_i32_0, %c0_i32_1 : i32, i32, i32
  }
  func.func @transform_7(%arg0: i32) -> (i32, i32) {
    %c0_i32 = arith.constant 0 : i32
    %c0_i32_0 = arith.constant 0 : i32
    %c0_i32_1 = arith.constant 0 : i32
    return %c0_i32, %c0_i32_0 : i32, i32
  }
  func.func @transform_8(%arg0: i32) -> (i32, i32) {
    %c0_i32 = arith.constant 0 : i32
    %c0_i32_0 = arith.constant 0 : i32
    %c0_i32_1 = arith.constant 0 : i32
    return %c0_i32, %c0_i32_0 : i32, i32
  }
  func.func @transform_9(%arg0: i32) -> (i32, i32) {
    %c0_i32 = arith.constant 0 : i32
    %c0_i32_0 = arith.constant 0 : i32
    %c0_i32_1 = arith.constant 0 : i32
    return %c0_i32, %c0_i32_0 : i32, i32
  }
  func.func @transform_10(%arg0: i32) -> (i32, i32) {
    %c0_i32 = arith.constant 0 : i32
    %c0_i32_0 = arith.constant 0 : i32
    %c0_i32_1 = arith.constant 0 : i32
    return %c0_i32, %c0_i32_0 : i32, i32
  }
  func.func @transform_11(%arg0: i32) -> (i32, i32) {
    %c0_i32 = arith.constant 0 : i32
    %c0_i32_0 = arith.constant 0 : i32
    %c0_i32_1 = arith.constant 0 : i32
    return %c0_i32, %c0_i32_0 : i32, i32
  }
  func.func @transform_12(%arg0: i32) -> (i32, i32) {
    %c0_i32 = arith.constant 0 : i32
    %c0_i32_0 = arith.constant 0 : i32
    %c0_i32_1 = arith.constant 0 : i32
    return %c0_i32, %c0_i32_0 : i32, i32
  }
  func.func @transform_13(%arg0: i32) -> (i32, i32) {
    %c0_i32 = arith.constant 0 : i32
    %c0_i32_0 = arith.constant 0 : i32
    %c0_i32_1 = arith.constant 0 : i32
    return %c0_i32, %c0_i32_0 : i32, i32
  }
  func.func @transform_14(%arg0: i32) -> (i32, i32) {
    %c0_i32 = arith.constant 0 : i32
    %c0_i32_0 = arith.constant 0 : i32
    %c0_i32_1 = arith.constant 0 : i32
    return %c0_i32, %c0_i32_0 : i32, i32
  }
  func.func @transform_15(%arg0: i32) -> (i32, i32, i32) {
    %c0_i32 = arith.constant 0 : i32
    %c0_i32_0 = arith.constant 0 : i32
    %c0_i32_1 = arith.constant 0 : i32
    return %arg0, %c0_i32, %c0_i32_0 : i32, i32, i32
  }
}

</mosaic_0001>

<llo_original>
// kernel: tpu_custom_call.1
$region0: #{tpu_custom_call.1}
  #allocation0 [shape = 'u32[]', space=smem, size = 0x4, offset = 0x4, fixed_abs, tag = 'smem constant byte address 0x4 - core index']
  #allocation1 [shape = 'u32[144,128]{1,0:T(1,128)}', space=vmem, size = 0x12000, scoped, tag = 'internal scratch']
  #allocation2 [shape = 'f32[32,128]{1,0:T(8,128)}', space=vmem, size = 0x4000, scoped, tag = 'scratch operand']
  %s0 = inlined_call_operand.hbm [shape: f32[2,32,128], index: 0, kind: input, shape index: {}]
  %s1 = inlined_call_operand.vmem [shape: f32[1,128], index: 1, kind: input, shape index: {}]
  %s2 = inlined_call_operand.vmem [shape: f32[1,128], index: 2, kind: input, shape index: {}]
  %s3 = inlined_call_operand.hbm [shape: bf16[128,384], index: 3, kind: input, shape index: {}]
  %s4 = inlined_call_operand.vmem [shape: f32[128,4], index: 4, kind: input, shape index: {}]
  %s5 = inlined_call_operand.vmem [shape: f32[4,128], index: 5, kind: input, shape index: {}]
  %s6 = inlined_call_operand.vmem [shape: f32[4,8,32], index: 6, kind: input, shape index: {}]
  %s7 = inlined_call_operand.hbm [shape: bf16[128,128], index: 7, kind: input, shape index: {}]
  %s8 = inlined_call_operand.vmem [shape: f32[1,128], index: 8, kind: input, shape index: {}]
  %s9 = inlined_call_operand.vmem [shape: f32[1,128], index: 9, kind: input, shape index: {}]
  %s10 = inlined_call_operand.vmem [shape: f32[1,128], index: 10, kind: input, shape index: {}]
  %s11 = inlined_call_operand.vmem [shape: bf16[128,256], index: 11, kind: input, shape index: {}]
  %s12 = inlined_call_operand.vmem [shape: f32[1,256], index: 12, kind: input, shape index: {}]
  %s13 = inlined_call_operand.hbm [shape: bf16[256,128], index: 13, kind: input, shape index: {}]
  %s14 = inlined_call_operand.vmem [shape: f32[1,128], index: 14, kind: input, shape index: {}]
  %s15 = inlined_call_operand.hbm [shape: f32[2,32,128], index: 15, kind: output, shape index: {}]
  %s16 = sld [smem:[#allocation0]]
  $region109: #{tpu_custom_call.1} parent=0
    _
  %s18 = ssub.s32 1, %s16
  %s19 = scalar_select 0, %s18, %s16
  $region1: #{tpu_custom_call.1} parent=0
    #allocation3 [shape = 'u8[32768]{0}', space=vmem, size = 0x8000, scoped, tag = 'input window, operand 0']
    #allocation4 [shape = 's32[2]{0}', space=sflag, size = 0x8, scoped, tag = 'scoped memory for tpu_custom_call.1']
    #allocation5 [shape = 's32[2]{0}', space=sflag, size = 0x8, scoped, tag = 'scoped memory for tpu_custom_call.1']
    #allocation6 [shape = 'u8[98304]{0}', space=vmem, size = 0x18000, scoped, tag = 'input window, operand 3, single buffered']
    #allocation7 [shape = 's32[1]{0}', space=sflag, size = 0x4, scoped, tag = 'scoped memory for tpu_custom_call.1']
    #allocation8 [shape = 'u8[32768]{0}', space=vmem, size = 0x8000, scoped, tag = 'input window, operand 7, single buffered']
    #allocation9 [shape = 'u8[65536]{0}', space=vmem, size = 0x10000, scoped, tag = 'input window, operand 13, single buffered']
    #allocation10 [shape = 's32[1]{0}', space=sflag, size = 0x4, scoped, tag = 'scoped memory for tpu_custom_call.1']
    #allocation11 [shape = 'u8[32768]{0}', space=vmem, size = 0x8000, scoped, tag = 'output window, operand 0']
    %20 = vsyncpa [#allocation4], 0
    %s21 = scalar_lea.sflag [#allocation4], 1
    %22 = vsyncpa %s21, 0
    %23 = vsyncpa [#allocation7], 0
    %24 = vsyncpa [#allocation10], 0
    %25 = vsyncpa [#allocation5], 0
    %s26 = scalar_lea.sflag [#allocation5], 1
    %27 = vsyncpa %s26, 0
    loop: start=0, step=1, limit=4
    $region2: #{tpu_custom_call.1} parent=1 // loop_pre_header
      _
    $region3: #{tpu_custom_call.1} parent=1 // loop_header
      %s29 = sphi 0, %s33
      %p30 = scmp.ge.s32.totalorder %s29, 4
      %s39 = sphi 0, %s41
      %s42 = sphi 0, %s39
      %s43 = sphi 0, %s42
      %s59 = sphi 0, %s43
      %s63 = sphi 0, %s63
      %s65 = sphi 0, %s63
      %s66 = sphi 0, %s65
      %s80 = sphi 0, %s66
      %s84 = sphi 0, %s84
      %s86 = sphi 0, %s84
      %s87 = sphi 0, %s86
      %s101 = sphi 0, %s87
      %s105 = sphi 0, %s105
      %s107 = sphi 0, %s105
      %s108 = sphi 0, %s107
      %s122 = sphi 0, %s108
      %s126 = sphi 0, %s126
      %s128 = sphi 0, %s126
      %s129 = sphi 0, %s128
      %s143 = sphi 0, %s129
      %s147 = sphi 0, %s147
      %s149 = sphi 0, %s147
      %s150 = sphi 0, %s149
      %s164 = sphi 0, %s150
      %s168 = sphi 0, %s168
      %s170 = sphi 0, %s168
      %s171 = sphi 0, %s170
      %s185 = sphi 0, %s171
      %s189 = sphi 0, %s189
      %s191 = sphi 0, %s189
      %s192 = sphi 0, %s191
      %s206 = sphi 0, %s192
      %s210 = sphi 0, %s210
      %s212 = sphi 0, %s210
      %s213 = sphi 0, %s212
      %s227 = sphi 0, %s213
      %s231 = sphi 0, %s231
      %s233 = sphi 0, %s231
      %s234 = sphi 0, %s233
      %s248 = sphi 0, %s234
      %s252 = sphi 0, %s252
      %s254 = sphi 0, %s252
      %s255 = sphi 0, %s254
      %s269 = sphi 0, %s255
      %s273 = sphi 0, %s273
      %s275 = sphi 0, %s273
      %s276 = sphi 0, %s275
      %s290 = sphi 0, %s276
      %s294 = sphi 0, %s294
      %s296 = sphi 0, %s294
      %s297 = sphi 0, %s296
      %s311 = sphi 0, %s297
      %s315 = sphi 0, %s315
      %s317 = sphi 0, %s315
      %s318 = sphi 0, %s317
      %s332 = sphi 0, %s318
      %s336 = sphi 0, %s336
      %s338 = sphi 0, %s336
      %s339 = sphi 0, %s338
      %s353 = sphi 0, %s339
      %s359 = sphi 0, %s361
      %s362 = sphi 0, %s359
      %s363 = sphi 0, %s362
      %s379 = sphi 0, %s363
    $region4: #{tpu_custom_call.1} parent=1 // loop_header_branch
      %32 = sbr.rel (%p30) target = $region8
    $region5: #{tpu_custom_call.1} parent=1 // loop_body
      %s34 = ssub.s32 %s29, 1
      %s35 = ssub.s32 %s29, 2
      %s36 = sadd.s32 %s29, 1
      %s37 = ssub.s32 %s29, %s36
      %p38 = scmp.eq.s32.totalorder %s37, 0
      %s40 = sadd.s32 %s39, 1
      %s41 = scalar_select %p38, %s39, %s40
      %p44 = pneg %p38
      %p45 = scmp.eq.s32.totalorder %s29, 1
      %p46 = por %p44, %p45
      %p47 = scmp.ne.s32.totalorder %s39, %s42
      %p48 = scmp.eq.s32.totalorder %s29, 0
      %p49 = por %p47, %p48
      %p50 = scmp.ne.s32.totalorder %s39, %s42
      %p51 = scmp.eq.s32.totalorder %s34, 1
      %p52 = por %p50, %p51
      %p53 = scmp.ne.s32.totalorder %s42, %s43
      %p54 = scmp.eq.s32.totalorder %s34, 0
      %p55 = por %p53, %p54
      %p56 = scmp.ne.s32.totalorder %s42, %s43
      %p57 = scmp.eq.s32.totalorder %s35, 1
      %p58 = por %p56, %p57
      %p60 = scmp.ne.s32.totalorder %s43, %s59
      %p61 = scmp.eq.s32.totalorder %s35, 0
      %p62 = por %p60, %p61
      %s64 = sadd.s32 %s63, 1
      %p67 = scmp.eq.s32.totalorder %s29, 1
      %p68 = scmp.ne.s32.totalorder %s63, %s65
      %p69 = scmp.eq.s32.totalorder %s29, 0
      %p70 = por %p68, %p69
      %p71 = scmp.ne.s32.totalorder %s63, %s65
      %p72 = scmp.eq.s32.totalorder %s34, 1
      %p73 = por %p71, %p72
      %p74 = scmp.ne.s32.totalorder %s65, %s66
      %p75 = scmp.eq.s32.totalorder %s34, 0
      %p76 = por %p74, %p75
      %p77 = scmp.ne.s32.totalorder %s65, %s66
      %p78 = scmp.eq.s32.totalorder %s35, 1
      %p79 = por %p77, %p78
      %p81 = scmp.ne.s32.totalorder %s66, %s80
      %p82 = scmp.eq.s32.totalorder %s35, 0
      %p83 = por %p81, %p82
      %s85 = sadd.s32 %s84, 1
      %p88 = scmp.eq.s32.totalorder %s29, 1
      %p89 = scmp.ne.s32.totalorder %s84, %s86
      %p90 = scmp.eq.s32.totalorder %s29, 0
      %p91 = por %p89, %p90
      %p92 = scmp.ne.s32.totalorder %s84, %s86
      %p93 = scmp.eq.s32.totalorder %s34, 1
      %p94 = por %p92, %p93
      %p95 = scmp.ne.s32.totalorder %s86, %s87
      %p96 = scmp.eq.s32.totalorder %s34, 0
      %p97 = por %p95, %p96
      %p98 = scmp.ne.s32.totalorder %s86, %s87
      %p99 = scmp.eq.s32.totalorder %s35, 1
      %p100 = por %p98, %p99
      %p102 = scmp.ne.s32.totalorder %s87, %s101
      %p103 = scmp.eq.s32.totalorder %s35, 0
      %p104 = por %p102, %p103
      %s106 = sadd.s32 %s105, 1
      %p109 = scmp.eq.s32.totalorder %s29, 1
      %p110 = scmp.ne.s32.totalorder %s105, %s107
      %p111 = scmp.eq.s32.totalorder %s29, 0
      %p112 = por %p110, %p111
      %p113 = scmp.ne.s32.totalorder %s105, %s107
      %p114 = scmp.eq.s32.totalorder %s34, 1
      %p115 = por %p113, %p114
      %p116 = scmp.ne.s32.totalorder %s107, %s108
      %p117 = scmp.eq.s32.totalorder %s34, 0
      %p118 = por %p116, %p117
      %p119 = scmp.ne.s32.totalorder %s107, %s108
      %p120 = scmp.eq.s32.totalorder %s35, 1
      %p121 = por %p119, %p120
      %p123 = scmp.ne.s32.totalorder %s108, %s122
      %p124 = scmp.eq.s32.totalorder %s35, 0
      %p125 = por %p123, %p124
      %s127 = sadd.s32 %s126, 1
      %p130 = scmp.eq.s32.totalorder %s29, 1
      %p131 = scmp.ne.s32.totalorder %s126, %s128
      %p132 = scmp.eq.s32.totalorder %s29, 0
      %p133 = por %p131, %p132
      %p134 = scmp.ne.s32.totalorder %s126, %s128
      %p135 = scmp.eq.s32.totalorder %s34, 1
      %p136 = por %p134, %p135
      %p137 = scmp.ne.s32.totalorder %s128, %s129
      %p138 = scmp.eq.s32.totalorder %s34, 0
      %p139 = por %p137, %p138
      %p140 = scmp.ne.s32.totalorder %s128, %s129
      %p141 = scmp.eq.s32.totalorder %s35, 1
      %p142 = por %p140, %p141
      %p144 = scmp.ne.s32.totalorder %s129, %s143
      %p145 = scmp.eq.s32.totalorder %s35, 0
      %p146 = por %p144, %p145
      %s148 = sadd.s32 %s147, 1
      %p151 = scmp.eq.s32.totalorder %s29, 1
      %p152 = scmp.ne.s32.totalorder %s147, %s149
      %p153 = scmp.eq.s32.totalorder %s29, 0
      %p154 = por %p152, %p153
      %p155 = scmp.ne.s32.totalorder %s147, %s149
      %p156 = scmp.eq.s32.totalorder %s34, 1
      %p157 = por %p155, %p156
      %p158 = scmp.ne.s32.totalorder %s149, %s150
      %p159 = scmp.eq.s32.totalorder %s34, 0
      %p160 = por %p158, %p159
      %p161 = scmp.ne.s32.totalorder %s149, %s150
      %p162 = scmp.eq.s32.totalorder %s35, 1
      %p163 = por %p161, %p162
      %p165 = scmp.ne.s32.totalorder %s150, %s164
      %p166 = scmp.eq.s32.totalorder %s35, 0
      %p167 = por %p165, %p166
      %s169 = sadd.s32 %s168, 1
      %p172 = scmp.eq.s32.totalorder %s29, 1
      %p173 = scmp.ne.s32.totalorder %s168, %s170
      %p174 = scmp.eq.s32.totalorder %s29, 0
      %p175 = por %p173, %p174
      %p176 = scmp.ne.s32.totalorder %s168, %s170
      %p177 = scmp.eq.s32.totalorder %s34, 1
      %p178 = por %p176, %p177
      %p179 = scmp.ne.s32.totalorder %s170, %s171
      %p180 = scmp.eq.s32.totalorder %s34, 0
      %p181 = por %p179, %p180
      %p182 = scmp.ne.s32.totalorder %s170, %s171
      %p183 = scmp.eq.s32.totalorder %s35, 1
      %p184 = por %p182, %p183
      %p186 = scmp.ne.s32.totalorder %s171, %s185
      %p187 = scmp.eq.s32.totalorder %s35, 0
      %p188 = por %p186, %p187
      %s190 = sadd.s32 %s189, 1
      %p193 = scmp.eq.s32.totalorder %s29, 1
      %p194 = scmp.ne.s32.totalorder %s189, %s191
      %p195 = scmp.eq.s32.totalorder %s29, 0
      %p196 = por %p194, %p195
      %p197 = scmp.ne.s32.totalorder %s189, %s191
      %p198 = scmp.eq.s32.totalorder %s34, 1
      %p199 = por %p197, %p198
      %p200 = scmp.ne.s32.totalorder %s191, %s192
      %p201 = scmp.eq.s32.totalorder %s34, 0
      %p202 = por %p200, %p201
      %p203 = scmp.ne.s32.totalorder %s191, %s192
      %p204 = scmp.eq.s32.totalorder %s35, 1
      %p205 = por %p203, %p204
      %p207 = scmp.ne.s32.totalorder %s192, %s206
      %p208 = scmp.eq.s32.totalorder %s35, 0
      %p209 = por %p207, %p208
      %s211 = sadd.s32 %s210, 1
      %p214 = scmp.eq.s32.totalorder %s29, 1
      %p215 = scmp.ne.s32.totalorder %s210, %s212
      %p216 = scmp.eq.s32.totalorder %s29, 0
      %p217 = por %p215, %p216
      %p218 = scmp.ne.s32.totalorder %s210, %s212
      %p219 = scmp.eq.s32.totalorder %s34, 1
      %p220 = por %p218, %p219
      %p221 = scmp.ne.s32.totalorder %s212, %s213
      %p222 = scmp.eq.s32.totalorder %s34, 0
      %p223 = por %p221, %p222
      %p224 = scmp.ne.s32.totalorder %s212, %s213
      %p225 = scmp.eq.s32.totalorder %s35, 1
      %p226 = por %p224, %p225
      %p228 = scmp.ne.s32.totalorder %s213, %s227
      %p229 = scmp.eq.s32.totalorder %s35, 0
      %p230 = por %p228, %p229
      %s232 = sadd.s32 %s231, 1
      %p235 = scmp.eq.s32.totalorder %s29, 1
      %p236 = scmp.ne.s32.totalorder %s231, %s233
      %p237 = scmp.eq.s32.totalorder %s29, 0
      %p238 = por %p236, %p237
      %p239 = scmp.ne.s32.totalorder %s231, %s233
      %p240 = scmp.eq.s32.totalorder %s34, 1
      %p241 = por %p239, %p240
      %p242 = scmp.ne.s32.totalorder %s233, %s234
      %p243 = scmp.eq.s32.totalorder %s34, 0
      %p244 = por %p242, %p243
      %p245 = scmp.ne.s32.totalorder %s233, %s234
      %p246 = scmp.eq.s32.totalorder %s35, 1
      %p247 = por %p245, %p246
      %p249 = scmp.ne.s32.totalorder %s234, %s248
      %p250 = scmp.eq.s32.totalorder %s35, 0
      %p251 = por %p249, %p250
      %s253 = sadd.s32 %s252, 1
      %p256 = scmp.eq.s32.totalorder %s29, 1
      %p257 = scmp.ne.s32.totalorder %s252, %s254
      %p258 = scmp.eq.s32.totalorder %s29, 0
      %p259 = por %p257, %p258
      %p260 = scmp.ne.s32.totalorder %s252, %s254
      %p261 = scmp.eq.s32.totalorder %s34, 1
      %p262 = por %p260, %p261
      %p263 = scmp.ne.s32.totalorder %s254, %s255
      %p264 = scmp.eq.s32.totalorder %s34, 0
      %p265 = por %p263, %p264
      %p266 = scmp.ne.s32.totalorder %s254, %s255
      %p267 = scmp.eq.s32.totalorder %s35, 1
      %p268 = por %p266, %p267
      %p270 = scmp.ne.s32.totalorder %s255, %s269
      %p271 = scmp.eq.s32.totalorder %s35, 0
      %p272 = por %p270, %p271
      %s274 = sadd.s32 %s273, 1
      %p277 = scmp.eq.s32.totalorder %s29, 1
      %p278 = scmp.ne.s32.totalorder %s273, %s275
      %p279 = scmp.eq.s32.totalorder %s29, 0
      %p280 = por %p278, %p279
      %p281 = scmp.ne.s32.totalorder %s273, %s275
      %p282 = scmp.eq.s32.totalorder %s34, 1
      %p283 = por %p281, %p282
      %p284 = scmp.ne.s32.totalorder %s275, %s276
      %p285 = scmp.eq.s32.totalorder %s34, 0
      %p286 = por %p284, %p285
      %p287 = scmp.ne.s32.totalorder %s275, %s276
      %p288 = scmp.eq.s32.totalorder %s35, 1
      %p289 = por %p287, %p288
      %p291 = scmp.ne.s32.totalorder %s276, %s290
      %p292 = scmp.eq.s32.totalorder %s35, 0
      %p293 = por %p291, %p292
      %s295 = sadd.s32 %s294, 1
      %p298 = scmp.eq.s32.totalorder %s29, 1
      %p299 = scmp.ne.s32.totalorder %s294, %s296
      %p300 = scmp.eq.s32.totalorder %s29, 0
      %p301 = por %p299, %p300
      %p302 = scmp.ne.s32.totalorder %s294, %s296
      %p303 = scmp.eq.s32.totalorder %s34, 1
      %p304 = por %p302, %p303
      %p305 = scmp.ne.s32.totalorder %s296, %s297
      %p306 = scmp.eq.s32.totalorder %s34, 0
      %p307 = por %p305, %p306
      %p308 = scmp.ne.s32.totalorder %s296, %s297
      %p309 = scmp.eq.s32.totalorder %s35, 1
      %p310 = por %p308, %p309
      %p312 = scmp.ne.s32.totalorder %s297, %s311
      %p313 = scmp.eq.s32.totalorder %s35, 0
      %p314 = por %p312, %p313
      %s316 = sadd.s32 %s315, 1
      %p319 = scmp.eq.s32.totalorder %s29, 1
      %p320 = scmp.ne.s32.totalorder %s315, %s317
      %p321 = scmp.eq.s32.totalorder %s29, 0
      %p322 = por %p320, %p321
      %p323 = scmp.ne.s32.totalorder %s315, %s317
      %p324 = scmp.eq.s32.totalorder %s34, 1
      %p325 = por %p323, %p324
      %p326 = scmp.ne.s32.totalorder %s317, %s318
      %p327 = scmp.eq.s32.totalorder %s34, 0
      %p328 = por %p326, %p327
      %p329 = scmp.ne.s32.totalorder %s317, %s318
      %p330 = scmp.eq.s32.totalorder %s35, 1
      %p331 = por %p329, %p330
      %p333 = scmp.ne.s32.totalorder %s318, %s332
      %p334 = scmp.eq.s32.totalorder %s35, 0
      %p335 = por %p333, %p334
      %s337 = sadd.s32 %s336, 1
      %p340 = scmp.eq.s32.totalorder %s29, 1
      %p341 = scmp.ne.s32.totalorder %s336, %s338
      %p342 = scmp.eq.s32.totalorder %s29, 0
      %p343 = por %p341, %p342
      %p344 = scmp.ne.s32.totalorder %s336, %s338
      %p345 = scmp.eq.s32.totalorder %s34, 1
      %p346 = por %p344, %p345
      %p347 = scmp.ne.s32.totalorder %s338, %s339
      %p348 = scmp.eq.s32.totalorder %s34, 0
      %p349 = por %p347, %p348
      %p350 = scmp.ne.s32.totalorder %s338, %s339
      %p351 = scmp.eq.s32.totalorder %s35, 1
      %p352 = por %p350, %p351
      %p354 = scmp.ne.s32.totalorder %s339, %s353
      %p355 = scmp.eq.s32.totalorder %s35, 0
      %p356 = por %p354, %p355
      %s357 = ssub.s32 %s29, %s36
      %p358 = scmp.eq.s32.totalorder %s357, 0
      %s360 = sadd.s32 %s359, 1
      %s361 = scalar_select %p358, %s359, %s360
      %p364 = pneg %p358
      %p365 = scmp.eq.s32.totalorder %s29, 1
      %p366 = por %p364, %p365
      %p367 = scmp.ne.s32.totalorder %s359, %s362
      %p368 = scmp.eq.s32.totalorder %s29, 0
      %p369 = por %p367, %p368
      %p370 = scmp.ne.s32.totalorder %s359, %s362
      %p371 = scmp.eq.s32.totalorder %s34, 1
      %p372 = por %p370, %p371
      %p373 = scmp.ne.s32.totalorder %s362, %s363
      %p374 = scmp.eq.s32.totalorder %s34, 0
      %p375 = por %p373, %p374
      %p376 = scmp.ne.s32.totalorder %s362, %s363
      %p377 = scmp.eq.s32.totalorder %s35, 1
      %p378 = por %p376, %p377
      %p380 = scmp.ne.s32.totalorder %s363, %s379
      %p381 = scmp.eq.s32.totalorder %s35, 0
      %p382 = por %p380, %p381
      %p383 = scmp.le.s32.totalorder 1, %s29
      %p384 = scmp.lt.s32.totalorder %s29, 3
      %p385 = pnand %p383, %p384
      %p386 = pneg %p385
      // Predicated region
      $region9: #{tpu_custom_call.1} parent=5 // pred_check
        _
      $region10: #{tpu_custom_call.1} parent=5 // pred_check_branch
        %388 = sbr.rel (%p385) target = $region12
      $region11: #{tpu_custom_call.1} parent=5 // pred_region
        %s389 = ssub.s32 %s29, 1
        // Predicated region
        $region13: #{tpu_custom_call.1} parent=11 // pred_check
          %p390 = pneg %p76
        $region14: #{tpu_custom_call.1} parent=11 // pred_check_branch
          %392 = sbr.rel (%p390) target = $region16
        $region15: #{tpu_custom_call.1} parent=11 // pred_region
          _
        $region16: #{tpu_custom_call.1} parent=11 // pred_fallthru
          _
        // Predicated region
        $region17: #{tpu_custom_call.1} parent=11 // pred_check
          %p393 = pneg %p97
        $region18: #{tpu_custom_call.1} parent=11 // pred_check_branch
          %395 = sbr.rel (%p393) target = $region20
        $region19: #{tpu_custom_call.1} parent=11 // pred_region
          _
        $region20: #{tpu_custom_call.1} parent=11 // pred_fallthru
          _
        // Predicated region
        $region21: #{tpu_custom_call.1} parent=11 // pred_check
          %p396 = pneg %p118
        $region22: #{tpu_custom_call.1} parent=11 // pred_check_branch
          %398 = sbr.rel (%p396) target = $region24
        $region23: #{tpu_custom_call.1} parent=11 // pred_region
          %s400 = ssub.s32 3072, 3072
          %401 = vsyncadd [#allocation7], %s400
          %s402 = sshll.u32 [#allocation6], 4
          %s403 = int_to_ptr.vmem [resolvable:$true] %s402
          %408 = dma.hbm_to_vmem [thread:$0]  %s3, 3072, %s403, [#allocation7], 192, 192, 12
        $region24: #{tpu_custom_call.1} parent=11 // pred_fallthru
          _
        // Predicated region
        $region25: #{tpu_custom_call.1} parent=11 // pred_check
          %p409 = pneg %p139
        $region26: #{tpu_custom_call.1} parent=11 // pred_check_branch
          %411 = sbr.rel (%p409) target = $region28
        $region27: #{tpu_custom_call.1} parent=11 // pred_region
          _
        $region28: #{tpu_custom_call.1} parent=11 // pred_fallthru
          _
        // Predicated region
        $region29: #{tpu_custom_call.1} parent=11 // pred_check
          %p412 = pneg %p160
        $region30: #{tpu_custom_call.1} parent=11 // pred_check_branch
          %414 = sbr.rel (%p412) target = $region32
        $region31: #{tpu_custom_call.1} parent=11 // pred_region
          _
        $region32: #{tpu_custom_call.1} parent=11 // pred_fallthru
          _
        // Predicated region
        $region33: #{tpu_custom_call.1} parent=11 // pred_check
          %p415 = pneg %p181
        $region34: #{tpu_custom_call.1} parent=11 // pred_check_branch
          %417 = sbr.rel (%p415) target = $region36
        $region35: #{tpu_custom_call.1} parent=11 // pred_region
          _
        $region36: #{tpu_custom_call.1} parent=11 // pred_fallthru
          _
        // Predicated region
        $region37: #{tpu_custom_call.1} parent=11 // pred_check
          %p418 = pneg %p202
        $region38: #{tpu_custom_call.1} parent=11 // pred_check_branch
          %420 = sbr.rel (%p418) target = $region40
        $region39: #{tpu_custom_call.1} parent=11 // pred_region
          %s422 = ssub.s32 1024, 1024
          %423 = vsyncadd [#allocation7], %s422
          %s424 = sshll.u32 [#allocation8], 4
          %s425 = int_to_ptr.vmem [resolvable:$true] %s424
          %430 = dma.hbm_to_vmem [thread:$0]  %s7, 1024, %s425, [#allocation7], 64, 64, 4
        $region40: #{tpu_custom_call.1} parent=11 // pred_fallthru
          _
        // Predicated region
        $region41: #{tpu_custom_call.1} parent=11 // pred_check
          %p431 = pneg %p223
        $region42: #{tpu_custom_call.1} parent=11 // pred_check_branch
          %433 = sbr.rel (%p431) target = $region44
        $region43: #{tpu_custom_call.1} parent=11 // pred_region
          _
        $region44: #{tpu_custom_call.1} parent=11 // pred_fallthru
          _
        // Predicated region
        $region45: #{tpu_custom_call.1} parent=11 // pred_check
          %p434 = pneg %p244
        $region46: #{tpu_custom_call.1} parent=11 // pred_check_branch
          %436 = sbr.rel (%p434) target = $region48
        $region47: #{tpu_custom_call.1} parent=11 // pred_region
          _
        $region48: #{tpu_custom_call.1} parent=11 // pred_fallthru
          _
        // Predicated region
        $region49: #{tpu_custom_call.1} parent=11 // pred_check
          %p437 = pneg %p265
        $region50: #{tpu_custom_call.1} parent=11 // pred_check_branch
          %439 = sbr.rel (%p437) target = $region52
        $region51: #{tpu_custom_call.1} parent=11 // pred_region
          _
        $region52: #{tpu_custom_call.1} parent=11 // pred_fallthru
          _
        // Predicated region
        $region53: #{tpu_custom_call.1} parent=11 // pred_check
          %p440 = pneg %p286
        $region54: #{tpu_custom_call.1} parent=11 // pred_check_branch
          %442 = sbr.rel (%p440) target = $region56
        $region55: #{tpu_custom_call.1} parent=11 // pred_region
          _
        $region56: #{tpu_custom_call.1} parent=11 // pred_fallthru
          _
        // Predicated region
        $region57: #{tpu_custom_call.1} parent=11 // pred_check
          %p443 = pneg %p307
        $region58: #{tpu_custom_call.1} parent=11 // pred_check_branch
          %445 = sbr.rel (%p443) target = $region60
        $region59: #{tpu_custom_call.1} parent=11 // pred_region
          _
        $region60: #{tpu_custom_call.1} parent=11 // pred_fallthru
          _
        // Predicated region
        $region61: #{tpu_custom_call.1} parent=11 // pred_check
          %p446 = pneg %p328
        $region62: #{tpu_custom_call.1} parent=11 // pred_check_branch
          %448 = sbr.rel (%p446) target = $region64
        $region63: #{tpu_custom_call.1} parent=11 // pred_region
          %s450 = ssub.s32 2048, 2048
          %451 = vsyncadd [#allocation10], %s450
          %s452 = sshll.u32 [#allocation9], 4
          %s453 = int_to_ptr.vmem [resolvable:$true] %s452
          %458 = dma.hbm_to_vmem [thread:$0]  %s13, 2048, %s453, [#allocation10], 64, 64, 4
        $region64: #{tpu_custom_call.1} parent=11 // pred_fallthru
          _
        // Predicated region
        $region65: #{tpu_custom_call.1} parent=11 // pred_check
          %p459 = pneg %p349
        $region66: #{tpu_custom_call.1} parent=11 // pred_check_branch
          %461 = sbr.rel (%p459) target = $region68
        $region67: #{tpu_custom_call.1} parent=11 // pred_region
          _
        $region68: #{tpu_custom_call.1} parent=11 // pred_fallthru
          _
      $region12: #{tpu_custom_call.1} parent=5 // pred_fallthru
        _
      %p462 = scmp.lt.s32.totalorder %s29, 2
      // Predicated region
      $region69: #{tpu_custom_call.1} parent=5 // pred_check
        %p463 = pneg %p462
      $region70: #{tpu_custom_call.1} parent=5 // pred_check_branch
        %465 = sbr.rel (%p463) target = $region72
      $region71: #{tpu_custom_call.1} parent=5 // pred_region
        // Predicated region
        $region73: #{tpu_custom_call.1} parent=71 // pred_check
          %p466 = pneg %p49
        $region74: #{tpu_custom_call.1} parent=71 // pred_check_branch
          %468 = sbr.rel (%p466) target = $region76
        $region75: #{tpu_custom_call.1} parent=71 // pred_region
          %s469 = sand.u32 %s39, 1
          %s470 = scalar_lea.sflag [#allocation4], %s469
          %s471 = sand.u32 %s39, 1
          %s472 = smul.addr %s471, 32
          %s473 = scalar_lea.vmem [#allocation3], %s472
          %s475 = ssub.s32 512, 512
          %476 = vsyncadd %s470, %s475
          %s477 = smul.addr %s29, 4
          %s478 = smul.addr %s477, 128
          %s479 = scalar_lea.hbm %s0, %s478
          %s480 = sshll.u32 %s473, 4
          %s481 = int_to_ptr.vmem [resolvable:$true] %s480
          %486 = dma.hbm_to_vmem [thread:$0]  %s479, 512, %s481, %s470, 128, 128, 8
        $region76: #{tpu_custom_call.1} parent=71 // pred_fallthru
          _
      $region72: #{tpu_custom_call.1} parent=5 // pred_fallthru
        _
      %p487 = scmp.le.s32.totalorder 1, %s29
      %p488 = scmp.lt.s32.totalorder %s29, 3
      %p489 = pnand %p487, %p488
      %p490 = pneg %p489
      // Predicated region
      $region77: #{tpu_custom_call.1} parent=5 // pred_check
        _
      $region78: #{tpu_custom_call.1} parent=5 // pred_check_branch
        %492 = sbr.rel (%p489) target = $region80
      $region79: #{tpu_custom_call.1} parent=5 // pred_region
        %s493 = ssub.s32 %s29, 1
        %s494 = sand.u32 %s42, 1
        %s495 = scalar_lea.sflag [#allocation4], %s494
        %s496 = sand.u32 %s42, 1
        %s497 = smul.addr %s496, 32
        %s498 = scalar_lea.vmem [#allocation3], %s497
        // Predicated region
        $region81: #{tpu_custom_call.1} parent=79 // pred_check
          %p499 = pneg %p55
        $region82: #{tpu_custom_call.1} parent=79 // pred_check_branch
          %501 = sbr.rel (%p499) target = $region84
        $region83: #{tpu_custom_call.1} parent=79 // pred_region
          %502 = dma.done %s495, 512
        $region84: #{tpu_custom_call.1} parent=79 // pred_fallthru
          _
        // Predicated region
        $region85: #{tpu_custom_call.1} parent=79 // pred_check
          %p503 = pneg %p118
        $region86: #{tpu_custom_call.1} parent=79 // pred_check_branch
          %505 = sbr.rel (%p503) target = $region88
        $region87: #{tpu_custom_call.1} parent=79 // pred_region
          %506 = dma.done [#allocation7], 3072
        $region88: #{tpu_custom_call.1} parent=79 // pred_fallthru
          _
        // Predicated region
        $region89: #{tpu_custom_call.1} parent=79 // pred_check
          %p507 = pneg %p202
        $region90: #{tpu_custom_call.1} parent=79 // pred_check_branch
          %509 = sbr.rel (%p507) target = $region92
        $region91: #{tpu_custom_call.1} parent=79 // pred_region
          %510 = dma.done [#allocation7], 1024
        $region92: #{tpu_custom_call.1} parent=79 // pred_fallthru
          _
        // Predicated region
        $region93: #{tpu_custom_call.1} parent=79 // pred_check
          %p511 = pneg %p328
        $region94: #{tpu_custom_call.1} parent=79 // pred_check_branch
          %513 = sbr.rel (%p511) target = $region96
        $region95: #{tpu_custom_call.1} parent=79 // pred_region
          %514 = dma.done [#allocation10], 2048
        $region96: #{tpu_custom_call.1} parent=79 // pred_fallthru
          _
        %s515 = sand.u32 %s42, 1
        %s516 = scalar_lea.sflag [#allocation4], %s515
        %s517 = sand.u32 %s42, 1
        %s518 = smul.addr %s517, 32
        %s519 = scalar_lea.vmem [#allocation3], %s518
        %p520 = pneg %p55
        %p521 = pneg %p52
        %p522 = pneg %p76
        %p523 = pneg %p73
        %p524 = pneg %p97
        %p525 = pneg %p94
        %p526 = pneg %p118
        %p527 = pneg %p115
        %p528 = pneg %p139
        %p529 = pneg %p136
        %p530 = pneg %p160
        %p531 = pneg %p157
        %p532 = pneg %p181
        %p533 = pneg %p178
        %p534 = pneg %p202
        %p535 = pneg %p199
        %p536 = pneg %p223
        %p537 = pneg %p220
        %p538 = pneg %p244
        %p539 = pneg %p241
        %p540 = pneg %p265
        %p541 = pneg %p262
        %p542 = pneg %p286
        %p543 = pneg %p283
        %p544 = pneg %p307
        %p545 = pneg %p304
        %p546 = pneg %p328
        %p547 = pneg %p325
        %p548 = pneg %p349
        %p549 = pneg %p346
        %p550 = pneg %p375
        %p551 = pneg %p372
        %s552 = sand.u32 %s362, 1
        %s553 = scalar_lea.sflag [#allocation5], %s552
        %s554 = sand.u32 %s362, 1
        %s555 = smul.addr %s554, 32
        %s556 = scalar_lea.vmem [#allocation11], %s555
        %v558 = vld [vmem:[%s498] sm:$0xff]
        %v559 = vld [vmem:[%s498 + $0x8] sm:$0xff]
        %v560 = vld [vmem:[%s498 + $0x10] sm:$0xff]
        %v561 = vld [vmem:[%s498 + $0x18] sm:$0xff]
        %v562 = vld [vmem:[%s1] sm:$0x1]
        %v563 = vld [vmem:[%s2] sm:$0x1]
        %564 = vadd.xlane.f32.xlu0 %v558
        %v565 = vpop.xlane.xlu0 %564
        %566 = vadd.xlane.f32.xlu0 %v559
        %v567 = vpop.xlane.xlu0 %566
        %568 = vadd.xlane.f32.xlu0 %v560
        %v569 = vpop.xlane.xlu0 %568
        %570 = vadd.xlane.f32.xlu0 %v561
        %v571 = vpop.xlane.xlu0 %570
        %v572 = vrcp.pop 128.0
        %v573 = vmul.f32 %v565, %v572
        %v574 = vmul.f32 %v567, %v572
        %v575 = vmul.f32 %v569, %v572
        %v576 = vmul.f32 %v571, %v572
        %v577 = vsub.f32 %v558, %v573
        %v578 = vsub.f32 %v559, %v574
        %v579 = vsub.f32 %v560, %v575
        %v580 = vsub.f32 %v561, %v576
        %v581 = vmul.f32 %v577, %v577
        %v582 = vmul.f32 %v578, %v578
        %v583 = vmul.f32 %v579, %v579
        %v584 = vmul.f32 %v580, %v580
        %585 = vadd.xlane.f32.xlu0 %v581
        %v586 = vpop.xlane.xlu0 %585
        %587 = vadd.xlane.f32.xlu0 %v582
        %v588 = vpop.xlane.xlu0 %587
        %589 = vadd.xlane.f32.xlu0 %v583
        %v590 = vpop.xlane.xlu0 %589
        %591 = vadd.xlane.f32.xlu0 %v584
        %v592 = vpop.xlane.xlu0 %591
        %v593 = vmul.f32 %v586, %v572
        %v594 = vmul.f32 %v588, %v572
        %v595 = vmul.f32 %v590, %v572
        %v596 = vmul.f32 %v592, %v572
        %v597 = vadd.f32 %v593, 1e-05
        %v598 = vadd.f32 %v594, 1e-05
        %v599 = vadd.f32 %v595, 1e-05
        %v600 = vadd.f32 %v596, 1e-05
        %v601 = vrsqrt.pop %v597
        %v602 = vrsqrt.pop %v598
        %v603 = vrsqrt.pop %v599
        %v604 = vrsqrt.pop %v600
        %v605 = vmul.f32 %v577, %v601
        %v606 = vmul.f32 %v578, %v602
        %v607 = vmul.f32 %v579, %v603
        %v608 = vmul.f32 %v580, %v604
        %v610 = vlaneseq
        %v611 = vshrl.u32 %v610, 7
        %v612 = vsub.s32 0, %v611
        %v613 = vrot.slane %v562, %v612
        %v615 = vmul.f32 %v605, %v613
        %v616 = vmul.f32 %v606, %v613
        %v617 = vmul.f32 %v607, %v613
        %v618 = vmul.f32 %v608, %v613
        %v620 = vlaneseq
        %v621 = vshrl.u32 %v620, 7
        %v622 = vsub.s32 0, %v621
        %v623 = vrot.slane %v563, %v622
        %v625 = vadd.f32 %v615, %v623
        %v626 = vadd.f32 %v616, %v623
        %v627 = vadd.f32 %v617, %v623
        %v628 = vadd.f32 %v618, %v623
        %v629 = vpack.c.bf16 %v626, %v625
        %v630 = vpack.c.bf16 %v628, %v627
        %v631 = vld [vmem:[#allocation6] sm:$0xff]
        %v632 = vld [vmem:[#allocation6 + $0x8] sm:$0xf]
        %v633 = vld [vmem:[#allocation6 + $0xc] sm:$0xff]
        %v634 = vld [vmem:[#allocation6 + $0x14] sm:$0xf]
        %v635 = vld [vmem:[#allocation6 + $0x18] sm:$0xff]
        %v636 = vld [vmem:[#allocation6 + $0x20] sm:$0xf]
        %v637 = vld [vmem:[#allocation6 + $0x24] sm:$0xff]
        %v638 = vld [vmem:[#allocation6 + $0x2c] sm:$0xf]
        %v639 = vld [vmem:[#allocation6 + $0x30] sm:$0xff]
        %v640 = vld [vmem:[#allocation6 + $0x38] sm:$0xf]
        %v641 = vld [vmem:[#allocation6 + $0x3c] sm:$0xff]
        %v642 = vld [vmem:[#allocation6 + $0x44] sm:$0xf]
        %v643 = vld [vmem:[#allocation6 + $0x48] sm:$0xff]
        %v644 = vld [vmem:[#allocation6 + $0x50] sm:$0xf]
        %v645 = vld [vmem:[#allocation6 + $0x54] sm:$0xff]
        %v646 = vld [vmem:[#allocation6 + $0x5c] sm:$0xf]
        %v647 = vld [vmem:[#allocation6 + $0x60] sm:$0xff]
        %v648 = vld [vmem:[#allocation6 + $0x68] sm:$0xf]
        %v649 = vld [vmem:[#allocation6 + $0x6c] sm:$0xff]
        %v650 = vld [vmem:[#allocation6 + $0x74] sm:$0xf]
        %v651 = vld [vmem:[#allocation6 + $0x78] sm:$0xff]
        %v652 = vld [vmem:[#allocation6 + $0x80] sm:$0xf]
        %v653 = vld [vmem:[#allocation6 + $0x84] sm:$0xff]
        %v654 = vld [vmem:[#allocation6 + $0x8c] sm:$0xf]
        %v655 = vld [vmem:[#allocation6 + $0x90] sm:$0xff]
        %v656 = vld [vmem:[#allocation6 + $0x98] sm:$0xf]
        %v657 = vld [vmem:[#allocation6 + $0x9c] sm:$0xff]
        %v658 = vld [vmem:[#allocation6 + $0xa4] sm:$0xf]
        %v659 = vld [vmem:[#allocation6 + $0xa8] sm:$0xff]
        %v660 = vld [vmem:[#allocation6 + $0xb0] sm:$0xf]
        %v661 = vld [vmem:[#allocation6 + $0xb4] sm:$0xff]
        %v662 = vld [vmem:[#allocation6 + $0xbc] sm:$0xf]
        %v695 = vunpack.c.l.b16 %v631
        %v696 = vunpack.c.h.b16 %v631
        %v697 = vunpack.c.l.b16 %v632
        %v698 = vunpack.c.l.b16 %v633
        %v699 = vunpack.c.h.b16 %v633
        %v700 = vunpack.c.l.b16 %v634
        %v701 = vunpack.c.l.b16 %v635
        %v702 = vunpack.c.h.b16 %v635
        %v703 = vunpack.c.l.b16 %v636
        %v704 = vunpack.c.l.b16 %v637
        %v705 = vunpack.c.h.b16 %v637
        %v706 = vunpack.c.l.b16 %v638
        %v707 = vunpack.c.l.b16 %v639
        %v708 = vunpack.c.h.b16 %v639
        %v709 = vunpack.c.l.b16 %v640
        %v710 = vunpack.c.l.b16 %v641
        %v711 = vunpack.c.h.b16 %v641
        %v712 = vunpack.c.l.b16 %v642
        %v713 = vunpack.c.l.b16 %v643
        %v714 = vunpack.c.h.b16 %v643
        %v715 = vunpack.c.l.b16 %v644
        %v716 = vunpack.c.l.b16 %v645
        %v717 = vunpack.c.h.b16 %v645
        %v718 = vunpack.c.l.b16 %v646
        %v719 = vunpack.c.l.b16 %v647
        %v720 = vunpack.c.h.b16 %v647
        %v721 = vunpack.c.l.b16 %v648
        %v722 = vunpack.c.l.b16 %v649
        %v723 = vunpack.c.h.b16 %v649
        %v724 = vunpack.c.l.b16 %v650
        %v725 = vunpack.c.l.b16 %v651
        %v726 = vunpack.c.h.b16 %v651
        %v727 = vunpack.c.l.b16 %v652
        %v728 = vunpack.c.l.b16 %v653
        %v729 = vunpack.c.h.b16 %v653
        %v730 = vunpack.c.l.b16 %v654
        %v731 = vunpack.c.l.b16 %v655
        %v732 = vunpack.c.h.b16 %v655
        %v733 = vunpack.c.l.b16 %v656
        %v734 = vunpack.c.l.b16 %v657
        %v735 = vunpack.c.h.b16 %v657
        %v736 = vunpack.c.l.b16 %v658
        %v737 = vunpack.c.l.b16 %v659
        %v738 = vunpack.c.h.b16 %v659
        %v739 = vunpack.c.l.b16 %v660
        %v740 = vunpack.c.l.b16 %v661
        %v741 = vunpack.c.h.b16 %v661
        %v742 = vunpack.c.l.b16 %v662
        %v743 = vpack.c.b16 %v698, %v695
        %v744 = vpack.c.b16 %v699, %v696
        %v745 = vpack.c.b16 %v700, %v697
        %v746 = vpack.c.b16 %v704, %v701
        %v747 = vpack.c.b16 %v705, %v702
        %v748 = vpack.c.b16 %v706, %v703
        %v749 = vpack.c.b16 %v710, %v707
        %v750 = vpack.c.b16 %v711, %v708
        %v751 = vpack.c.b16 %v712, %v709
        %v752 = vpack.c.b16 %v716, %v713
        %v753 = vpack.c.b16 %v717, %v714
        %v754 = vpack.c.b16 %v718, %v715
        %v755 = vpack.c.b16 %v722, %v719
        %v756 = vpack.c.b16 %v723, %v720
        %v757 = vpack.c.b16 %v724, %v721
        %v758 = vpack.c.b16 %v728, %v725
        %v759 = vpack.c.b16 %v729, %v726
        %v760 = vpack.c.b16 %v730, %v727
        %v761 = vpack.c.b16 %v734, %v731
        %v762 = vpack.c.b16 %v735, %v732
        %v763 = vpack.c.b16 %v736, %v733
        %v764 = vpack.c.b16 %v740, %v737
        %v765 = vpack.c.b16 %v741, %v738
        %v766 = vpack.c.b16 %v742, %v739
        %791 = vmatprep.subr.bf16.mxu0 %v744
        %792 = vmatpush1.bf16.msra.mxu0 %v743
        %793 = vmatprep.subr.bf16.mxu0 %v747
        %794 = vmatpush1.bf16.msra.mxu0 %v746
        %795 = vmatprep.subr.bf16.mxu0 %v750
        %796 = vmatpush1.bf16.msra.mxu0 %v749
        %797 = vmatprep.subr.bf16.mxu0 %v753
        %798 = vmatpush1.bf16.msra.mxu0 %v752
        %799 = vmatprep.subr.bf16.mxu0 %v756
        %800 = vmatpush1.bf16.msra.mxu0 %v755
        %801 = vmatprep.subr.bf16.mxu0 %v759
        %802 = vmatpush1.bf16.msra.mxu0 %v758
        %803 = vmatprep.subr.bf16.mxu0 %v762
        %804 = vmatpush1.bf16.msra.mxu0 %v761
        %805 = vmatprep.subr.bf16.mxu0 %v765
        %806 = vmatpush1.bf16.msra.mxu0 %v764
        %807 = vmatprep.subr.bf16.mxu0 0
        %808 = vmatpush1.bf16.msra.mxu0 0
        %809 = vmatprep.subr.bf16.mxu0 0
        %810 = vmatpush1.bf16.msra.mxu0 0
        %811 = vmatprep.subr.bf16.mxu0 0
        %812 = vmatpush1.bf16.msra.mxu0 0
        %813 = vmatprep.subr.bf16.mxu0 0
        %814 = vmatpush1.bf16.msra.mxu0 0
        %815 = vmatprep.subr.bf16.mxu0 0
        %816 = vmatpush1.bf16.msra.mxu0 0
        %817 = vmatprep.subr.bf16.mxu0 0
        %818 = vmatpush1.bf16.msra.mxu0 0
        %819 = vmatprep.subr.bf16.mxu0 0
        %820 = vmatpush1.bf16.msra.mxu0 0
        %821 = vmatprep.subr.bf16.mxu0 0
        %822 = vmatpush1.bf16.msra.mxu0 0
        %823 = vmatprep.mubr.bf16.mxu0 0
        %824 = vmatmul.mubr.bf16.gmra.mrb[0].mxu0 %v629
        %v825 = vpop.f32.mrb[0].mxu0
        %v826 = vadd.f32 0.0, %v825
        %v827 = vpop.f32.mrb[0].mxu0
        %v828 = vadd.f32 0.0, %v827
        %v829 = vpop.f32.mrb[0].mxu0
        %v830 = vadd.f32 0.0, %v829
        %v831 = vpop.f32.mrb[0].mxu0
        %v832 = vadd.f32 0.0, %v831
        %833 = vmatprep.mubr.bf16.mxu0 0
        %834 = vmatmul.mubr.bf16.gmra.mrb[0].mxu0 %v630
        %v835 = vpop.f32.mrb[0].mxu0
        %v836 = vadd.f32 0.0, %v835
        %v837 = vpop.f32.mrb[0].mxu0
        %v838 = vadd.f32 0.0, %v837
        %v839 = vpop.f32.mrb[0].mxu0
        %v840 = vadd.f32 0.0, %v839
        %v841 = vpop.f32.mrb[0].mxu0
        %v842 = vadd.f32 0.0, %v841
        %843 = vdwg.mxu0
        %844 = vmatprep.subr.bf16.mxu0 0
        %845 = vmatpush1.bf16.msra.mxu0 %v745
        %846 = vmatprep.subr.bf16.mxu0 0
        %847 = vmatpush1.bf16.msra.mxu0 %v748
        %848 = vmatprep.subr.bf16.mxu0 0
        %849 = vmatpush1.bf16.msra.mxu0 %v751
        %850 = vmatprep.subr.bf16.mxu0 0
        %851 = vmatpush1.bf16.msra.mxu0 %v754
        %852 = vmatprep.subr.bf16.mxu0 0
        %853 = vmatpush1.bf16.msra.mxu0 %v757
        %854 = vmatprep.subr.bf16.mxu0 0
        %855 = vmatpush1.bf16.msra.mxu0 %v760
        %856 = vmatprep.subr.bf16.mxu0 0
        %857 = vmatpush1.bf16.msra.mxu0 %v763
        %858 = vmatprep.subr.bf16.mxu0 0
        %859 = vmatpush1.bf16.msra.mxu0 %v766
        %860 = vmatprep.subr.bf16.mxu0 0
        %861 = vmatpush1.bf16.msra.mxu0 0
        %862 = vmatprep.subr.bf16.mxu0 0
        %863 = vmatpush1.bf16.msra.mxu0 0
        %864 = vmatprep.subr.bf16.mxu0 0
        %865 = vmatpush1.bf16.msra.mxu0 0
        %866 = vmatprep.subr.bf16.mxu0 0
        %867 = vmatpush1.bf16.msra.mxu0 0
        %868 = vmatprep.subr.bf16.mxu0 0
        %869 = vmatpush1.bf16.msra.mxu0 0
        %870 = vmatprep.subr.bf16.mxu0 0
        %871 = vmatpush1.bf16.msra.mxu0 0
        %872 = vmatprep.subr.bf16.mxu0 0
        %873 = vmatpush1.bf16.msra.mxu0 0
        %874 = vmatprep.subr.bf16.mxu0 0
        %875 = vmatpush1.bf16.msra.mxu0 0
        %876 = vmatprep.mubr.bf16.mxu0 0
        %877 = vmatmul.mubr.bf16.gmra.mrb[0].mxu0 %v629
        %v878 = vpop.f32.mrb[0].mxu0
        %v879 = vadd.f32 0.0, %v878
        %v880 = vpop.f32.mrb[0].mxu0
        %v881 = vpop.f32.mrb[0].mxu0
        %v882 = vadd.f32 0.0, %v881
        %v883 = vpop.f32.mrb[0].mxu0
        %884 = vmatprep.mubr.bf16.mxu0 0
        %885 = vmatmul.mubr.bf16.gmra.mrb[0].mxu0 %v630
        %v886 = vpop.f32.mrb[0].mxu0
        %v887 = vadd.f32 0.0, %v886
        %v888 = vpop.f32.mrb[0].mxu0
        %v889 = vpop.f32.mrb[0].mxu0
        %v890 = vadd.f32 0.0, %v889
        %v891 = vpop.f32.mrb[0].mxu0
        %892 = vdwg.mxu0
        %v893 = vld [vmem:[%s4] sm:$0xff]
        %v894 = vld [vmem:[%s4 + $0x8] sm:$0xff]
        %v895 = vld [vmem:[%s4 + $0x10] sm:$0xff]
        %v896 = vld [vmem:[%s4 + $0x18] sm:$0xff]
        %v897 = vld [vmem:[%s4 + $0x20] sm:$0xff]
        %v898 = vld [vmem:[%s4 + $0x28] sm:$0xff]
        %v899 = vld [vmem:[%s4 + $0x30] sm:$0xff]
        %v900 = vld [vmem:[%s4 + $0x38] sm:$0xff]
        %v901 = vld [vmem:[%s4 + $0x40] sm:$0xff]
        %v902 = vld [vmem:[%s4 + $0x48] sm:$0xff]
        %v903 = vld [vmem:[%s4 + $0x50] sm:$0xff]
        %v904 = vld [vmem:[%s4 + $0x58] sm:$0xff]
        %v905 = vld [vmem:[%s4 + $0x60] sm:$0xff]
        %v906 = vld [vmem:[%s4 + $0x68] sm:$0xff]
        %v907 = vld [vmem:[%s4 + $0x70] sm:$0xff]
        %v908 = vld [vmem:[%s4 + $0x78] sm:$0xff]
        %v909 = vld [vmem:[%s5] sm:$0xf]
        %v910 = vmul.f32 %v826, %v828
        %v911 = vmul.f32 %v830, %v832
        %v912 = vmul.f32 %v836, %v838
        %v913 = vmul.f32 %v840, %v842
        %914 = vmatprep.subr.mxu0 0.0
        %915 = vmatpush1.msra.mxu0 %v893
        %916 = vmatprep.subr.mxu0 0.0
        %917 = vmatpush1.msra.mxu0 %v894
        %918 = vmatprep.subr.mxu0 0.0
        %919 = vmatpush1.msra.mxu0 %v895
        %920 = vmatprep.subr.mxu0 0.0
        %921 = vmatpush1.msra.mxu0 %v896
        %922 = vmatprep.subr.mxu0 0.0
        %923 = vmatpush1.msra.mxu0 %v897
        %924 = vmatprep.subr.mxu0 0.0
        %925 = vmatpush1.msra.mxu0 %v898
        %926 = vmatprep.subr.mxu0 0.0
        %927 = vmatpush1.msra.mxu0 %v899
        %928 = vmatprep.subr.mxu0 0.0
        %929 = vmatpush1.msra.mxu0 %v900
        %930 = vmatprep.subr.mxu0 0.0
        %931 = vmatpush1.msra.mxu0 %v901
        %932 = vmatprep.subr.mxu0 0.0
        %933 = vmatpush1.msra.mxu0 %v902
        %934 = vmatprep.subr.mxu0 0.0
        %935 = vmatpush1.msra.mxu0 %v903
        %936 = vmatprep.subr.mxu0 0.0
        %937 = vmatpush1.msra.mxu0 %v904
        %938 = vmatprep.subr.mxu0 0.0
        %939 = vmatpush1.msra.mxu0 %v905
        %940 = vmatprep.subr.mxu0 0.0
        %941 = vmatpush1.msra.mxu0 %v906
        %942 = vmatprep.subr.mxu0 0.0
        %943 = vmatpush1.msra.mxu0 %v907
        %944 = vmatprep.subr.mxu0 0.0
        %945 = vmatpush1.msra.mxu0 %v908
        %946 = vmatprep.subr.mxu0 0.0
        %947 = vmatpush1.msra.mxu0 0.0
        %948 = vmatprep.subr.mxu0 0.0
        %949 = vmatpush1.msra.mxu0 0.0
        %950 = vmatprep.subr.mxu0 0.0
        %951 = vmatpush1.msra.mxu0 0.0
        %952 = vmatprep.subr.mxu0 0.0
        %953 = vmatpush1.msra.mxu0 0.0
        %954 = vmatprep.subr.mxu0 0.0
        %955 = vmatpush1.msra.mxu0 0.0
        %956 = vmatprep.subr.mxu0 0.0
        %957 = vmatpush1.msra.mxu0 0.0
        %958 = vmatprep.subr.mxu0 0.0
        %959 = vmatpush1.msra.mxu0 0.0
        %960 = vmatprep.subr.mxu0 0.0
        %961 = vmatpush1.msra.mxu0 0.0
        %962 = vmatprep.subr.mxu0 0.0
        %963 = vmatpush1.msra.mxu0 0.0
        %964 = vmatprep.subr.mxu0 0.0
        %965 = vmatpush1.msra.mxu0 0.0
        %966 = vmatprep.subr.mxu0 0.0
        %967 = vmatpush1.msra.mxu0 0.0
        %968 = vmatprep.subr.mxu0 0.0
        %969 = vmatpush1.msra.mxu0 0.0
        %970 = vmatprep.subr.mxu0 0.0
        %971 = vmatpush1.msra.mxu0 0.0
        %972 = vmatprep.subr.mxu0 0.0
        %973 = vmatpush1.msra.mxu0 0.0
        %974 = vmatprep.subr.mxu0 0.0
        %975 = vmatpush1.msra.mxu0 0.0
        %976 = vmatprep.subr.mxu0 0.0
        %977 = vmatpush1.msra.mxu0 0.0
        %978 = vmatprep.mubr.f32.mxu0 0.0
        %979 = vmatmul.mubr.f32.gmra.mrb[0].mxu0 %v910
        %v980 = vpop.f32.mrb[0].mxu0
        %v981 = vadd.f32 0.0, %v980
        %v982 = vpop.f32.mrb[0].mxu0
        %983 = vmatprep.mubr.f32.mxu0 0.0
        %984 = vmatmul.mubr.f32.gmra.mrb[0].mxu0 %v911
        %v985 = vpop.f32.mrb[0].mxu0
        %v986 = vadd.f32 0.0, %v985
        %v987 = vpop.f32.mrb[0].mxu0
        %988 = vmatprep.mubr.f32.mxu0 0.0
        %989 = vmatmul.mubr.f32.gmra.mrb[0].mxu0 %v912
        %v990 = vpop.f32.mrb[0].mxu0
        %v991 = vadd.f32 0.0, %v990
        %v992 = vpop.f32.mrb[0].mxu0
        %993 = vmatprep.mubr.f32.mxu0 0.0
        %994 = vmatmul.mubr.f32.gmra.mrb[0].mxu0 %v913
        %v995 = vpop.f32.mrb[0].mxu0
        %v996 = vadd.f32 0.0, %v995
        %v997 = vpop.f32.mrb[0].mxu0
        %998 = vdwg.mxu0
        %999 = vrot.lane.b32.xlu0 %v828, 32
        %v1000 = vpop.permute.xlu0 %999
        %1001 = vrot.lane.b32.xlu0 %v832, 32
        %v1002 = vpop.permute.xlu0 %1001
        %1003 = vrot.lane.b32.xlu0 %v838, 32
        %v1004 = vpop.permute.xlu0 %1003
        %1005 = vrot.lane.b32.xlu0 %v842, 32
        %v1006 = vpop.permute.xlu0 %1005
        %1007 = vrot.lane.b32.xlu0 %v879, 32
        %v1008 = vpop.permute.xlu0 %1007
        %1009 = vrot.lane.b32.xlu0 %v882, 32
        %v1010 = vpop.permute.xlu0 %1009
        %1011 = vrot.lane.b32.xlu0 %v887, 32
        %v1012 = vpop.permute.xlu0 %1011
        %1013 = vrot.lane.b32.xlu0 %v890, 32
        %v1014 = vpop.permute.xlu0 %1013
        %v1015 = vmul.f32 %v826, %v1000
        %v1016 = vmul.f32 %v830, %v1002
        %v1017 = vmul.f32 %v836, %v1004
        %v1018 = vmul.f32 %v840, %v1006
        %1019 = vmatprep.subr.mxu0 0.0
        %1020 = vmatpush1.msra.mxu0 %v893
        %1021 = vmatprep.subr.mxu0 0.0
        %1022 = vmatpush1.msra.mxu0 %v894
        %1023 = vmatprep.subr.mxu0 0.0
        %1024 = vmatpush1.msra.mxu0 %v895
        %1025 = vmatprep.subr.mxu0 0.0
        %1026 = vmatpush1.msra.mxu0 %v896
        %1027 = vmatprep.subr.mxu0 0.0
        %1028 = vmatpush1.msra.mxu0 %v897
        %1029 = vmatprep.subr.mxu0 0.0
        %1030 = vmatpush1.msra.mxu0 %v898
        %1031 = vmatprep.subr.mxu0 0.0
        %1032 = vmatpush1.msra.mxu0 %v899
        %1033 = vmatprep.subr.mxu0 0.0
        %1034 = vmatpush1.msra.mxu0 %v900
        %1035 = vmatprep.subr.mxu0 0.0
        %1036 = vmatpush1.msra.mxu0 %v901
        %1037 = vmatprep.subr.mxu0 0.0
        %1038 = vmatpush1.msra.mxu0 %v902
        %1039 = vmatprep.subr.mxu0 0.0
        %1040 = vmatpush1.msra.mxu0 %v903
        %1041 = vmatprep.subr.mxu0 0.0
        %1042 = vmatpush1.msra.mxu0 %v904
        %1043 = vmatprep.subr.mxu0 0.0
        %1044 = vmatpush1.msra.mxu0 %v905
        %1045 = vmatprep.subr.mxu0 0.0
        %1046 = vmatpush1.msra.mxu0 %v906
        %1047 = vmatprep.subr.mxu0 0.0
        %1048 = vmatpush1.msra.mxu0 %v907
        %1049 = vmatprep.subr.mxu0 0.0
        %1050 = vmatpush1.msra.mxu0 %v908
        %1051 = vmatprep.subr.mxu0 0.0
        %1052 = vmatpush1.msra.mxu0 0.0
        %1053 = vmatprep.subr.mxu0 0.0
        %1054 = vmatpush1.msra.mxu0 0.0
        %1055 = vmatprep.subr.mxu0 0.0
        %1056 = vmatpush1.msra.mxu0 0.0
        %1057 = vmatprep.subr.mxu0 0.0
        %1058 = vmatpush1.msra.mxu0 0.0
        %1059 = vmatprep.subr.mxu0 0.0
        %1060 = vmatpush1.msra.mxu0 0.0
        %1061 = vmatprep.subr.mxu0 0.0
        %1062 = vmatpush1.msra.mxu0 0.0
        %1063 = vmatprep.subr.mxu0 0.0
        %1064 = vmatpush1.msra.mxu0 0.0
        %1065 = vmatprep.subr.mxu0 0.0
        %1066 = vmatpush1.msra.mxu0 0.0
        %1067 = vmatprep.subr.mxu0 0.0
        %1068 = vmatpush1.msra.mxu0 0.0
        %1069 = vmatprep.subr.mxu0 0.0
        %1070 = vmatpush1.msra.mxu0 0.0
        %1071 = vmatprep.subr.mxu0 0.0
        %1072 = vmatpush1.msra.mxu0 0.0
        %1073 = vmatprep.subr.mxu0 0.0
        %1074 = vmatpush1.msra.mxu0 0.0
        %1075 = vmatprep.subr.mxu0 0.0
        %1076 = vmatpush1.msra.mxu0 0.0
        %1077 = vmatprep.subr.mxu0 0.0
        %1078 = vmatpush1.msra.mxu0 0.0
        %1079 = vmatprep.subr.mxu0 0.0
        %1080 = vmatpush1.msra.mxu0 0.0
        %1081 = vmatprep.subr.mxu0 0.0
        %1082 = vmatpush1.msra.mxu0 0.0
        %1083 = vmatprep.mubr.f32.mxu0 0.0
        %1084 = vmatmul.mubr.f32.gmra.mrb[0].mxu0 %v1015
        %v1085 = vpop.f32.mrb[0].mxu0
        %v1086 = vadd.f32 0.0, %v1085
        %v1087 = vpop.f32.mrb[0].mxu0
        %1088 = vmatprep.mubr.f32.mxu0 0.0
        %1089 = vmatmul.mubr.f32.gmra.mrb[0].mxu0 %v1016
        %v1090 = vpop.f32.mrb[0].mxu0
        %v1091 = vadd.f32 0.0, %v1090
        %v1092 = vpop.f32.mrb[0].mxu0
        %1093 = vmatprep.mubr.f32.mxu0 0.0
        %1094 = vmatmul.mubr.f32.gmra.mrb[0].mxu0 %v1017
        %v1095 = vpop.f32.mrb[0].mxu0
        %v1096 = vadd.f32 0.0, %v1095
        %v1097 = vpop.f32.mrb[0].mxu0
        %1098 = vmatprep.mubr.f32.mxu0 0.0
        %1099 = vmatmul.mubr.f32.gmra.mrb[0].mxu0 %v1018
        %v1100 = vpop.f32.mrb[0].mxu0
        %v1101 = vadd.f32 0.0, %v1100
        %v1102 = vpop.f32.mrb[0].mxu0
        %1103 = vdwg.mxu0
        %1104 = vrot.lane.b32.xlu0 %v828, 64
        %v1105 = vpop.permute.xlu0 %1104
        %1106 = vrot.lane.b32.xlu0 %v832, 64
        %v1107 = vpop.permute.xlu0 %1106
        %1108 = vrot.lane.b32.xlu0 %v838, 64
        %v1109 = vpop.permute.xlu0 %1108
        %1110 = vrot.lane.b32.xlu0 %v842, 64
        %v1111 = vpop.permute.xlu0 %1110
        %1112 = vrot.lane.b32.xlu0 %v879, 64
        %v1113 = vpop.permute.xlu0 %1112
        %1114 = vrot.lane.b32.xlu0 %v882, 64
        %v1115 = vpop.permute.xlu0 %1114
        %1116 = vrot.lane.b32.xlu0 %v887, 64
        %v1117 = vpop.permute.xlu0 %1116
        %1118 = vrot.lane.b32.xlu0 %v890, 64
        %v1119 = vpop.permute.xlu0 %1118
        %v1120 = vmul.f32 %v826, %v1105
        %v1121 = vmul.f32 %v830, %v1107
        %v1122 = vmul.f32 %v836, %v1109
        %v1123 = vmul.f32 %v840, %v1111
        %1124 = vmatprep.subr.mxu0 0.0
        %1125 = vmatpush1.msra.mxu0 %v893
        %1126 = vmatprep.subr.mxu0 0.0
        %1127 = vmatpush1.msra.mxu0 %v894
        %1128 = vmatprep.subr.mxu0 0.0
        %1129 = vmatpush1.msra.mxu0 %v895
        %1130 = vmatprep.subr.mxu0 0.0
        %1131 = vmatpush1.msra.mxu0 %v896
        %1132 = vmatprep.subr.mxu0 0.0
        %1133 = vmatpush1.msra.mxu0 %v897
        %1134 = vmatprep.subr.mxu0 0.0
        %1135 = vmatpush1.msra.mxu0 %v898
        %1136 = vmatprep.subr.mxu0 0.0
        %1137 = vmatpush1.msra.mxu0 %v899
        %1138 = vmatprep.subr.mxu0 0.0
        %1139 = vmatpush1.msra.mxu0 %v900
        %1140 = vmatprep.subr.mxu0 0.0
        %1141 = vmatpush1.msra.mxu0 %v901
        %1142 = vmatprep.subr.mxu0 0.0
        %1143 = vmatpush1.msra.mxu0 %v902
        %1144 = vmatprep.subr.mxu0 0.0
        %1145 = vmatpush1.msra.mxu0 %v903
        %1146 = vmatprep.subr.mxu0 0.0
        %1147 = vmatpush1.msra.mxu0 %v904
        %1148 = vmatprep.subr.mxu0 0.0
        %1149 = vmatpush1.msra.mxu0 %v905
        %1150 = vmatprep.subr.mxu0 0.0
        %1151 = vmatpush1.msra.mxu0 %v906
        %1152 = vmatprep.subr.mxu0 0.0
        %1153 = vmatpush1.msra.mxu0 %v907
        %1154 = vmatprep.subr.mxu0 0.0
        %1155 = vmatpush1.msra.mxu0 %v908
        %1156 = vmatprep.subr.mxu0 0.0
        %1157 = vmatpush1.msra.mxu0 0.0
        %1158 = vmatprep.subr.mxu0 0.0
        %1159 = vmatpush1.msra.mxu0 0.0
        %1160 = vmatprep.subr.mxu0 0.0
        %1161 = vmatpush1.msra.mxu0 0.0
        %1162 = vmatprep.subr.mxu0 0.0
        %1163 = vmatpush1.msra.mxu0 0.0
        %1164 = vmatprep.subr.mxu0 0.0
        %1165 = vmatpush1.msra.mxu0 0.0
        %1166 = vmatprep.subr.mxu0 0.0
        %1167 = vmatpush1.msra.mxu0 0.0
        %1168 = vmatprep.subr.mxu0 0.0
        %1169 = vmatpush1.msra.mxu0 0.0
        %1170 = vmatprep.subr.mxu0 0.0
        %1171 = vmatpush1.msra.mxu0 0.0
        %1172 = vmatprep.subr.mxu0 0.0
        %1173 = vmatpush1.msra.mxu0 0.0
        %1174 = vmatprep.subr.mxu0 0.0
        %1175 = vmatpush1.msra.mxu0 0.0
        %1176 = vmatprep.subr.mxu0 0.0
        %1177 = vmatpush1.msra.mxu0 0.0
        %1178 = vmatprep.subr.mxu0 0.0
        %1179 = vmatpush1.msra.mxu0 0.0
        %1180 = vmatprep.subr.mxu0 0.0
        %1181 = vmatpush1.msra.mxu0 0.0
        %1182 = vmatprep.subr.mxu0 0.0
        %1183 = vmatpush1.msra.mxu0 0.0
        %1184 = vmatprep.subr.mxu0 0.0
        %1185 = vmatpush1.msra.mxu0 0.0
        %1186 = vmatprep.subr.mxu0 0.0
        %1187 = vmatpush1.msra.mxu0 0.0
        %1188 = vmatprep.mubr.f32.mxu0 0.0
        %1189 = vmatmul.mubr.f32.gmra.mrb[0].mxu0 %v1120
        %v1190 = vpop.f32.mrb[0].mxu0
        %v1191 = vadd.f32 0.0, %v1190
        %v1192 = vpop.f32.mrb[0].mxu0
        %1193 = vmatprep.mubr.f32.mxu0 0.0
        %1194 = vmatmul.mubr.f32.gmra.mrb[0].mxu0 %v1121
        %v1195 = vpop.f32.mrb[0].mxu0
        %v1196 = vadd.f32 0.0, %v1195
        %v1197 = vpop.f32.mrb[0].mxu0
        %1198 = vmatprep.mubr.f32.mxu0 0.0
        %1199 = vmatmul.mubr.f32.gmra.mrb[0].mxu0 %v1122
        %v1200 = vpop.f32.mrb[0].mxu0
        %v1201 = vadd.f32 0.0, %v1200
        %v1202 = vpop.f32.mrb[0].mxu0
        %1203 = vmatprep.mubr.f32.mxu0 0.0
        %1204 = vmatmul.mubr.f32.gmra.mrb[0].mxu0 %v1123
        %v1205 = vpop.f32.mrb[0].mxu0
        %v1206 = vadd.f32 0.0, %v1205
        %v1207 = vpop.f32.mrb[0].mxu0
        %1208 = vdwg.mxu0
        %1209 = vrot.lane.b32.xlu0 %v828, 96
        %v1210 = vpop.permute.xlu0 %1209
        %1211 = vrot.lane.b32.xlu0 %v832, 96
        %v1212 = vpop.permute.xlu0 %1211
        %1213 = vrot.lane.b32.xlu0 %v838, 96
        %v1214 = vpop.permute.xlu0 %1213
        %1215 = vrot.lane.b32.xlu0 %v842, 96
        %v1216 = vpop.permute.xlu0 %1215
        %1217 = vrot.lane.b32.xlu0 %v879, 96
        %v1218 = vpop.permute.xlu0 %1217
        %1219 = vrot.lane.b32.xlu0 %v882, 96
        %v1220 = vpop.permute.xlu0 %1219
        %1221 = vrot.lane.b32.xlu0 %v887, 96
        %v1222 = vpop.permute.xlu0 %1221
        %1223 = vrot.lane.b32.xlu0 %v890, 96
        %v1224 = vpop.permute.xlu0 %1223
        %v1225 = vmul.f32 %v826, %v1210
        %v1226 = vmul.f32 %v830, %v1212
        %v1227 = vmul.f32 %v836, %v1214
        %v1228 = vmul.f32 %v840, %v1216
        %1229 = vmatprep.subr.mxu0 0.0
        %1230 = vmatpush1.msra.mxu0 %v893
        %1231 = vmatprep.subr.mxu0 0.0
        %1232 = vmatpush1.msra.mxu0 %v894
        %1233 = vmatprep.subr.mxu0 0.0
        %1234 = vmatpush1.msra.mxu0 %v895
        %1235 = vmatprep.subr.mxu0 0.0
        %1236 = vmatpush1.msra.mxu0 %v896
        %1237 = vmatprep.subr.mxu0 0.0
        %1238 = vmatpush1.msra.mxu0 %v897
        %1239 = vmatprep.subr.mxu0 0.0
        %1240 = vmatpush1.msra.mxu0 %v898
        %1241 = vmatprep.subr.mxu0 0.0
        %1242 = vmatpush1.msra.mxu0 %v899
        %1243 = vmatprep.subr.mxu0 0.0
        %1244 = vmatpush1.msra.mxu0 %v900
        %1245 = vmatprep.subr.mxu0 0.0
        %1246 = vmatpush1.msra.mxu0 %v901
        %1247 = vmatprep.subr.mxu0 0.0
        %1248 = vmatpush1.msra.mxu0 %v902
        %1249 = vmatprep.subr.mxu0 0.0
        %1250 = vmatpush1.msra.mxu0 %v903
        %1251 = vmatprep.subr.mxu0 0.0
        %1252 = vmatpush1.msra.mxu0 %v904
        %1253 = vmatprep.subr.mxu0 0.0
        %1254 = vmatpush1.msra.mxu0 %v905
        %1255 = vmatprep.subr.mxu0 0.0
        %1256 = vmatpush1.msra.mxu0 %v906
        %1257 = vmatprep.subr.mxu0 0.0
        %1258 = vmatpush1.msra.mxu0 %v907
        %1259 = vmatprep.subr.mxu0 0.0
        %1260 = vmatpush1.msra.mxu0 %v908
        %1261 = vmatprep.subr.mxu0 0.0
        %1262 = vmatpush1.msra.mxu0 0.0
        %1263 = vmatprep.subr.mxu0 0.0
        %1264 = vmatpush1.msra.mxu0 0.0
        %1265 = vmatprep.subr.mxu0 0.0
        %1266 = vmatpush1.msra.mxu0 0.0
        %1267 = vmatprep.subr.mxu0 0.0
        %1268 = vmatpush1.msra.mxu0 0.0
        %1269 = vmatprep.subr.mxu0 0.0
        %1270 = vmatpush1.msra.mxu0 0.0
        %1271 = vmatprep.subr.mxu0 0.0
        %1272 = vmatpush1.msra.mxu0 0.0
        %1273 = vmatprep.subr.mxu0 0.0
        %1274 = vmatpush1.msra.mxu0 0.0
        %1275 = vmatprep.subr.mxu0 0.0
        %1276 = vmatpush1.msra.mxu0 0.0
        %1277 = vmatprep.subr.mxu0 0.0
        %1278 = vmatpush1.msra.mxu0 0.0
        %1279 = vmatprep.subr.mxu0 0.0
        %1280 = vmatpush1.msra.mxu0 0.0
        %1281 = vmatprep.subr.mxu0 0.0
        %1282 = vmatpush1.msra.mxu0 0.0
        %1283 = vmatprep.subr.mxu0 0.0
        %1284 = vmatpush1.msra.mxu0 0.0
        %1285 = vmatprep.subr.mxu0 0.0
        %1286 = vmatpush1.msra.mxu0 0.0
        %1287 = vmatprep.subr.mxu0 0.0
        %1288 = vmatpush1.msra.mxu0 0.0
        %1289 = vmatprep.subr.mxu0 0.0
        %1290 = vmatpush1.msra.mxu0 0.0
        %1291 = vmatprep.subr.mxu0 0.0
        %1292 = vmatpush1.msra.mxu0 0.0
        %1293 = vmatprep.mubr.f32.mxu0 0.0
        %1294 = vmatmul.mubr.f32.gmra.mrb[0].mxu0 %v1225
        %v1295 = vpop.f32.mrb[0].mxu0
        %v1296 = vadd.f32 0.0, %v1295
        %v1297 = vpop.f32.mrb[0].mxu0
        %1298 = vmatprep.mubr.f32.mxu0 0.0
        %1299 = vmatmul.mubr.f32.gmra.mrb[0].mxu0 %v1226
        %v1300 = vpop.f32.mrb[0].mxu0
        %v1301 = vadd.f32 0.0, %v1300
        %v1302 = vpop.f32.mrb[0].mxu0
        %1303 = vmatprep.mubr.f32.mxu0 0.0
        %1304 = vmatmul.mubr.f32.gmra.mrb[0].mxu0 %v1227
        %v1305 = vpop.f32.mrb[0].mxu0
        %v1306 = vadd.f32 0.0, %v1305
        %v1307 = vpop.f32.mrb[0].mxu0
        %1308 = vmatprep.mubr.f32.mxu0 0.0
        %1309 = vmatmul.mubr.f32.gmra.mrb[0].mxu0 %v1228
        %v1310 = vpop.f32.mrb[0].mxu0
        %v1311 = vadd.f32 0.0, %v1310
        %v1312 = vpop.f32.mrb[0].mxu0
        %1313 = vdwg.mxu0
        %v1314 = vmax.f32 %v981, %v1086
        %v1315 = vmax.f32 %v986, %v1091
        %v1316 = vmax.f32 %v991, %v1096
        %v1317 = vmax.f32 %v996, %v1101
        %v1318 = vmax.f32 %v1314, %v1191
        %v1319 = vmax.f32 %v1315, %v1196
        %v1320 = vmax.f32 %v1316, %v1201
        %v1321 = vmax.f32 %v1317, %v1206
        %v1322 = vmax.f32 %v1318, %v1296
        %v1323 = vmax.f32 %v1319, %v1301
        %v1324 = vmax.f32 %v1320, %v1306
        %v1325 = vmax.f32 %v1321, %v1311
        %v1326 = vsub.f32 %v981, %v1322
        %v1327 = vsub.f32 %v986, %v1323
        %v1328 = vsub.f32 %v991, %v1324
        %v1329 = vsub.f32 %v996, %v1325
        %v1330 = vmul.f32 %v1326, 1.442695
        %v1331 = vpow.pop %v1330
        %v1332 = vmul.f32 %v1327, 1.442695
        %v1333 = vpow.pop %v1332
        %v1334 = vmul.f32 %v1328, 1.442695
        %v1335 = vpow.pop %v1334
        %v1336 = vmul.f32 %v1329, 1.442695
        %v1337 = vpow.pop %v1336
        %v1338 = vsub.f32 %v1086, %v1322
        %v1339 = vsub.f32 %v1091, %v1323
        %v1340 = vsub.f32 %v1096, %v1324
        %v1341 = vsub.f32 %v1101, %v1325
        %v1342 = vmul.f32 %v1338, 1.442695
        %v1343 = vpow.pop %v1342
        %v1344 = vmul.f32 %v1339, 1.442695
        %v1345 = vpow.pop %v1344
        %v1346 = vmul.f32 %v1340, 1.442695
        %v1347 = vpow.pop %v1346
        %v1348 = vmul.f32 %v1341, 1.442695
        %v1349 = vpow.pop %v1348
        %v1350 = vsub.f32 %v1191, %v1322
        %v1351 = vsub.f32 %v1196, %v1323
        %v1352 = vsub.f32 %v1201, %v1324
        %v1353 = vsub.f32 %v1206, %v1325
        %v1354 = vmul.f32 %v1350, 1.442695
        %v1355 = vpow.pop %v1354
        %v1356 = vmul.f32 %v1351, 1.442695
        %v1357 = vpow.pop %v1356
        %v1358 = vmul.f32 %v1352, 1.442695
        %v1359 = vpow.pop %v1358
        %v1360 = vmul.f32 %v1353, 1.442695
        %v1361 = vpow.pop %v1360
        %v1362 = vsub.f32 %v1296, %v1322
        %v1363 = vsub.f32 %v1301, %v1323
        %v1364 = vsub.f32 %v1306, %v1324
        %v1365 = vsub.f32 %v1311, %v1325
        %v1366 = vmul.f32 %v1362, 1.442695
        %v1367 = vpow.pop %v1366
        %v1368 = vmul.f32 %v1363, 1.442695
        %v1369 = vpow.pop %v1368
        %v1370 = vmul.f32 %v1364, 1.442695
        %v1371 = vpow.pop %v1370
        %v1372 = vmul.f32 %v1365, 1.442695
        %v1373 = vpow.pop %v1372
        %v1374 = vadd.f32 %v1331, %v1343
        %v1375 = vadd.f32 %v1333, %v1345
        %v1376 = vadd.f32 %v1335, %v1347
        %v1377 = vadd.f32 %v1337, %v1349
        %v1378 = vadd.f32 %v1374, %v1355
        %v1379 = vadd.f32 %v1375, %v1357
        %v1380 = vadd.f32 %v1376, %v1359
        %v1381 = vadd.f32 %v1377, %v1361
        %v1382 = vadd.f32 %v1378, %v1367
        %v1383 = vadd.f32 %v1379, %v1369
        %v1384 = vadd.f32 %v1380, %v1371
        %v1385 = vadd.f32 %v1381, %v1373
        %v1386 = vrcp.pop %v1382
        %v1387 = vmul.f32 1.0, %v1386
        %v1388 = vrcp.pop %v1383
        %v1389 = vmul.f32 1.0, %v1388
        %v1390 = vrcp.pop %v1384
        %v1391 = vmul.f32 1.0, %v1390
        %v1392 = vrcp.pop %v1385
        %v1393 = vmul.f32 1.0, %v1392
        %v1394 = vmul.f32 %v1331, %v1387
        %v1395 = vmul.f32 %v1333, %v1389
        %v1396 = vmul.f32 %v1335, %v1391
        %v1397 = vmul.f32 %v1337, %v1393
        %vm1398 = vcmask 31744
        %v1400 = vsel %vm1398, %v1394, 0
        %v1403 = vsel %vm1398, %v1395, 0
        %v1406 = vsel %vm1398, %v1396, 0
        %v1409 = vsel %vm1398, %v1397, 0
        %vm1411 = vcmask 1043456
        %v1413 = vsel %vm1411, %v909, 0
        %1415 = vmatprep.subr.mxu0 0.0
        %1416 = vmatpush1.msra.mxu0 %v1413
        %1417 = vmatprep.subr.mxu0 0.0
        %1418 = vmatpush1.msra.mxu0 0.0
        %1419 = vmatprep.subr.mxu0 0.0
        %1420 = vmatpush1.msra.mxu0 0.0
        %1421 = vmatprep.subr.mxu0 0.0
        %1422 = vmatpush1.msra.mxu0 0.0
        %1423 = vmatprep.subr.mxu0 0.0
        %1424 = vmatpush1.msra.mxu0 0.0
        %1425 = vmatprep.subr.mxu0 0.0
        %1426 = vmatpush1.msra.mxu0 0.0
        %1427 = vmatprep.subr.mxu0 0.0
        %1428 = vmatpush1.msra.mxu0 0.0
        %1429 = vmatprep.subr.mxu0 0.0
        %1430 = vmatpush1.msra.mxu0 0.0
        %1431 = vmatprep.subr.mxu0 0.0
        %1432 = vmatpush1.msra.mxu0 0.0
        %1433 = vmatprep.subr.mxu0 0.0
        %1434 = vmatpush1.msra.mxu0 0.0
        %1435 = vmatprep.subr.mxu0 0.0
        %1436 = vmatpush1.msra.mxu0 0.0
        %1437 = vmatprep.subr.mxu0 0.0
        %1438 = vmatpush1.msra.mxu0 0.0
        %1439 = vmatprep.subr.mxu0 0.0
        %1440 = vmatpush1.msra.mxu0 0.0
        %1441 = vmatprep.subr.mxu0 0.0
        %1442 = vmatpush1.msra.mxu0 0.0
        %1443 = vmatprep.subr.mxu0 0.0
        %1444 = vmatpush1.msra.mxu0 0.0
        %1445 = vmatprep.subr.mxu0 0.0
        %1446 = vmatpush1.msra.mxu0 0.0
        %1447 = vmatprep.subr.mxu0 0.0
        %1448 = vmatpush1.msra.mxu0 0.0
        %1449 = vmatprep.subr.mxu0 0.0
        %1450 = vmatpush1.msra.mxu0 0.0
        %1451 = vmatprep.subr.mxu0 0.0
        %1452 = vmatpush1.msra.mxu0 0.0
        %1453 = vmatprep.subr.mxu0 0.0
        %1454 = vmatpush1.msra.mxu0 0.0
        %1455 = vmatprep.subr.mxu0 0.0
        %1456 = vmatpush1.msra.mxu0 0.0
        %1457 = vmatprep.subr.mxu0 0.0
        %1458 = vmatpush1.msra.mxu0 0.0
        %1459 = vmatprep.subr.mxu0 0.0
        %1460 = vmatpush1.msra.mxu0 0.0
        %1461 = vmatprep.subr.mxu0 0.0
        %1462 = vmatpush1.msra.mxu0 0.0
        %1463 = vmatprep.subr.mxu0 0.0
        %1464 = vmatpush1.msra.mxu0 0.0
        %1465 = vmatprep.subr.mxu0 0.0
        %1466 = vmatpush1.msra.mxu0 0.0
        %1467 = vmatprep.subr.mxu0 0.0
        %1468 = vmatpush1.msra.mxu0 0.0
        %1469 = vmatprep.subr.mxu0 0.0
        %1470 = vmatpush1.msra.mxu0 0.0
        %1471 = vmatprep.subr.mxu0 0.0
        %1472 = vmatpush1.msra.mxu0 0.0
        %1473 = vmatprep.subr.mxu0 0.0
        %1474 = vmatpush1.msra.mxu0 0.0
        %1475 = vmatprep.subr.mxu0 0.0
        %1476 = vmatpush1.msra.mxu0 0.0
        %1477 = vmatprep.subr.mxu0 0.0
        %1478 = vmatpush1.msra.mxu0 0.0
        %1479 = vmatprep.mubr.f32.mxu0 0.0
        %1480 = vmatmul.mubr.f32.gmra.mrb[0].mxu0 %v1400
        %v1481 = vpop.f32.mrb[0].mxu0
        %v1482 = vadd.f32 0.0, %v1481
        %v1483 = vpop.f32.mrb[0].mxu0
        %1484 = vmatprep.mubr.f32.mxu0 0.0
        %1485 = vmatmul.mubr.f32.gmra.mrb[0].mxu0 %v1403
        %v1486 = vpop.f32.mrb[0].mxu0
        %v1487 = vadd.f32 0.0, %v1486
        %v1488 = vpop.f32.mrb[0].mxu0
        %1489 = vmatprep.mubr.f32.mxu0 0.0
        %1490 = vmatmul.mubr.f32.gmra.mrb[0].mxu0 %v1406
        %v1491 = vpop.f32.mrb[0].mxu0
        %v1492 = vadd.f32 0.0, %v1491
        %v1493 = vpop.f32.mrb[0].mxu0
        %1494 = vmatprep.mubr.f32.mxu0 0.0
        %1495 = vmatmul.mubr.f32.gmra.mrb[0].mxu0 %v1409
        %v1496 = vpop.f32.mrb[0].mxu0
        %v1497 = vadd.f32 0.0, %v1496
        %v1498 = vpop.f32.mrb[0].mxu0
        %1499 = vdwg.mxu0
        %v1500 = vmul.f32 %v1482, %v879
        %v1501 = vmul.f32 %v1487, %v882
        %v1502 = vmul.f32 %v1492, %v887
        %v1503 = vmul.f32 %v1497, %v890
        %v1504 = vmul.f32 %v1343, %v1387
        %v1505 = vmul.f32 %v1345, %v1389
        %v1506 = vmul.f32 %v1347, %v1391
        %v1507 = vmul.f32 %v1349, %v1393
        %v1509 = vsel %vm1398, %v1504, 0
        %v1512 = vsel %vm1398, %v1505, 0
        %v1515 = vsel %vm1398, %v1506, 0
        %v1518 = vsel %vm1398, %v1507, 0
        %1520 = vmatprep.subr.mxu0 0.0
        %1521 = vmatpush1.msra.mxu0 %v1413
        %1522 = vmatprep.subr.mxu0 0.0
        %1523 = vmatpush1.msra.mxu0 0.0
        %1524 = vmatprep.subr.mxu0 0.0
        %1525 = vmatpush1.msra.mxu0 0.0
        %1526 = vmatprep.subr.mxu0 0.0
        %1527 = vmatpush1.msra.mxu0 0.0
        %1528 = vmatprep.subr.mxu0 0.0
        %1529 = vmatpush1.msra.mxu0 0.0
        %1530 = vmatprep.subr.mxu0 0.0
        %1531 = vmatpush1.msra.mxu0 0.0
        %1532 = vmatprep.subr.mxu0 0.0
        %1533 = vmatpush1.msra.mxu0 0.0
        %1534 = vmatprep.subr.mxu0 0.0
        %1535 = vmatpush1.msra.mxu0 0.0
        %1536 = vmatprep.subr.mxu0 0.0
        %1537 = vmatpush1.msra.mxu0 0.0
        %1538 = vmatprep.subr.mxu0 0.0
        %1539 = vmatpush1.msra.mxu0 0.0
        %1540 = vmatprep.subr.mxu0 0.0
        %1541 = vmatpush1.msra.mxu0 0.0
        %1542 = vmatprep.subr.mxu0 0.0
        %1543 = vmatpush1.msra.mxu0 0.0
        %1544 = vmatprep.subr.mxu0 0.0
        %1545 = vmatpush1.msra.mxu0 0.0
        %1546 = vmatprep.subr.mxu0 0.0
        %1547 = vmatpush1.msra.mxu0 0.0
        %1548 = vmatprep.subr.mxu0 0.0
        %1549 = vmatpush1.msra.mxu0 0.0
        %1550 = vmatprep.subr.mxu0 0.0
        %1551 = vmatpush1.msra.mxu0 0.0
        %1552 = vmatprep.subr.mxu0 0.0
        %1553 = vmatpush1.msra.mxu0 0.0
        %1554 = vmatprep.subr.mxu0 0.0
        %1555 = vmatpush1.msra.mxu0 0.0
        %1556 = vmatprep.subr.mxu0 0.0
        %1557 = vmatpush1.msra.mxu0 0.0
        %1558 = vmatprep.subr.mxu0 0.0
        %1559 = vmatpush1.msra.mxu0 0.0
        %1560 = vmatprep.subr.mxu0 0.0
        %1561 = vmatpush1.msra.mxu0 0.0
        %1562 = vmatprep.subr.mxu0 0.0
        %1563 = vmatpush1.msra.mxu0 0.0
        %1564 = vmatprep.subr.mxu0 0.0
        %1565 = vmatpush1.msra.mxu0 0.0
        %1566 = vmatprep.subr.mxu0 0.0
        %1567 = vmatpush1.msra.mxu0 0.0
        %1568 = vmatprep.subr.mxu0 0.0
        %1569 = vmatpush1.msra.mxu0 0.0
        %1570 = vmatprep.subr.mxu0 0.0
        %1571 = vmatpush1.msra.mxu0 0.0
        %1572 = vmatprep.subr.mxu0 0.0
        %1573 = vmatpush1.msra.mxu0 0.0
        %1574 = vmatprep.subr.mxu0 0.0
        %1575 = vmatpush1.msra.mxu0 0.0
        %1576 = vmatprep.subr.mxu0 0.0
        %1577 = vmatpush1.msra.mxu0 0.0
        %1578 = vmatprep.subr.mxu0 0.0
        %1579 = vmatpush1.msra.mxu0 0.0
        %1580 = vmatprep.subr.mxu0 0.0
        %1581 = vmatpush1.msra.mxu0 0.0
        %1582 = vmatprep.subr.mxu0 0.0
        %1583 = vmatpush1.msra.mxu0 0.0
        %1584 = vmatprep.mubr.f32.mxu0 0.0
        %1585 = vmatmul.mubr.f32.gmra.mrb[0].mxu0 %v1509
        %v1586 = vpop.f32.mrb[0].mxu0
        %v1587 = vadd.f32 0.0, %v1586
        %v1588 = vpop.f32.mrb[0].mxu0
        %1589 = vmatprep.mubr.f32.mxu0 0.0
        %1590 = vmatmul.mubr.f32.gmra.mrb[0].mxu0 %v1512
        %v1591 = vpop.f32.mrb[0].mxu0
        %v1592 = vadd.f32 0.0, %v1591
        %v1593 = vpop.f32.mrb[0].mxu0
        %1594 = vmatprep.mubr.f32.mxu0 0.0
        %1595 = vmatmul.mubr.f32.gmra.mrb[0].mxu0 %v1515
        %v1596 = vpop.f32.mrb[0].mxu0
        %v1597 = vadd.f32 0.0, %v1596
        %v1598 = vpop.f32.mrb[0].mxu0
        %1599 = vmatprep.mubr.f32.mxu0 0.0
        %1600 = vmatmul.mubr.f32.gmra.mrb[0].mxu0 %v1518
        %v1601 = vpop.f32.mrb[0].mxu0
        %v1602 = vadd.f32 0.0, %v1601
        %v1603 = vpop.f32.mrb[0].mxu0
        %1604 = vdwg.mxu0
        %v1605 = vmul.f32 %v1587, %v1008
        %v1606 = vmul.f32 %v1592, %v1010
        %v1607 = vmul.f32 %v1597, %v1012
        %v1608 = vmul.f32 %v1602, %v1014
        %v1609 = vadd.f32 %v1500, %v1605
        %v1610 = vadd.f32 %v1501, %v1606
        %v1611 = vadd.f32 %v1502, %v1607
        %v1612 = vadd.f32 %v1503, %v1608
        %v1613 = vmul.f32 %v1355, %v1387
        %v1614 = vmul.f32 %v1357, %v1389
        %v1615 = vmul.f32 %v1359, %v1391
        %v1616 = vmul.f32 %v1361, %v1393
        %v1618 = vsel %vm1398, %v1613, 0
        %v1621 = vsel %vm1398, %v1614, 0
        %v1624 = vsel %vm1398, %v1615, 0
        %v1627 = vsel %vm1398, %v1616, 0
        %1629 = vmatprep.subr.mxu0 0.0
        %1630 = vmatpush1.msra.mxu0 %v1413
        %1631 = vmatprep.subr.mxu0 0.0
        %1632 = vmatpush1.msra.mxu0 0.0
        %1633 = vmatprep.subr.mxu0 0.0
        %1634 = vmatpush1.msra.mxu0 0.0
        %1635 = vmatprep.subr.mxu0 0.0
        %1636 = vmatpush1.msra.mxu0 0.0
        %1637 = vmatprep.subr.mxu0 0.0
        %1638 = vmatpush1.msra.mxu0 0.0
        %1639 = vmatprep.subr.mxu0 0.0
        %1640 = vmatpush1.msra.mxu0 0.0
        %1641 = vmatprep.subr.mxu0 0.0
        %1642 = vmatpush1.msra.mxu0 0.0
        %1643 = vmatprep.subr.mxu0 0.0
        %1644 = vmatpush1.msra.mxu0 0.0
        %1645 = vmatprep.subr.mxu0 0.0
        %1646 = vmatpush1.msra.mxu0 0.0
        %1647 = vmatprep.subr.mxu0 0.0
        %1648 = vmatpush1.msra.mxu0 0.0
        %1649 = vmatprep.subr.mxu0 0.0
        %1650 = vmatpush1.msra.mxu0 0.0
        %1651 = vmatprep.subr.mxu0 0.0
        %1652 = vmatpush1.msra.mxu0 0.0
        %1653 = vmatprep.subr.mxu0 0.0
        %1654 = vmatpush1.msra.mxu0 0.0
        %1655 = vmatprep.subr.mxu0 0.0
        %1656 = vmatpush1.msra.mxu0 0.0
        %1657 = vmatprep.subr.mxu0 0.0
        %1658 = vmatpush1.msra.mxu0 0.0
        %1659 = vmatprep.subr.mxu0 0.0
        %1660 = vmatpush1.msra.mxu0 0.0
        %1661 = vmatprep.subr.mxu0 0.0
        %1662 = vmatpush1.msra.mxu0 0.0
        %1663 = vmatprep.subr.mxu0 0.0
        %1664 = vmatpush1.msra.mxu0 0.0
        %1665 = vmatprep.subr.mxu0 0.0
        %1666 = vmatpush1.msra.mxu0 0.0
        %1667 = vmatprep.subr.mxu0 0.0
        %1668 = vmatpush1.msra.mxu0 0.0
        %1669 = vmatprep.subr.mxu0 0.0
        %1670 = vmatpush1.msra.mxu0 0.0
        %1671 = vmatprep.subr.mxu0 0.0
        %1672 = vmatpush1.msra.mxu0 0.0
        %1673 = vmatprep.subr.mxu0 0.0
        %1674 = vmatpush1.msra.mxu0 0.0
        %1675 = vmatprep.subr.mxu0 0.0
        %1676 = vmatpush1.msra.mxu0 0.0
        %1677 = vmatprep.subr.mxu0 0.0
        %1678 = vmatpush1.msra.mxu0 0.0
        %1679 = vmatprep.subr.mxu0 0.0
        %1680 = vmatpush1.msra.mxu0 0.0
        %1681 = vmatprep.subr.mxu0 0.0
        %1682 = vmatpush1.msra.mxu0 0.0
        %1683 = vmatprep.subr.mxu0 0.0
        %1684 = vmatpush1.msra.mxu0 0.0
        %1685 = vmatprep.subr.mxu0 0.0
        %1686 = vmatpush1.msra.mxu0 0.0
        %1687 = vmatprep.subr.mxu0 0.0
        %1688 = vmatpush1.msra.mxu0 0.0
        %1689 = vmatprep.subr.mxu0 0.0
        %1690 = vmatpush1.msra.mxu0 0.0
        %1691 = vmatprep.subr.mxu0 0.0
        %1692 = vmatpush1.msra.mxu0 0.0
        %1693 = vmatprep.mubr.f32.mxu0 0.0
        %1694 = vmatmul.mubr.f32.gmra.mrb[0].mxu0 %v1618
        %v1695 = vpop.f32.mrb[0].mxu0
        %v1696 = vadd.f32 0.0, %v1695
        %v1697 = vpop.f32.mrb[0].mxu0
        %1698 = vmatprep.mubr.f32.mxu0 0.0
        %1699 = vmatmul.mubr.f32.gmra.mrb[0].mxu0 %v1621
        %v1700 = vpop.f32.mrb[0].mxu0
        %v1701 = vadd.f32 0.0, %v1700
        %v1702 = vpop.f32.mrb[0].mxu0
        %1703 = vmatprep.mubr.f32.mxu0 0.0
        %1704 = vmatmul.mubr.f32.gmra.mrb[0].mxu0 %v1624
        %v1705 = vpop.f32.mrb[0].mxu0
        %v1706 = vadd.f32 0.0, %v1705
        %v1707 = vpop.f32.mrb[0].mxu0
        %1708 = vmatprep.mubr.f32.mxu0 0.0
        %1709 = vmatmul.mubr.f32.gmra.mrb[0].mxu0 %v1627
        %v1710 = vpop.f32.mrb[0].mxu0
        %v1711 = vadd.f32 0.0, %v1710
        %v1712 = vpop.f32.mrb[0].mxu0
        %1713 = vdwg.mxu0
        %v1714 = vmul.f32 %v1696, %v1113
        %v1715 = vmul.f32 %v1701, %v1115
        %v1716 = vmul.f32 %v1706, %v1117
        %v1717 = vmul.f32 %v1711, %v1119
        %v1718 = vadd.f32 %v1609, %v1714
        %v1719 = vadd.f32 %v1610, %v1715
        %v1720 = vadd.f32 %v1611, %v1716
        %v1721 = vadd.f32 %v1612, %v1717
        %v1722 = vmul.f32 %v1367, %v1387
        %v1723 = vmul.f32 %v1369, %v1389
        %v1724 = vmul.f32 %v1371, %v1391
        %v1725 = vmul.f32 %v1373, %v1393
        %v1727 = vsel %vm1398, %v1722, 0
        %v1730 = vsel %vm1398, %v1723, 0
        %v1733 = vsel %vm1398, %v1724, 0
        %v1736 = vsel %vm1398, %v1725, 0
        %1738 = vmatprep.subr.mxu0 0.0
        %1739 = vmatpush1.msra.mxu0 %v1413
        %1740 = vmatprep.subr.mxu0 0.0
        %1741 = vmatpush1.msra.mxu0 0.0
        %1742 = vmatprep.subr.mxu0 0.0
        %1743 = vmatpush1.msra.mxu0 0.0
        %1744 = vmatprep.subr.mxu0 0.0
        %1745 = vmatpush1.msra.mxu0 0.0
        %1746 = vmatprep.subr.mxu0 0.0
        %1747 = vmatpush1.msra.mxu0 0.0
        %1748 = vmatprep.subr.mxu0 0.0
        %1749 = vmatpush1.msra.mxu0 0.0
        %1750 = vmatprep.subr.mxu0 0.0
        %1751 = vmatpush1.msra.mxu0 0.0
        %1752 = vmatprep.subr.mxu0 0.0
        %1753 = vmatpush1.msra.mxu0 0.0
        %1754 = vmatprep.subr.mxu0 0.0
        %1755 = vmatpush1.msra.mxu0 0.0
        %1756 = vmatprep.subr.mxu0 0.0
        %1757 = vmatpush1.msra.mxu0 0.0
        %1758 = vmatprep.subr.mxu0 0.0
        %1759 = vmatpush1.msra.mxu0 0.0
        %1760 = vmatprep.subr.mxu0 0.0
        %1761 = vmatpush1.msra.mxu0 0.0
        %1762 = vmatprep.subr.mxu0 0.0
        %1763 = vmatpush1.msra.mxu0 0.0
        %1764 = vmatprep.subr.mxu0 0.0
        %1765 = vmatpush1.msra.mxu0 0.0
        %1766 = vmatprep.subr.mxu0 0.0
        %1767 = vmatpush1.msra.mxu0 0.0
        %1768 = vmatprep.subr.mxu0 0.0
        %1769 = vmatpush1.msra.mxu0 0.0
        %1770 = vmatprep.subr.mxu0 0.0
        %1771 = vmatpush1.msra.mxu0 0.0
        %1772 = vmatprep.subr.mxu0 0.0
        %1773 = vmatpush1.msra.mxu0 0.0
        %1774 = vmatprep.subr.mxu0 0.0
        %1775 = vmatpush1.msra.mxu0 0.0
        %1776 = vmatprep.subr.mxu0 0.0
        %1777 = vmatpush1.msra.mxu0 0.0
        %1778 = vmatprep.subr.mxu0 0.0
        %1779 = vmatpush1.msra.mxu0 0.0
        %1780 = vmatprep.subr.mxu0 0.0
        %1781 = vmatpush1.msra.mxu0 0.0
        %1782 = vmatprep.subr.mxu0 0.0
        %1783 = vmatpush1.msra.mxu0 0.0
        %1784 = vmatprep.subr.mxu0 0.0
        %1785 = vmatpush1.msra.mxu0 0.0
        %1786 = vmatprep.subr.mxu0 0.0
        %1787 = vmatpush1.msra.mxu0 0.0
        %1788 = vmatprep.subr.mxu0 0.0
        %1789 = vmatpush1.msra.mxu0 0.0
        %1790 = vmatprep.subr.mxu0 0.0
        %1791 = vmatpush1.msra.mxu0 0.0
        %1792 = vmatprep.subr.mxu0 0.0
        %1793 = vmatpush1.msra.mxu0 0.0
        %1794 = vmatprep.subr.mxu0 0.0
        %1795 = vmatpush1.msra.mxu0 0.0
        %1796 = vmatprep.subr.mxu0 0.0
        %1797 = vmatpush1.msra.mxu0 0.0
        %1798 = vmatprep.subr.mxu0 0.0
        %1799 = vmatpush1.msra.mxu0 0.0
        %1800 = vmatprep.subr.mxu0 0.0
        %1801 = vmatpush1.msra.mxu0 0.0
        %1802 = vmatprep.mubr.f32.mxu0 0.0
        %1803 = vmatmul.mubr.f32.gmra.mrb[0].mxu0 %v1727
        %v1804 = vpop.f32.mrb[0].mxu0
        %v1805 = vadd.f32 0.0, %v1804
        %v1806 = vpop.f32.mrb[0].mxu0
        %1807 = vmatprep.mubr.f32.mxu0 0.0
        %1808 = vmatmul.mubr.f32.gmra.mrb[0].mxu0 %v1730
        %v1809 = vpop.f32.mrb[0].mxu0
        %v1810 = vadd.f32 0.0, %v1809
        %v1811 = vpop.f32.mrb[0].mxu0
        %1812 = vmatprep.mubr.f32.mxu0 0.0
        %1813 = vmatmul.mubr.f32.gmra.mrb[0].mxu0 %v1733
        %v1814 = vpop.f32.mrb[0].mxu0
        %v1815 = vadd.f32 0.0, %v1814
        %v1816 = vpop.f32.mrb[0].mxu0
        %1817 = vmatprep.mubr.f32.mxu0 0.0
        %1818 = vmatmul.mubr.f32.gmra.mrb[0].mxu0 %v1736
        %v1819 = vpop.f32.mrb[0].mxu0
        %v1820 = vadd.f32 0.0, %v1819
        %v1821 = vpop.f32.mrb[0].mxu0
        %1822 = vdwg.mxu0
        %v1823 = vmul.f32 %v1805, %v1218
        %v1824 = vmul.f32 %v1810, %v1220
        %v1825 = vmul.f32 %v1815, %v1222
        %v1826 = vmul.f32 %v1820, %v1224
        %v1827 = vadd.f32 %v1718, %v1823
        %v1828 = vadd.f32 %v1719, %v1824
        %v1829 = vadd.f32 %v1720, %v1825
        %v1830 = vadd.f32 %v1721, %v1826
        %v1831 = vld [vmem:[%s6] sm:$0xff]
        %vm1832 = vcmask 261120
        %v1834 = vsel %vm1832, %v1831, 0
        %1836 = vmatprep.subr.mxu0 0.0
        %1837 = vmatpush1.msra.mxu0 %v1827
        %1838 = vmatprep.subr.mxu0 0.0
        %1839 = vmatpush1.msra.mxu0 %v1828
        %1840 = vmatprep.subr.mxu0 0.0
        %1841 = vmatpush1.msra.mxu0 %v1829
        %1842 = vmatprep.subr.mxu0 0.0
        %1843 = vmatpush1.msra.mxu0 %v1830
        %1844 = vmatprep.subr.mxu0 0.0
        %1845 = vmatpush1.msra.mxu0 0.0
        %1846 = vmatprep.subr.mxu0 0.0
        %1847 = vmatpush1.msra.mxu0 0.0
        %1848 = vmatprep.subr.mxu0 0.0
        %1849 = vmatpush1.msra.mxu0 0.0
        %1850 = vmatprep.subr.mxu0 0.0
        %1851 = vmatpush1.msra.mxu0 0.0
        %1852 = vmatprep.subr.mxu0 0.0
        %1853 = vmatpush1.msra.mxu0 0.0
        %1854 = vmatprep.subr.mxu0 0.0
        %1855 = vmatpush1.msra.mxu0 0.0
        %1856 = vmatprep.subr.mxu0 0.0
        %1857 = vmatpush1.msra.mxu0 0.0
        %1858 = vmatprep.subr.mxu0 0.0
        %1859 = vmatpush1.msra.mxu0 0.0
        %1860 = vmatprep.subr.mxu0 0.0
        %1861 = vmatpush1.msra.mxu0 0.0
        %1862 = vmatprep.subr.mxu0 0.0
        %1863 = vmatpush1.msra.mxu0 0.0
        %1864 = vmatprep.subr.mxu0 0.0
        %1865 = vmatpush1.msra.mxu0 0.0
        %1866 = vmatprep.subr.mxu0 0.0
        %1867 = vmatpush1.msra.mxu0 0.0
        %1868 = vmatprep.subr.mxu0 0.0
        %1869 = vmatpush1.msra.mxu0 0.0
        %1870 = vmatprep.subr.mxu0 0.0
        %1871 = vmatpush1.msra.mxu0 0.0
        %1872 = vmatprep.subr.mxu0 0.0
        %1873 = vmatpush1.msra.mxu0 0.0
        %1874 = vmatprep.subr.mxu0 0.0
        %1875 = vmatpush1.msra.mxu0 0.0
        %1876 = vmatprep.subr.mxu0 0.0
        %1877 = vmatpush1.msra.mxu0 0.0
        %1878 = vmatprep.subr.mxu0 0.0
        %1879 = vmatpush1.msra.mxu0 0.0
        %1880 = vmatprep.subr.mxu0 0.0
        %1881 = vmatpush1.msra.mxu0 0.0
        %1882 = vmatprep.subr.mxu0 0.0
        %1883 = vmatpush1.msra.mxu0 0.0
        %1884 = vmatprep.subr.mxu0 0.0
        %1885 = vmatpush1.msra.mxu0 0.0
        %1886 = vmatprep.subr.mxu0 0.0
        %1887 = vmatpush1.msra.mxu0 0.0
        %1888 = vmatprep.subr.mxu0 0.0
        %1889 = vmatpush1.msra.mxu0 0.0
        %1890 = vmatprep.subr.mxu0 0.0
        %1891 = vmatpush1.msra.mxu0 0.0
        %1892 = vmatprep.subr.mxu0 0.0
        %1893 = vmatpush1.msra.mxu0 0.0
        %1894 = vmatprep.subr.mxu0 0.0
        %1895 = vmatpush1.msra.mxu0 0.0
        %1896 = vmatprep.subr.mxu0 0.0
        %1897 = vmatpush1.msra.mxu0 0.0
        %1898 = vmatprep.subr.mxu0 0.0
        %1899 = vmatpush1.msra.mxu0 0.0
        %1900 = vmatprep.mubr.f32.mxu0 0.0
        %1901 = vmatmul.mubr.f32.gmra.mrb[0].mxu0 %v1834
        %v1902 = vpop.f32.mrb[0].mxu0
        %v1903 = vadd.f32 0.0, %v1902
        %v1904 = vpop.f32.mrb[0].mxu0
        %1905 = vdwg.mxu0
        %1906 = vst.msk [vmem:[#allocation2] sm:$0xff] %vm1832, %v1903
        %1908 = vrot.lane.b32.xlu0 %v1903, 96
        %v1909 = vpop.permute.xlu0 %1908
        %1911 = vst.msk [vmem:[#allocation2 + $0x8] sm:$0xff] %vm1832, %v1909
        %1912 = vrot.lane.b32.xlu0 %v1903, 64
        %v1913 = vpop.permute.xlu0 %1912
        %1915 = vst.msk [vmem:[#allocation2 + $0x10] sm:$0xff] %vm1832, %v1913
        %1916 = vrot.lane.b32.xlu0 %v1903, 32
        %v1917 = vpop.permute.xlu0 %1916
        %1919 = vst.msk [vmem:[#allocation2 + $0x18] sm:$0xff] %vm1832, %v1917
        %s1920 = scalar_lea.vmem %s6, 8
        %v1921 = vld [vmem:[%s1920] sm:$0xff]
        %v1923 = vsel %vm1832, %v1921, 0
        %1925 = vmatprep.subr.mxu0 0.0
        %1926 = vmatpush1.msra.mxu0 %v1827
        %1927 = vmatprep.subr.mxu0 0.0
        %1928 = vmatpush1.msra.mxu0 %v1828
        %1929 = vmatprep.subr.mxu0 0.0
        %1930 = vmatpush1.msra.mxu0 %v1829
        %1931 = vmatprep.subr.mxu0 0.0
        %1932 = vmatpush1.msra.mxu0 %v1830
        %1933 = vmatprep.subr.mxu0 0.0
        %1934 = vmatpush1.msra.mxu0 0.0
        %1935 = vmatprep.subr.mxu0 0.0
        %1936 = vmatpush1.msra.mxu0 0.0
        %1937 = vmatprep.subr.mxu0 0.0
        %1938 = vmatpush1.msra.mxu0 0.0
        %1939 = vmatprep.subr.mxu0 0.0
        %1940 = vmatpush1.msra.mxu0 0.0
        %1941 = vmatprep.subr.mxu0 0.0
        %1942 = vmatpush1.msra.mxu0 0.0
        %1943 = vmatprep.subr.mxu0 0.0
        %1944 = vmatpush1.msra.mxu0 0.0
        %1945 = vmatprep.subr.mxu0 0.0
        %1946 = vmatpush1.msra.mxu0 0.0
        %1947 = vmatprep.subr.mxu0 0.0
        %1948 = vmatpush1.msra.mxu0 0.0
        %1949 = vmatprep.subr.mxu0 0.0
        %1950 = vmatpush1.msra.mxu0 0.0
        %1951 = vmatprep.subr.mxu0 0.0
        %1952 = vmatpush1.msra.mxu0 0.0
        %1953 = vmatprep.subr.mxu0 0.0
        %1954 = vmatpush1.msra.mxu0 0.0
        %1955 = vmatprep.subr.mxu0 0.0
        %1956 = vmatpush1.msra.mxu0 0.0
        %1957 = vmatprep.subr.mxu0 0.0
        %1958 = vmatpush1.msra.mxu0 0.0
        %1959 = vmatprep.subr.mxu0 0.0
        %1960 = vmatpush1.msra.mxu0 0.0
        %1961 = vmatprep.subr.mxu0 0.0
        %1962 = vmatpush1.msra.mxu0 0.0
        %1963 = vmatprep.subr.mxu0 0.0
        %1964 = vmatpush1.msra.mxu0 0.0
        %1965 = vmatprep.subr.mxu0 0.0
        %1966 = vmatpush1.msra.mxu0 0.0
        %1967 = vmatprep.subr.mxu0 0.0
        %1968 = vmatpush1.msra.mxu0 0.0
        %1969 = vmatprep.subr.mxu0 0.0
        %1970 = vmatpush1.msra.mxu0 0.0
        %1971 = vmatprep.subr.mxu0 0.0
        %1972 = vmatpush1.msra.mxu0 0.0
        %1973 = vmatprep.subr.mxu0 0.0
        %1974 = vmatpush1.msra.mxu0 0.0
        %1975 = vmatprep.subr.mxu0 0.0
        %1976 = vmatpush1.msra.mxu0 0.0
        %1977 = vmatprep.subr.mxu0 0.0
        %1978 = vmatpush1.msra.mxu0 0.0
        %1979 = vmatprep.subr.mxu0 0.0
        %1980 = vmatpush1.msra.mxu0 0.0
        %1981 = vmatprep.subr.mxu0 0.0
        %1982 = vmatpush1.msra.mxu0 0.0
        %1983 = vmatprep.subr.mxu0 0.0
        %1984 = vmatpush1.msra.mxu0 0.0
        %1985 = vmatprep.subr.mxu0 0.0
        %1986 = vmatpush1.msra.mxu0 0.0
        %1987 = vmatprep.subr.mxu0 0.0
        %1988 = vmatpush1.msra.mxu0 0.0
        %1989 = vmatprep.mubr.f32.mxu0 0.0
        %1990 = vmatmul.mubr.f32.gmra.mrb[0].mxu0 %v1923
        %v1991 = vpop.f32.mrb[0].mxu0
        %v1992 = vadd.f32 0.0, %v1991
        %v1993 = vpop.f32.mrb[0].mxu0
        %1994 = vdwg.mxu0
        %1996 = vrot.lane.b32.xlu0 %v1992, 32
        %v1997 = vpop.permute.xlu0 %1996
        %vm1999 = vcmask 523520
        %2000 = vst.msk [vmem:[#allocation2] sm:$0xff] %vm1999, %v1997
        %2001 = vst.msk [vmem:[#allocation2 + $0x8] sm:$0xff] %vm1999, %v1992
        %2002 = vrot.lane.b32.xlu0 %v1992, 96
        %v2003 = vpop.permute.xlu0 %2002
        %2005 = vst.msk [vmem:[#allocation2 + $0x10] sm:$0xff] %vm1999, %v2003
        %2006 = vrot.lane.b32.xlu0 %v1992, 64
        %v2007 = vpop.permute.xlu0 %2006
        %2009 = vst.msk [vmem:[#allocation2 + $0x18] sm:$0xff] %vm1999, %v2007
        %s2010 = scalar_lea.vmem %s6, 16
        %v2011 = vld [vmem:[%s2010] sm:$0xff]
        %v2013 = vsel %vm1832, %v2011, 0
        %2015 = vmatprep.subr.mxu0 0.0
        %2016 = vmatpush1.msra.mxu0 %v1827
        %2017 = vmatprep.subr.mxu0 0.0
        %2018 = vmatpush1.msra.mxu0 %v1828
        %2019 = vmatprep.subr.mxu0 0.0
        %2020 = vmatpush1.msra.mxu0 %v1829
        %2021 = vmatprep.subr.mxu0 0.0
        %2022 = vmatpush1.msra.mxu0 %v1830
        %2023 = vmatprep.subr.mxu0 0.0
        %2024 = vmatpush1.msra.mxu0 0.0
        %2025 = vmatprep.subr.mxu0 0.0
        %2026 = vmatpush1.msra.mxu0 0.0
        %2027 = vmatprep.subr.mxu0 0.0
        %2028 = vmatpush1.msra.mxu0 0.0
        %2029 = vmatprep.subr.mxu0 0.0
        %2030 = vmatpush1.msra.mxu0 0.0
        %2031 = vmatprep.subr.mxu0 0.0
        %2032 = vmatpush1.msra.mxu0 0.0
        %2033 = vmatprep.subr.mxu0 0.0
        %2034 = vmatpush1.msra.mxu0 0.0
        %2035 = vmatprep.subr.mxu0 0.0
        %2036 = vmatpush1.msra.mxu0 0.0
        %2037 = vmatprep.subr.mxu0 0.0
        %2038 = vmatpush1.msra.mxu0 0.0
        %2039 = vmatprep.subr.mxu0 0.0
        %2040 = vmatpush1.msra.mxu0 0.0
        %2041 = vmatprep.subr.mxu0 0.0
        %2042 = vmatpush1.msra.mxu0 0.0
        %2043 = vmatprep.subr.mxu0 0.0
        %2044 = vmatpush1.msra.mxu0 0.0
        %2045 = vmatprep.subr.mxu0 0.0
        %2046 = vmatpush1.msra.mxu0 0.0
        %2047 = vmatprep.subr.mxu0 0.0
        %2048 = vmatpush1.msra.mxu0 0.0
        %2049 = vmatprep.subr.mxu0 0.0
        %2050 = vmatpush1.msra.mxu0 0.0
        %2051 = vmatprep.subr.mxu0 0.0
        %2052 = vmatpush1.msra.mxu0 0.0
        %2053 = vmatprep.subr.mxu0 0.0
        %2054 = vmatpush1.msra.mxu0 0.0
        %2055 = vmatprep.subr.mxu0 0.0
        %2056 = vmatpush1.msra.mxu0 0.0
        %2057 = vmatprep.subr.mxu0 0.0
        %2058 = vmatpush1.msra.mxu0 0.0
        %2059 = vmatprep.subr.mxu0 0.0
        %2060 = vmatpush1.msra.mxu0 0.0
        %2061 = vmatprep.subr.mxu0 0.0
        %2062 = vmatpush1.msra.mxu0 0.0
        %2063 = vmatprep.subr.mxu0 0.0
        %2064 = vmatpush1.msra.mxu0 0.0
        %2065 = vmatprep.subr.mxu0 0.0
        %2066 = vmatpush1.msra.mxu0 0.0
        %2067 = vmatprep.subr.mxu0 0.0
        %2068 = vmatpush1.msra.mxu0 0.0
        %2069 = vmatprep.subr.mxu0 0.0
        %2070 = vmatpush1.msra.mxu0 0.0
        %2071 = vmatprep.subr.mxu0 0.0
        %2072 = vmatpush1.msra.mxu0 0.0
        %2073 = vmatprep.subr.mxu0 0.0
        %2074 = vmatpush1.msra.mxu0 0.0
        %2075 = vmatprep.subr.mxu0 0.0
        %2076 = vmatpush1.msra.mxu0 0.0
        %2077 = vmatprep.subr.mxu0 0.0
        %2078 = vmatpush1.msra.mxu0 0.0
        %2079 = vmatprep.mubr.f32.mxu0 0.0
        %2080 = vmatmul.mubr.f32.gmra.mrb[0].mxu0 %v2013
        %v2081 = vpop.f32.mrb[0].mxu0
        %v2082 = vadd.f32 0.0, %v2081
        %v2083 = vpop.f32.mrb[0].mxu0
        %2084 = vdwg.mxu0
        %2086 = vrot.lane.b32.xlu0 %v2082, 64
        %v2087 = vpop.permute.xlu0 %2086
        %vm2089 = vcmask 785920
        %2090 = vst.msk [vmem:[#allocation2] sm:$0xff] %vm2089, %v2087
        %2091 = vrot.lane.b32.xlu0 %v2082, 32
        %v2092 = vpop.permute.xlu0 %2091
        %2094 = vst.msk [vmem:[#allocation2 + $0x8] sm:$0xff] %vm2089, %v2092
        %2095 = vst.msk [vmem:[#allocation2 + $0x10] sm:$0xff] %vm2089, %v2082
        %2096 = vrot.lane.b32.xlu0 %v2082, 96
        %v2097 = vpop.permute.xlu0 %2096
        %2099 = vst.msk [vmem:[#allocation2 + $0x18] sm:$0xff] %vm2089, %v2097
        %s2100 = scalar_lea.vmem %s6, 24
        %v2101 = vld [vmem:[%s2100] sm:$0xff]
        %v2103 = vsel %vm1832, %v2101, 0
        %2105 = vmatprep.subr.mxu0 0.0
        %2106 = vmatpush1.msra.mxu0 %v1827
        %2107 = vmatprep.subr.mxu0 0.0
        %2108 = vmatpush1.msra.mxu0 %v1828
        %2109 = vmatprep.subr.mxu0 0.0
        %2110 = vmatpush1.msra.mxu0 %v1829
        %2111 = vmatprep.subr.mxu0 0.0
        %2112 = vmatpush1.msra.mxu0 %v1830
        %2113 = vmatprep.subr.mxu0 0.0
        %2114 = vmatpush1.msra.mxu0 0.0
        %2115 = vmatprep.subr.mxu0 0.0
        %2116 = vmatpush1.msra.mxu0 0.0
        %2117 = vmatprep.subr.mxu0 0.0
        %2118 = vmatpush1.msra.mxu0 0.0
        %2119 = vmatprep.subr.mxu0 0.0
        %2120 = vmatpush1.msra.mxu0 0.0
        %2121 = vmatprep.subr.mxu0 0.0
        %2122 = vmatpush1.msra.mxu0 0.0
        %2123 = vmatprep.subr.mxu0 0.0
        %2124 = vmatpush1.msra.mxu0 0.0
        %2125 = vmatprep.subr.mxu0 0.0
        %2126 = vmatpush1.msra.mxu0 0.0
        %2127 = vmatprep.subr.mxu0 0.0
        %2128 = vmatpush1.msra.mxu0 0.0
        %2129 = vmatprep.subr.mxu0 0.0
        %2130 = vmatpush1.msra.mxu0 0.0
        %2131 = vmatprep.subr.mxu0 0.0
        %2132 = vmatpush1.msra.mxu0 0.0
        %2133 = vmatprep.subr.mxu0 0.0
        %2134 = vmatpush1.msra.mxu0 0.0
        %2135 = vmatprep.subr.mxu0 0.0
        %2136 = vmatpush1.msra.mxu0 0.0
        %2137 = vmatprep.subr.mxu0 0.0
        %2138 = vmatpush1.msra.mxu0 0.0
        %2139 = vmatprep.subr.mxu0 0.0
        %2140 = vmatpush1.msra.mxu0 0.0
        %2141 = vmatprep.subr.mxu0 0.0
        %2142 = vmatpush1.msra.mxu0 0.0
        %2143 = vmatprep.subr.mxu0 0.0
        %2144 = vmatpush1.msra.mxu0 0.0
        %2145 = vmatprep.subr.mxu0 0.0
        %2146 = vmatpush1.msra.mxu0 0.0
        %2147 = vmatprep.subr.mxu0 0.0
        %2148 = vmatpush1.msra.mxu0 0.0
        %2149 = vmatprep.subr.mxu0 0.0
        %2150 = vmatpush1.msra.mxu0 0.0
        %2151 = vmatprep.subr.mxu0 0.0
        %2152 = vmatpush1.msra.mxu0 0.0
        %2153 = vmatprep.subr.mxu0 0.0
        %2154 = vmatpush1.msra.mxu0 0.0
        %2155 = vmatprep.subr.mxu0 0.0
        %2156 = vmatpush1.msra.mxu0 0.0
        %2157 = vmatprep.subr.mxu0 0.0
        %2158 = vmatpush1.msra.mxu0 0.0
        %2159 = vmatprep.subr.mxu0 0.0
        %2160 = vmatpush1.msra.mxu0 0.0
        %2161 = vmatprep.subr.mxu0 0.0
        %2162 = vmatpush1.msra.mxu0 0.0
        %2163 = vmatprep.subr.mxu0 0.0
        %2164 = vmatpush1.msra.mxu0 0.0
        %2165 = vmatprep.subr.mxu0 0.0
        %2166 = vmatpush1.msra.mxu0 0.0
        %2167 = vmatprep.subr.mxu0 0.0
        %2168 = vmatpush1.msra.mxu0 0.0
        %2169 = vmatprep.mubr.f32.mxu0 0.0
        %2170 = vmatmul.mubr.f32.gmra.mrb[0].mxu0 %v2103
        %v2171 = vpop.f32.mrb[0].mxu0
        %v2172 = vadd.f32 0.0, %v2171
        %v2173 = vpop.f32.mrb[0].mxu0
        %2174 = vdwg.mxu0
        %2176 = vrot.lane.b32.xlu0 %v2172, 96
        %v2177 = vpop.permute.xlu0 %2176
        %vm2179 = vcmask 1048320
        %2180 = vst.msk [vmem:[#allocation2] sm:$0xff] %vm2179, %v2177
        %2181 = vrot.lane.b32.xlu0 %v2172, 64
        %v2182 = vpop.permute.xlu0 %2181
        %2184 = vst.msk [vmem:[#allocation2 + $0x8] sm:$0xff] %vm2179, %v2182
        %2185 = vrot.lane.b32.xlu0 %v2172, 32
        %v2186 = vpop.permute.xlu0 %2185
        %2188 = vst.msk [vmem:[#allocation2 + $0x10] sm:$0xff] %vm2179, %v2186
        %2189 = vst.msk [vmem:[#allocation2 + $0x18] sm:$0xff] %vm2179, %v2172
        %v2190 = vld [vmem:[#allocation2] sm:$0xff]
        %v2191 = vld [vmem:[#allocation2 + $0x8] sm:$0xff]
        %v2192 = vld [vmem:[#allocation2 + $0x10] sm:$0xff]
        %v2193 = vld [vmem:[#allocation2 + $0x18] sm:$0xff]
        %v2194 = vpack.c.bf16 %v2191, %v2190
        %v2195 = vpack.c.bf16 %v2193, %v2192
        %v2196 = vld [vmem:[#allocation8] sm:$0xf]
        %v2197 = vld [vmem:[#allocation8 + $0x4] sm:$0xf]
        %v2198 = vld [vmem:[#allocation8 + $0x8] sm:$0xf]
        %v2199 = vld [vmem:[#allocation8 + $0xc] sm:$0xf]
        %v2200 = vld [vmem:[#allocation8 + $0x10] sm:$0xf]
        %v2201 = vld [vmem:[#allocation8 + $0x14] sm:$0xf]
        %v2202 = vld [vmem:[#allocation8 + $0x18] sm:$0xf]
        %v2203 = vld [vmem:[#allocation8 + $0x1c] sm:$0xf]
        %v2204 = vld [vmem:[#allocation8 + $0x20] sm:$0xf]
        %v2205 = vld [vmem:[#allocation8 + $0x24] sm:$0xf]
        %v2206 = vld [vmem:[#allocation8 + $0x28] sm:$0xf]
        %v2207 = vld [vmem:[#allocation8 + $0x2c] sm:$0xf]
        %v2208 = vld [vmem:[#allocation8 + $0x30] sm:$0xf]
        %v2209 = vld [vmem:[#allocation8 + $0x34] sm:$0xf]
        %v2210 = vld [vmem:[#allocation8 + $0x38] sm:$0xf]
        %v2211 = vld [vmem:[#allocation8 + $0x3c] sm:$0xf]
        %v2228 = vunpack.c.l.b16 %v2196
        %v2229 = vunpack.c.l.b16 %v2197
        %v2230 = vunpack.c.l.b16 %v2198
        %v2231 = vunpack.c.l.b16 %v2199
        %v2232 = vunpack.c.l.b16 %v2200
        %v2233 = vunpack.c.l.b16 %v2201
        %v2234 = vunpack.c.l.b16 %v2202
        %v2235 = vunpack.c.l.b16 %v2203
        %v2236 = vunpack.c.l.b16 %v2204
        %v2237 = vunpack.c.l.b16 %v2205
        %v2238 = vunpack.c.l.b16 %v2206
        %v2239 = vunpack.c.l.b16 %v2207
        %v2240 = vunpack.c.l.b16 %v2208
        %v2241 = vunpack.c.l.b16 %v2209
        %v2242 = vunpack.c.l.b16 %v2210
        %v2243 = vunpack.c.l.b16 %v2211
        %v2244 = vpack.c.b16 %v2229, %v2228
        %v2245 = vpack.c.b16 %v2231, %v2230
        %v2246 = vpack.c.b16 %v2233, %v2232
        %v2247 = vpack.c.b16 %v2235, %v2234
        %v2248 = vpack.c.b16 %v2237, %v2236
        %v2249 = vpack.c.b16 %v2239, %v2238
        %v2250 = vpack.c.b16 %v2241, %v2240
        %v2251 = vpack.c.b16 %v2243, %v2242
        %2260 = vmatprep.subr.bf16.mxu0 0
        %2261 = vmatpush1.bf16.msra.mxu0 %v2244
        %2262 = vmatprep.subr.bf16.mxu0 0
        %2263 = vmatpush1.bf16.msra.mxu0 %v2245
        %2264 = vmatprep.subr.bf16.mxu0 0
        %2265 = vmatpush1.bf16.msra.mxu0 %v2246
        %2266 = vmatprep.subr.bf16.mxu0 0
        %2267 = vmatpush1.bf16.msra.mxu0 %v2247
        %2268 = vmatprep.subr.bf16.mxu0 0
        %2269 = vmatpush1.bf16.msra.mxu0 %v2248
        %2270 = vmatprep.subr.bf16.mxu0 0
        %2271 = vmatpush1.bf16.msra.mxu0 %v2249
        %2272 = vmatprep.subr.bf16.mxu0 0
        %2273 = vmatpush1.bf16.msra.mxu0 %v2250
        %2274 = vmatprep.subr.bf16.mxu0 0
        %2275 = vmatpush1.bf16.msra.mxu0 %v2251
        %2276 = vmatprep.subr.bf16.mxu0 0
        %2277 = vmatpush1.bf16.msra.mxu0 0
        %2278 = vmatprep.subr.bf16.mxu0 0
        %2279 = vmatpush1.bf16.msra.mxu0 0
        %2280 = vmatprep.subr.bf16.mxu0 0
        %2281 = vmatpush1.bf16.msra.mxu0 0
        %2282 = vmatprep.subr.bf16.mxu0 0
        %2283 = vmatpush1.bf16.msra.mxu0 0
        %2284 = vmatprep.subr.bf16.mxu0 0
        %2285 = vmatpush1.bf16.msra.mxu0 0
        %2286 = vmatprep.subr.bf16.mxu0 0
        %2287 = vmatpush1.bf16.msra.mxu0 0
        %2288 = vmatprep.subr.bf16.mxu0 0
        %2289 = vmatpush1.bf16.msra.mxu0 0
        %2290 = vmatprep.subr.bf16.mxu0 0
        %2291 = vmatpush1.bf16.msra.mxu0 0
        %2292 = vmatprep.mubr.bf16.mxu0 0
        %2293 = vmatmul.mubr.bf16.gmra.mrb[0].mxu0 %v2194
        %v2294 = vpop.f32.mrb[0].mxu0
        %v2295 = vadd.f32 0.0, %v2294
        %v2296 = vpop.f32.mrb[0].mxu0
        %v2297 = vpop.f32.mrb[0].mxu0
        %v2298 = vadd.f32 0.0, %v2297
        %v2299 = vpop.f32.mrb[0].mxu0
        %2300 = vmatprep.mubr.bf16.mxu0 0
        %2301 = vmatmul.mubr.bf16.gmra.mrb[0].mxu0 %v2195
        %v2302 = vpop.f32.mrb[0].mxu0
        %v2303 = vadd.f32 0.0, %v2302
        %v2304 = vpop.f32.mrb[0].mxu0
        %v2305 = vpop.f32.mrb[0].mxu0
        %v2306 = vadd.f32 0.0, %v2305
        %v2307 = vpop.f32.mrb[0].mxu0
        %2308 = vdwg.mxu0
        %v2309 = vadd.f32 %v558, %v2295
        %v2310 = vadd.f32 %v559, %v2298
        %v2311 = vadd.f32 %v560, %v2303
        %v2312 = vadd.f32 %v561, %v2306
        %v2313 = vld [vmem:[%s8] sm:$0x1]
        %v2315 = vlaneseq
        %v2316 = vshrl.u32 %v2315, 7
        %v2317 = vsub.s32 0, %v2316
        %v2318 = vrot.slane %v2313, %v2317
        %v2320 = vadd.f32 %v2309, %v2318
        %v2321 = vadd.f32 %v2310, %v2318
        %v2322 = vadd.f32 %v2311, %v2318
        %v2323 = vadd.f32 %v2312, %v2318
        %v2324 = vld [vmem:[%s9] sm:$0x1]
        %v2325 = vld [vmem:[%s10] sm:$0x1]
        %2326 = vadd.xlane.f32.xlu0 %v2320
        %v2327 = vpop.xlane.xlu0 %2326
        %2328 = vadd.xlane.f32.xlu0 %v2321
        %v2329 = vpop.xlane.xlu0 %2328
        %2330 = vadd.xlane.f32.xlu0 %v2322
        %v2331 = vpop.xlane.xlu0 %2330
        %2332 = vadd.xlane.f32.xlu0 %v2323
        %v2333 = vpop.xlane.xlu0 %2332
        %v2334 = vmul.f32 %v2327, %v572
        %v2335 = vmul.f32 %v2329, %v572
        %v2336 = vmul.f32 %v2331, %v572
        %v2337 = vmul.f32 %v2333, %v572
        %v2338 = vsub.f32 %v2320, %v2334
        %v2339 = vsub.f32 %v2321, %v2335
        %v2340 = vsub.f32 %v2322, %v2336
        %v2341 = vsub.f32 %v2323, %v2337
        %v2342 = vmul.f32 %v2338, %v2338
        %v2343 = vmul.f32 %v2339, %v2339
        %v2344 = vmul.f32 %v2340, %v2340
        %v2345 = vmul.f32 %v2341, %v2341
        %2346 = vadd.xlane.f32.xlu0 %v2342
        %v2347 = vpop.xlane.xlu0 %2346
        %2348 = vadd.xlane.f32.xlu0 %v2343
        %v2349 = vpop.xlane.xlu0 %2348
        %2350 = vadd.xlane.f32.xlu0 %v2344
        %v2351 = vpop.xlane.xlu0 %2350
        %2352 = vadd.xlane.f32.xlu0 %v2345
        %v2353 = vpop.xlane.xlu0 %2352
        %v2354 = vmul.f32 %v2347, %v572
        %v2355 = vmul.f32 %v2349, %v572
        %v2356 = vmul.f32 %v2351, %v572
        %v2357 = vmul.f32 %v2353, %v572
        %v2358 = vadd.f32 %v2354, 1e-05
        %v2359 = vadd.f32 %v2355, 1e-05
        %v2360 = vadd.f32 %v2356, 1e-05
        %v2361 = vadd.f32 %v2357, 1e-05
        %v2362 = vrsqrt.pop %v2358
        %v2363 = vrsqrt.pop %v2359
        %v2364 = vrsqrt.pop %v2360
        %v2365 = vrsqrt.pop %v2361
        %v2366 = vmul.f32 %v2338, %v2362
        %v2367 = vmul.f32 %v2339, %v2363
        %v2368 = vmul.f32 %v2340, %v2364
        %v2369 = vmul.f32 %v2341, %v2365
        %v2371 = vlaneseq
        %v2372 = vshrl.u32 %v2371, 7
        %v2373 = vsub.s32 0, %v2372
        %v2374 = vrot.slane %v2324, %v2373
        %v2376 = vmul.f32 %v2366, %v2374
        %v2377 = vmul.f32 %v2367, %v2374
        %v2378 = vmul.f32 %v2368, %v2374
        %v2379 = vmul.f32 %v2369, %v2374
        %v2381 = vlaneseq
        %v2382 = vshrl.u32 %v2381, 7
        %v2383 = vsub.s32 0, %v2382
        %v2384 = vrot.slane %v2325, %v2383
        %v2386 = vadd.f32 %v2376, %v2384
        %v2387 = vadd.f32 %v2377, %v2384
        %v2388 = vadd.f32 %v2378, %v2384
        %v2389 = vadd.f32 %v2379, %v2384
        %v2390 = vpack.c.bf16 %v2387, %v2386
        %v2391 = vpack.c.bf16 %v2389, %v2388
        %v2392 = vld [vmem:[%s11] sm:$0xff]
        %v2393 = vld [vmem:[%s11 + $0x8] sm:$0xff]
        %v2394 = vld [vmem:[%s11 + $0x10] sm:$0xff]
        %v2395 = vld [vmem:[%s11 + $0x18] sm:$0xff]
        %v2396 = vld [vmem:[%s11 + $0x20] sm:$0xff]
        %v2397 = vld [vmem:[%s11 + $0x28] sm:$0xff]
        %v2398 = vld [vmem:[%s11 + $0x30] sm:$0xff]
        %v2399 = vld [vmem:[%s11 + $0x38] sm:$0xff]
        %v2400 = vld [vmem:[%s11 + $0x40] sm:$0xff]
        %v2401 = vld [vmem:[%s11 + $0x48] sm:$0xff]
        %v2402 = vld [vmem:[%s11 + $0x50] sm:$0xff]
        %v2403 = vld [vmem:[%s11 + $0x58] sm:$0xff]
        %v2404 = vld [vmem:[%s11 + $0x60] sm:$0xff]
        %v2405 = vld [vmem:[%s11 + $0x68] sm:$0xff]
        %v2406 = vld [vmem:[%s11 + $0x70] sm:$0xff]
        %v2407 = vld [vmem:[%s11 + $0x78] sm:$0xff]
        %v2408 = vld [vmem:[%s12] sm:$0x3]
        %v2410 = vlaneseq
        %v2411 = vshrl.u32 %v2410, 7
        %v2412 = vsub.s32 0, %v2411
        %v2413 = vrot.slane %v2408, %v2412
        %v2414 = vlaneseq
        %v2415 = vshrl.u32 %v2414, 7
        %v2416 = vsub.s32 1, %v2415
        %v2417 = vrot.slane %v2408, %v2416
        %v2436 = vunpack.c.l.b16 %v2392
        %v2437 = vunpack.c.h.b16 %v2392
        %v2438 = vunpack.c.l.b16 %v2393
        %v2439 = vunpack.c.h.b16 %v2393
        %v2440 = vunpack.c.l.b16 %v2394
        %v2441 = vunpack.c.h.b16 %v2394
        %v2442 = vunpack.c.l.b16 %v2395
        %v2443 = vunpack.c.h.b16 %v2395
        %v2444 = vunpack.c.l.b16 %v2396
        %v2445 = vunpack.c.h.b16 %v2396
        %v2446 = vunpack.c.l.b16 %v2397
        %v2447 = vunpack.c.h.b16 %v2397
        %v2448 = vunpack.c.l.b16 %v2398
        %v2449 = vunpack.c.h.b16 %v2398
        %v2450 = vunpack.c.l.b16 %v2399
        %v2451 = vunpack.c.h.b16 %v2399
        %v2452 = vunpack.c.l.b16 %v2400
        %v2453 = vunpack.c.h.b16 %v2400
        %v2454 = vunpack.c.l.b16 %v2401
        %v2455 = vunpack.c.h.b16 %v2401
        %v2456 = vunpack.c.l.b16 %v2402
        %v2457 = vunpack.c.h.b16 %v2402
        %v2458 = vunpack.c.l.b16 %v2403
        %v2459 = vunpack.c.h.b16 %v2403
        %v2460 = vunpack.c.l.b16 %v2404
        %v2461 = vunpack.c.h.b16 %v2404
        %v2462 = vunpack.c.l.b16 %v2405
        %v2463 = vunpack.c.h.b16 %v2405
        %v2464 = vunpack.c.l.b16 %v2406
        %v2465 = vunpack.c.h.b16 %v2406
        %v2466 = vunpack.c.l.b16 %v2407
        %v2467 = vunpack.c.h.b16 %v2407
        %v2468 = vpack.c.b16 %v2438, %v2436
        %v2469 = vpack.c.b16 %v2439, %v2437
        %v2470 = vpack.c.b16 %v2442, %v2440
        %v2471 = vpack.c.b16 %v2443, %v2441
        %v2472 = vpack.c.b16 %v2446, %v2444
        %v2473 = vpack.c.b16 %v2447, %v2445
        %v2474 = vpack.c.b16 %v2450, %v2448
        %v2475 = vpack.c.b16 %v2451, %v2449
        %v2476 = vpack.c.b16 %v2454, %v2452
        %v2477 = vpack.c.b16 %v2455, %v2453
        %v2478 = vpack.c.b16 %v2458, %v2456
        %v2479 = vpack.c.b16 %v2459, %v2457
        %v2480 = vpack.c.b16 %v2462, %v2460
        %v2481 = vpack.c.b16 %v2463, %v2461
        %v2482 = vpack.c.b16 %v2466, %v2464
        %v2483 = vpack.c.b16 %v2467, %v2465
        %2500 = vmatprep.subr.bf16.mxu0 %v2469
        %2501 = vmatpush1.bf16.msra.mxu0 %v2468
        %2502 = vmatprep.subr.bf16.mxu0 %v2471
        %2503 = vmatpush1.bf16.msra.mxu0 %v2470
        %2504 = vmatprep.subr.bf16.mxu0 %v2473
        %2505 = vmatpush1.bf16.msra.mxu0 %v2472
        %2506 = vmatprep.subr.bf16.mxu0 %v2475
        %2507 = vmatpush1.bf16.msra.mxu0 %v2474
        %2508 = vmatprep.subr.bf16.mxu0 %v2477
        %2509 = vmatpush1.bf16.msra.mxu0 %v2476
        %2510 = vmatprep.subr.bf16.mxu0 %v2479
        %2511 = vmatpush1.bf16.msra.mxu0 %v2478
        %2512 = vmatprep.subr.bf16.mxu0 %v2481
        %2513 = vmatpush1.bf16.msra.mxu0 %v2480
        %2514 = vmatprep.subr.bf16.mxu0 %v2483
        %2515 = vmatpush1.bf16.msra.mxu0 %v2482
        %2516 = vmatprep.subr.bf16.mxu0 0
        %2517 = vmatpush1.bf16.msra.mxu0 0
        %2518 = vmatprep.subr.bf16.mxu0 0
        %2519 = vmatpush1.bf16.msra.mxu0 0
        %2520 = vmatprep.subr.bf16.mxu0 0
        %2521 = vmatpush1.bf16.msra.mxu0 0
        %2522 = vmatprep.subr.bf16.mxu0 0
        %2523 = vmatpush1.bf16.msra.mxu0 0
        %2524 = vmatprep.subr.bf16.mxu0 0
        %2525 = vmatpush1.bf16.msra.mxu0 0
        %2526 = vmatprep.subr.bf16.mxu0 0
        %2527 = vmatpush1.bf16.msra.mxu0 0
        %2528 = vmatprep.subr.bf16.mxu0 0
        %2529 = vmatpush1.bf16.msra.mxu0 0
        %2530 = vmatprep.subr.bf16.mxu0 0
        %2531 = vmatpush1.bf16.msra.mxu0 0
        %2532 = vmatprep.mubr.bf16.mxu0 0
        %2533 = vmatmul.mubr.bf16.gmra.mrb[0].mxu0 %v2390
        %v2534 = vpop.f32.mrb[0].mxu0
        %v2535 = vadd.f32 %v2413, %v2534
        %v2536 = vpop.f32.mrb[0].mxu0
        %v2537 = vadd.f32 %v2417, %v2536
        %v2538 = vpop.f32.mrb[0].mxu0
        %v2539 = vadd.f32 %v2413, %v2538
        %v2540 = vpop.f32.mrb[0].mxu0
        %v2541 = vadd.f32 %v2417, %v2540
        %2542 = vmatprep.mubr.bf16.mxu0 0
        %2543 = vmatmul.mubr.bf16.gmra.mrb[0].mxu0 %v2391
        %v2544 = vpop.f32.mrb[0].mxu0
        %v2545 = vadd.f32 %v2413, %v2544
        %v2546 = vpop.f32.mrb[0].mxu0
        %v2547 = vadd.f32 %v2417, %v2546
        %v2548 = vpop.f32.mrb[0].mxu0
        %v2549 = vadd.f32 %v2413, %v2548
        %v2550 = vpop.f32.mrb[0].mxu0
        %v2551 = vadd.f32 %v2417, %v2550
        %2552 = vdwg.mxu0
        %v2553 = vmul.f32 %v2535, 0.5
        %v2554 = vmul.f32 %v2537, 0.5
        %v2555 = vmul.f32 %v2539, 0.5
        %v2556 = vmul.f32 %v2541, 0.5
        %v2557 = vmul.f32 %v2545, 0.5
        %v2558 = vmul.f32 %v2547, 0.5
        %v2559 = vmul.f32 %v2549, 0.5
        %v2560 = vmul.f32 %v2551, 0.5
        %v2561 = vmul.f32 %v2535, 0.70710677
        %v2562 = vmul.f32 %v2537, 0.70710677
        %v2563 = vmul.f32 %v2539, 0.70710677
        %v2564 = vmul.f32 %v2541, 0.70710677
        %v2565 = vmul.f32 %v2545, 0.70710677
        %v2566 = vmul.f32 %v2547, 0.70710677
        %v2567 = vmul.f32 %v2549, 0.70710677
        %v2568 = vmul.f32 %v2551, 0.70710677
        %vm2569 = vcmp.ge.f32.partialorder %v2561, 0.0
        %vm2570 = vcmp.ge.f32.partialorder %v2562, 0.0
        %vm2571 = vcmp.ge.f32.partialorder %v2563, 0.0
        %vm2572 = vcmp.ge.f32.partialorder %v2564, 0.0
        %vm2573 = vcmp.ge.f32.partialorder %v2565, 0.0
        %vm2574 = vcmp.ge.f32.partialorder %v2566, 0.0
        %vm2575 = vcmp.ge.f32.partialorder %v2567, 0.0
        %vm2576 = vcmp.ge.f32.partialorder %v2568, 0.0
        %v2577 = vsel %vm2569, 1.0, -1.0
        %v2578 = vsel %vm2570, 1.0, -1.0
        %v2579 = vsel %vm2571, 1.0, -1.0
        %v2580 = vsel %vm2572, 1.0, -1.0
        %v2581 = vsel %vm2573, 1.0, -1.0
        %v2582 = vsel %vm2574, 1.0, -1.0
        %v2583 = vsel %vm2575, 1.0, -1.0
        %v2584 = vsel %vm2576, 1.0, -1.0
        %v2585 = vand.u32 2147483647, %v2561
        %v2586 = vand.u32 2147483647, %v2562
        %v2587 = vand.u32 2147483647, %v2563
        %v2588 = vand.u32 2147483647, %v2564
        %v2589 = vand.u32 2147483647, %v2565
        %v2590 = vand.u32 2147483647, %v2566
        %v2591 = vand.u32 2147483647, %v2567
        %v2592 = vand.u32 2147483647, %v2568
        %v2593 = vmul.f32 %v2585, 0.3275911
        %v2594 = vmul.f32 %v2586, 0.3275911
        %v2595 = vmul.f32 %v2587, 0.3275911
        %v2596 = vmul.f32 %v2588, 0.3275911
        %v2597 = vmul.f32 %v2589, 0.3275911
        %v2598 = vmul.f32 %v2590, 0.3275911
        %v2599 = vmul.f32 %v2591, 0.3275911
        %v2600 = vmul.f32 %v2592, 0.3275911
        %v2601 = vadd.f32 %v2593, 1.0
        %v2602 = vadd.f32 %v2594, 1.0
        %v2603 = vadd.f32 %v2595, 1.0
        %v2604 = vadd.f32 %v2596, 1.0
        %v2605 = vadd.f32 %v2597, 1.0
        %v2606 = vadd.f32 %v2598, 1.0
        %v2607 = vadd.f32 %v2599, 1.0
        %v2608 = vadd.f32 %v2600, 1.0
        %v2609 = vrcp.pop %v2601
        %v2610 = vmul.f32 1.0, %v2609
        %v2611 = vrcp.pop %v2602
        %v2612 = vmul.f32 1.0, %v2611
        %v2613 = vrcp.pop %v2603
        %v2614 = vmul.f32 1.0, %v2613
        %v2615 = vrcp.pop %v2604
        %v2616 = vmul.f32 1.0, %v2615
        %v2617 = vrcp.pop %v2605
        %v2618 = vmul.f32 1.0, %v2617
        %v2619 = vrcp.pop %v2606
        %v2620 = vmul.f32 1.0, %v2619
        %v2621 = vrcp.pop %v2607
        %v2622 = vmul.f32 1.0, %v2621
        %v2623 = vrcp.pop %v2608
        %v2624 = vmul.f32 1.0, %v2623
        %v2625 = vmul.f32 %v2610, 1.0614054
        %v2626 = vmul.f32 %v2612, 1.0614054
        %v2627 = vmul.f32 %v2614, 1.0614054
        %v2628 = vmul.f32 %v2616, 1.0614054
        %v2629 = vmul.f32 %v2618, 1.0614054
        %v2630 = vmul.f32 %v2620, 1.0614054
        %v2631 = vmul.f32 %v2622, 1.0614054
        %v2632 = vmul.f32 %v2624, 1.0614054
        %v2633 = vadd.f32 %v2625, -1.4531521
        %v2634 = vadd.f32 %v2626, -1.4531521
        %v2635 = vadd.f32 %v2627, -1.4531521
        %v2636 = vadd.f32 %v2628, -1.4531521
        %v2637 = vadd.f32 %v2629, -1.4531521
        %v2638 = vadd.f32 %v2630, -1.4531521
        %v2639 = vadd.f32 %v2631, -1.4531521
        %v2640 = vadd.f32 %v2632, -1.4531521
        %v2641 = vmul.f32 %v2633, %v2610
        %v2642 = vmul.f32 %v2634, %v2612
        %v2643 = vmul.f32 %v2635, %v2614
        %v2644 = vmul.f32 %v2636, %v2616
        %v2645 = vmul.f32 %v2637, %v2618
        %v2646 = vmul.f32 %v2638, %v2620
        %v2647 = vmul.f32 %v2639, %v2622
        %v2648 = vmul.f32 %v2640, %v2624
        %v2649 = vadd.f32 %v2641, 1.4214138
        %v2650 = vadd.f32 %v2642, 1.4214138
        %v2651 = vadd.f32 %v2643, 1.4214138
        %v2652 = vadd.f32 %v2644, 1.4214138
        %v2653 = vadd.f32 %v2645, 1.4214138
        %v2654 = vadd.f32 %v2646, 1.4214138
        %v2655 = vadd.f32 %v2647, 1.4214138
        %v2656 = vadd.f32 %v2648, 1.4214138
        %v2657 = vmul.f32 %v2649, %v2610
        %v2658 = vmul.f32 %v2650, %v2612
        %v2659 = vmul.f32 %v2651, %v2614
        %v2660 = vmul.f32 %v2652, %v2616
        %v2661 = vmul.f32 %v2653, %v2618
        %v2662 = vmul.f32 %v2654, %v2620
        %v2663 = vmul.f32 %v2655, %v2622
        %v2664 = vmul.f32 %v2656, %v2624
        %v2665 = vadd.f32 %v2657, -0.28449672
        %v2666 = vadd.f32 %v2658, -0.28449672
        %v2667 = vadd.f32 %v2659, -0.28449672
        %v2668 = vadd.f32 %v2660, -0.28449672
        %v2669 = vadd.f32 %v2661, -0.28449672
        %v2670 = vadd.f32 %v2662, -0.28449672
        %v2671 = vadd.f32 %v2663, -0.28449672
        %v2672 = vadd.f32 %v2664, -0.28449672
        %v2673 = vmul.f32 %v2665, %v2610
        %v2674 = vmul.f32 %v2666, %v2612
        %v2675 = vmul.f32 %v2667, %v2614
        %v2676 = vmul.f32 %v2668, %v2616
        %v2677 = vmul.f32 %v2669, %v2618
        %v2678 = vmul.f32 %v2670, %v2620
        %v2679 = vmul.f32 %v2671, %v2622
        %v2680 = vmul.f32 %v2672, %v2624
        %v2681 = vadd.f32 %v2673, 0.2548296
        %v2682 = vadd.f32 %v2674, 0.2548296
        %v2683 = vadd.f32 %v2675, 0.2548296
        %v2684 = vadd.f32 %v2676, 0.2548296
        %v2685 = vadd.f32 %v2677, 0.2548296
        %v2686 = vadd.f32 %v2678, 0.2548296
        %v2687 = vadd.f32 %v2679, 0.2548296
        %v2688 = vadd.f32 %v2680, 0.2548296
        %v2689 = vmul.f32 %v2681, %v2610
        %v2690 = vmul.f32 %v2682, %v2612
        %v2691 = vmul.f32 %v2683, %v2614
        %v2692 = vmul.f32 %v2684, %v2616
        %v2693 = vmul.f32 %v2685, %v2618
        %v2694 = vmul.f32 %v2686, %v2620
        %v2695 = vmul.f32 %v2687, %v2622
        %v2696 = vmul.f32 %v2688, %v2624
        %v2697 = vsub.f32 0.0, %v2585
        %v2698 = vsub.f32 0.0, %v2586
        %v2699 = vsub.f32 0.0, %v2587
        %v2700 = vsub.f32 0.0, %v2588
        %v2701 = vsub.f32 0.0, %v2589
        %v2702 = vsub.f32 0.0, %v2590
        %v2703 = vsub.f32 0.0, %v2591
        %v2704 = vsub.f32 0.0, %v2592
        %v2705 = vmul.f32 %v2697, %v2585
        %v2706 = vmul.f32 %v2698, %v2586
        %v2707 = vmul.f32 %v2699, %v2587
        %v2708 = vmul.f32 %v2700, %v2588
        %v2709 = vmul.f32 %v2701, %v2589
        %v2710 = vmul.f32 %v2702, %v2590
        %v2711 = vmul.f32 %v2703, %v2591
        %v2712 = vmul.f32 %v2704, %v2592
        %v2713 = vmul.f32 %v2705, 1.442695
        %v2714 = vpow.pop %v2713
        %v2715 = vmul.f32 %v2706, 1.442695
        %v2716 = vpow.pop %v2715
        %v2717 = vmul.f32 %v2707, 1.442695
        %v2718 = vpow.pop %v2717
        %v2719 = vmul.f32 %v2708, 1.442695
        %v2720 = vpow.pop %v2719
        %v2721 = vmul.f32 %v2709, 1.442695
        %v2722 = vpow.pop %v2721
        %v2723 = vmul.f32 %v2710, 1.442695
        %v2724 = vpow.pop %v2723
        %v2725 = vmul.f32 %v2711, 1.442695
        %v2726 = vpow.pop %v2725
        %v2727 = vmul.f32 %v2712, 1.442695
        %v2728 = vpow.pop %v2727
        %v2729 = vmul.f32 %v2689, %v2714
        %v2730 = vmul.f32 %v2690, %v2716
        %v2731 = vmul.f32 %v2691, %v2718
        %v2732 = vmul.f32 %v2692, %v2720
        %v2733 = vmul.f32 %v2693, %v2722
        %v2734 = vmul.f32 %v2694, %v2724
        %v2735 = vmul.f32 %v2695, %v2726
        %v2736 = vmul.f32 %v2696, %v2728
        %v2737 = vsub.f32 1.0, %v2729
        %v2738 = vsub.f32 1.0, %v2730
        %v2739 = vsub.f32 1.0, %v2731
        %v2740 = vsub.f32 1.0, %v2732
        %v2741 = vsub.f32 1.0, %v2733
        %v2742 = vsub.f32 1.0, %v2734
        %v2743 = vsub.f32 1.0, %v2735
        %v2744 = vsub.f32 1.0, %v2736
        %v2745 = vmul.f32 %v2577, %v2737
        %v2746 = vmul.f32 %v2578, %v2738
        %v2747 = vmul.f32 %v2579, %v2739
        %v2748 = vmul.f32 %v2580, %v2740
        %v2749 = vmul.f32 %v2581, %v2741
        %v2750 = vmul.f32 %v2582, %v2742
        %v2751 = vmul.f32 %v2583, %v2743
        %v2752 = vmul.f32 %v2584, %v2744
        %v2753 = vadd.f32 %v2745, 1.0
        %v2754 = vadd.f32 %v2746, 1.0
        %v2755 = vadd.f32 %v2747, 1.0
        %v2756 = vadd.f32 %v2748, 1.0
        %v2757 = vadd.f32 %v2749, 1.0
        %v2758 = vadd.f32 %v2750, 1.0
        %v2759 = vadd.f32 %v2751, 1.0
        %v2760 = vadd.f32 %v2752, 1.0
        %v2761 = vmul.f32 %v2553, %v2753
        %v2762 = vmul.f32 %v2554, %v2754
        %v2763 = vmul.f32 %v2555, %v2755
        %v2764 = vmul.f32 %v2556, %v2756
        %v2765 = vmul.f32 %v2557, %v2757
        %v2766 = vmul.f32 %v2558, %v2758
        %v2767 = vmul.f32 %v2559, %v2759
        %v2768 = vmul.f32 %v2560, %v2760
        %v2769 = vpack.c.bf16 %v2763, %v2761
        %v2770 = vpack.c.bf16 %v2764, %v2762
        %v2771 = vpack.c.bf16 %v2767, %v2765
        %v2772 = vpack.c.bf16 %v2768, %v2766
        %v2773 = vld [vmem:[#allocation9] sm:$0xf]
        %v2774 = vld [vmem:[#allocation9 + $0x4] sm:$0xf]
        %v2775 = vld [vmem:[#allocation9 + $0x8] sm:$0xf]
        %v2776 = vld [vmem:[#allocation9 + $0xc] sm:$0xf]
        %v2777 = vld [vmem:[#allocation9 + $0x10] sm:$0xf]
        %v2778 = vld [vmem:[#allocation9 + $0x14] sm:$0xf]
        %v2779 = vld [vmem:[#allocation9 + $0x18] sm:$0xf]
        %v2780 = vld [vmem:[#allocation9 + $0x1c] sm:$0xf]
        %v2781 = vld [vmem:[#allocation9 + $0x20] sm:$0xf]
        %v2782 = vld [vmem:[#allocation9 + $0x24] sm:$0xf]
        %v2783 = vld [vmem:[#allocation9 + $0x28] sm:$0xf]
        %v2784 = vld [vmem:[#allocation9 + $0x2c] sm:$0xf]
        %v2785 = vld [vmem:[#allocation9 + $0x30] sm:$0xf]
        %v2786 = vld [vmem:[#allocation9 + $0x34] sm:$0xf]
        %v2787 = vld [vmem:[#allocation9 + $0x38] sm:$0xf]
        %v2788 = vld [vmem:[#allocation9 + $0x3c] sm:$0xf]
        %v2789 = vld [vmem:[#allocation9 + $0x40] sm:$0xf]
        %v2790 = vld [vmem:[#allocation9 + $0x44] sm:$0xf]
        %v2791 = vld [vmem:[#allocation9 + $0x48] sm:$0xf]
        %v2792 = vld [vmem:[#allocation9 + $0x4c] sm:$0xf]
        %v2793 = vld [vmem:[#allocation9 + $0x50] sm:$0xf]
        %v2794 = vld [vmem:[#allocation9 + $0x54] sm:$0xf]
        %v2795 = vld [vmem:[#allocation9 + $0x58] sm:$0xf]
        %v2796 = vld [vmem:[#allocation9 + $0x5c] sm:$0xf]
        %v2797 = vld [vmem:[#allocation9 + $0x60] sm:$0xf]
        %v2798 = vld [vmem:[#allocation9 + $0x64] sm:$0xf]
        %v2799 = vld [vmem:[#allocation9 + $0x68] sm:$0xf]
        %v2800 = vld [vmem:[#allocation9 + $0x6c] sm:$0xf]
        %v2801 = vld [vmem:[#allocation9 + $0x70] sm:$0xf]
        %v2802 = vld [vmem:[#allocation9 + $0x74] sm:$0xf]
        %v2803 = vld [vmem:[#allocation9 + $0x78] sm:$0xf]
        %v2804 = vld [vmem:[#allocation9 + $0x7c] sm:$0xf]
        %v2805 = vld [vmem:[%s14] sm:$0x1]
        %v2807 = vlaneseq
        %v2808 = vshrl.u32 %v2807, 7
        %v2809 = vsub.s32 0, %v2808
        %v2810 = vrot.slane %v2805, %v2809
        %v2844 = vunpack.c.l.b16 %v2773
        %v2845 = vunpack.c.l.b16 %v2774
        %v2846 = vunpack.c.l.b16 %v2775
        %v2847 = vunpack.c.l.b16 %v2776
        %v2848 = vunpack.c.l.b16 %v2777
        %v2849 = vunpack.c.l.b16 %v2778
        %v2850 = vunpack.c.l.b16 %v2779
        %v2851 = vunpack.c.l.b16 %v2780
        %v2852 = vunpack.c.l.b16 %v2781
        %v2853 = vunpack.c.l.b16 %v2782
        %v2854 = vunpack.c.l.b16 %v2783
        %v2855 = vunpack.c.l.b16 %v2784
        %v2856 = vunpack.c.l.b16 %v2785
        %v2857 = vunpack.c.l.b16 %v2786
        %v2858 = vunpack.c.l.b16 %v2787
        %v2859 = vunpack.c.l.b16 %v2788
        %v2860 = vunpack.c.l.b16 %v2789
        %v2861 = vunpack.c.l.b16 %v2790
        %v2862 = vunpack.c.l.b16 %v2791
        %v2863 = vunpack.c.l.b16 %v2792
        %v2864 = vunpack.c.l.b16 %v2793
        %v2865 = vunpack.c.l.b16 %v2794
        %v2866 = vunpack.c.l.b16 %v2795
        %v2867 = vunpack.c.l.b16 %v2796
        %v2868 = vunpack.c.l.b16 %v2797
        %v2869 = vunpack.c.l.b16 %v2798
        %v2870 = vunpack.c.l.b16 %v2799
        %v2871 = vunpack.c.l.b16 %v2800
        %v2872 = vunpack.c.l.b16 %v2801
        %v2873 = vunpack.c.l.b16 %v2802
        %v2874 = vunpack.c.l.b16 %v2803
        %v2875 = vunpack.c.l.b16 %v2804
        %v2876 = vpack.c.b16 %v2845, %v2844
        %v2877 = vpack.c.b16 %v2847, %v2846
        %v2878 = vpack.c.b16 %v2849, %v2848
        %v2879 = vpack.c.b16 %v2851, %v2850
        %v2880 = vpack.c.b16 %v2853, %v2852
        %v2881 = vpack.c.b16 %v2855, %v2854
        %v2882 = vpack.c.b16 %v2857, %v2856
        %v2883 = vpack.c.b16 %v2859, %v2858
        %v2884 = vpack.c.b16 %v2861, %v2860
        %v2885 = vpack.c.b16 %v2863, %v2862
        %v2886 = vpack.c.b16 %v2865, %v2864
        %v2887 = vpack.c.b16 %v2867, %v2866
        %v2888 = vpack.c.b16 %v2869, %v2868
        %v2889 = vpack.c.b16 %v2871, %v2870
        %v2890 = vpack.c.b16 %v2873, %v2872
        %v2891 = vpack.c.b16 %v2875, %v2874
        %2908 = vmatprep.subr.bf16.mxu0 0
        %2909 = vmatpush1.bf16.msra.mxu0 %v2876
        %2910 = vmatprep.subr.bf16.mxu0 0
        %2911 = vmatpush1.bf16.msra.mxu0 %v2877
        %2912 = vmatprep.subr.bf16.mxu0 0
        %2913 = vmatpush1.bf16.msra.mxu0 %v2878
        %2914 = vmatprep.subr.bf16.mxu0 0
        %2915 = vmatpush1.bf16.msra.mxu0 %v2879
        %2916 = vmatprep.subr.bf16.mxu0 0
        %2917 = vmatpush1.bf16.msra.mxu0 %v2880
        %2918 = vmatprep.subr.bf16.mxu0 0
        %2919 = vmatpush1.bf16.msra.mxu0 %v2881
        %2920 = vmatprep.subr.bf16.mxu0 0
        %2921 = vmatpush1.bf16.msra.mxu0 %v2882
        %2922 = vmatprep.subr.bf16.mxu0 0
        %2923 = vmatpush1.bf16.msra.mxu0 %v2883
        %2924 = vmatprep.subr.bf16.mxu0 0
        %2925 = vmatpush1.bf16.msra.mxu0 %v2884
        %2926 = vmatprep.subr.bf16.mxu0 0
        %2927 = vmatpush1.bf16.msra.mxu0 %v2885
        %2928 = vmatprep.subr.bf16.mxu0 0
        %2929 = vmatpush1.bf16.msra.mxu0 %v2886
        %2930 = vmatprep.subr.bf16.mxu0 0
        %2931 = vmatpush1.bf16.msra.mxu0 %v2887
        %2932 = vmatprep.subr.bf16.mxu0 0
        %2933 = vmatpush1.bf16.msra.mxu0 %v2888
        %2934 = vmatprep.subr.bf16.mxu0 0
        %2935 = vmatpush1.bf16.msra.mxu0 %v2889
        %2936 = vmatprep.subr.bf16.mxu0 0
        %2937 = vmatpush1.bf16.msra.mxu0 %v2890
        %2938 = vmatprep.subr.bf16.mxu0 0
        %2939 = vmatpush1.bf16.msra.mxu0 %v2891
        %2940 = vmatprep.mubr.bf16.mxu0 %v2770
        %2941 = vmatmul.mubr.bf16.gmra.mrb[0].mxu0 %v2769
        %v2942 = vpop.f32.mrb[0].mxu0
        %v2943 = vadd.f32 %v2810, %v2942
        %v2944 = vpop.f32.mrb[0].mxu0
        %v2945 = vpop.f32.mrb[0].mxu0
        %v2946 = vadd.f32 %v2810, %v2945
        %v2947 = vpop.f32.mrb[0].mxu0
        %2948 = vmatprep.mubr.bf16.mxu0 %v2772
        %2949 = vmatmul.mubr.bf16.gmra.mrb[0].mxu0 %v2771
        %v2950 = vpop.f32.mrb[0].mxu0
        %v2951 = vadd.f32 %v2810, %v2950
        %v2952 = vpop.f32.mrb[0].mxu0
        %v2953 = vpop.f32.mrb[0].mxu0
        %v2954 = vadd.f32 %v2810, %v2953
        %v2955 = vpop.f32.mrb[0].mxu0
        %2956 = vdwg.mxu0
        %v2957 = vmul.f32 %v2943, 0.5
        %v2958 = vmul.f32 %v2946, 0.5
        %v2959 = vmul.f32 %v2951, 0.5
        %v2960 = vmul.f32 %v2954, 0.5
        %v2961 = vmul.f32 %v2943, 0.70710677
        %v2962 = vmul.f32 %v2946, 0.70710677
        %v2963 = vmul.f32 %v2951, 0.70710677
        %v2964 = vmul.f32 %v2954, 0.70710677
        %vm2965 = vcmp.ge.f32.partialorder %v2961, 0.0
        %vm2966 = vcmp.ge.f32.partialorder %v2962, 0.0
        %vm2967 = vcmp.ge.f32.partialorder %v2963, 0.0
        %vm2968 = vcmp.ge.f32.partialorder %v2964, 0.0
        %v2969 = vsel %vm2965, 1.0, -1.0
        %v2970 = vsel %vm2966, 1.0, -1.0
        %v2971 = vsel %vm2967, 1.0, -1.0
        %v2972 = vsel %vm2968, 1.0, -1.0
        %v2973 = vand.u32 2147483647, %v2961
        %v2974 = vand.u32 2147483647, %v2962
        %v2975 = vand.u32 2147483647, %v2963
        %v2976 = vand.u32 2147483647, %v2964
        %v2977 = vmul.f32 %v2973, 0.3275911
        %v2978 = vmul.f32 %v2974, 0.3275911
        %v2979 = vmul.f32 %v2975, 0.3275911
        %v2980 = vmul.f32 %v2976, 0.3275911
        %v2981 = vadd.f32 %v2977, 1.0
        %v2982 = vadd.f32 %v2978, 1.0
        %v2983 = vadd.f32 %v2979, 1.0
        %v2984 = vadd.f32 %v2980, 1.0
        %v2985 = vrcp.pop %v2981
        %v2986 = vmul.f32 1.0, %v2985
        %v2987 = vrcp.pop %v2982
        %v2988 = vmul.f32 1.0, %v2987
        %v2989 = vrcp.pop %v2983
        %v2990 = vmul.f32 1.0, %v2989
        %v2991 = vrcp.pop %v2984
        %v2992 = vmul.f32 1.0, %v2991
        %v2993 = vmul.f32 %v2986, 1.0614054
        %v2994 = vmul.f32 %v2988, 1.0614054
        %v2995 = vmul.f32 %v2990, 1.0614054
        %v2996 = vmul.f32 %v2992, 1.0614054
        %v2997 = vadd.f32 %v2993, -1.4531521
        %v2998 = vadd.f32 %v2994, -1.4531521
        %v2999 = vadd.f32 %v2995, -1.4531521
        %v3000 = vadd.f32 %v2996, -1.4531521
        %v3001 = vmul.f32 %v2997, %v2986
        %v3002 = vmul.f32 %v2998, %v2988
        %v3003 = vmul.f32 %v2999, %v2990
        %v3004 = vmul.f32 %v3000, %v2992
        %v3005 = vadd.f32 %v3001, 1.4214138
        %v3006 = vadd.f32 %v3002, 1.4214138
        %v3007 = vadd.f32 %v3003, 1.4214138
        %v3008 = vadd.f32 %v3004, 1.4214138
        %v3009 = vmul.f32 %v3005, %v2986
        %v3010 = vmul.f32 %v3006, %v2988
        %v3011 = vmul.f32 %v3007, %v2990
        %v3012 = vmul.f32 %v3008, %v2992
        %v3013 = vadd.f32 %v3009, -0.28449672
        %v3014 = vadd.f32 %v3010, -0.28449672
        %v3015 = vadd.f32 %v3011, -0.28449672
        %v3016 = vadd.f32 %v3012, -0.28449672
        %v3017 = vmul.f32 %v3013, %v2986
        %v3018 = vmul.f32 %v3014, %v2988
        %v3019 = vmul.f32 %v3015, %v2990
        %v3020 = vmul.f32 %v3016, %v2992
        %v3021 = vadd.f32 %v3017, 0.2548296
        %v3022 = vadd.f32 %v3018, 0.2548296
        %v3023 = vadd.f32 %v3019, 0.2548296
        %v3024 = vadd.f32 %v3020, 0.2548296
        %v3025 = vmul.f32 %v3021, %v2986
        %v3026 = vmul.f32 %v3022, %v2988
        %v3027 = vmul.f32 %v3023, %v2990
        %v3028 = vmul.f32 %v3024, %v2992
        %v3029 = vsub.f32 0.0, %v2973
        %v3030 = vsub.f32 0.0, %v2974
        %v3031 = vsub.f32 0.0, %v2975
        %v3032 = vsub.f32 0.0, %v2976
        %v3033 = vmul.f32 %v3029, %v2973
        %v3034 = vmul.f32 %v3030, %v2974
        %v3035 = vmul.f32 %v3031, %v2975
        %v3036 = vmul.f32 %v3032, %v2976
        %v3037 = vmul.f32 %v3033, 1.442695
        %v3038 = vpow.pop %v3037
        %v3039 = vmul.f32 %v3034, 1.442695
        %v3040 = vpow.pop %v3039
        %v3041 = vmul.f32 %v3035, 1.442695
        %v3042 = vpow.pop %v3041
        %v3043 = vmul.f32 %v3036, 1.442695
        %v3044 = vpow.pop %v3043
        %v3045 = vmul.f32 %v3025, %v3038
        %v3046 = vmul.f32 %v3026, %v3040
        %v3047 = vmul.f32 %v3027, %v3042
        %v3048 = vmul.f32 %v3028, %v3044
        %v3049 = vsub.f32 1.0, %v3045
        %v3050 = vsub.f32 1.0, %v3046
        %v3051 = vsub.f32 1.0, %v3047
        %v3052 = vsub.f32 1.0, %v3048
        %v3053 = vmul.f32 %v2969, %v3049
        %v3054 = vmul.f32 %v2970, %v3050
        %v3055 = vmul.f32 %v2971, %v3051
        %v3056 = vmul.f32 %v2972, %v3052
        %v3057 = vadd.f32 %v3053, 1.0
        %v3058 = vadd.f32 %v3054, 1.0
        %v3059 = vadd.f32 %v3055, 1.0
        %v3060 = vadd.f32 %v3056, 1.0
        %v3061 = vmul.f32 %v2957, %v3057
        %v3062 = vmul.f32 %v2958, %v3058
        %v3063 = vmul.f32 %v2959, %v3059
        %v3064 = vmul.f32 %v2960, %v3060
        %v3065 = vadd.f32 %v3061, %v2320
        %v3066 = vadd.f32 %v3062, %v2321
        %v3067 = vadd.f32 %v3063, %v2322
        %v3068 = vadd.f32 %v3064, %v2323
        %3069 = vst [vmem:[%s556] sm:$0xff] %v3065
        %3070 = vst [vmem:[%s556 + $0x8] sm:$0xff] %v3066
        %3071 = vst [vmem:[%s556 + $0x10] sm:$0xff] %v3067
        %3072 = vst [vmem:[%s556 + $0x18] sm:$0xff] %v3068
        %s3073 = sand.u32 %s362, 1
        %s3074 = scalar_lea.sflag [#allocation5], %s3073
        %s3075 = sand.u32 %s362, 1
        %s3076 = smul.addr %s3075, 32
        %s3077 = scalar_lea.vmem [#allocation11], %s3076
        // Predicated region
        $region97: #{tpu_custom_call.1} parent=79 // pred_check
          %p3078 = pneg %p372
        $region98: #{tpu_custom_call.1} parent=79 // pred_check_branch
          %3080 = sbr.rel (%p3078) target = $region100
        $region99: #{tpu_custom_call.1} parent=79 // pred_region
          %s3082 = ssub.s32 512, 512
          %3083 = vsyncadd %s3074, %s3082
          %s3084 = smul.addr %s34, 4
          %s3085 = smul.addr %s3084, 128
          %s3086 = scalar_lea.hbm %s15, %s3085
          %s3087 = sshll.u32 %s3077, 4
          %s3088 = int_to_ptr.vmem [resolvable:$true] %s3087
          %3093 = dma.vmem_to_hbm [thread:$0]  %s3088, 512, %s3086, %s3074, 128, 128, 8
        $region100: #{tpu_custom_call.1} parent=79 // pred_fallthru
          _
      $region80: #{tpu_custom_call.1} parent=5 // pred_fallthru
        _
      %p3094 = scmp.le.s32.totalorder 2, %s29
      // Predicated region
      $region101: #{tpu_custom_call.1} parent=5 // pred_check
        %p3095 = pneg %p3094
      $region102: #{tpu_custom_call.1} parent=5 // pred_check_branch
        %3097 = sbr.rel (%p3095) target = $region104
      $region103: #{tpu_custom_call.1} parent=5 // pred_region
        %s3098 = ssub.s32 %s29, 2
        // Predicated region
        $region105: #{tpu_custom_call.1} parent=103 // pred_check
          %p3099 = pneg %p378
        $region106: #{tpu_custom_call.1} parent=103 // pred_check_branch
          %3101 = sbr.rel (%p3099) target = $region108
        $region107: #{tpu_custom_call.1} parent=103 // pred_region
          %s3102 = sand.u32 %s363, 1
          %s3103 = scalar_lea.sflag [#allocation5], %s3102
          %s3104 = sand.u32 %s363, 1
          %s3105 = smul.addr %s3104, 32
          %s3106 = scalar_lea.vmem [#allocation11], %s3105
          %3107 = dma.done %s3103, 512
        $region108: #{tpu_custom_call.1} parent=103 // pred_fallthru
          _
      $region104: #{tpu_custom_call.1} parent=5 // pred_fallthru
        _
    $region6: #{tpu_custom_call.1} parent=1 // loop_footer
      %s33 = sadd.s32 1, %s29
    $region7: #{tpu_custom_call.1} parent=1 // loop_footer_branch
      %28 = sbr.rel target = $region3
    $region8: #{tpu_custom_call.1} parent=1 // loop_exit
      _
    %3108 = vsyncpa [#allocation4], 1
    %s3109 = scalar_lea.sflag [#allocation4], 1
    %3110 = vsyncpa %s3109, 1
    %3111 = vsyncpa [#allocation7], 1
    %3112 = vsyncpa [#allocation10], 1
    %3113 = vsyncpa [#allocation5], 1
    %s3114 = scalar_lea.sflag [#allocation5], 1
    %3115 = vsyncpa %s3114, 1

</llo_original>
